<compile_context>
chip_gen: v5e
topology: v5e:2x2
jax: 0.10.0
libtpu: 0.0.40
codegen_flags: <defaults>
</compile_context>

<pallas_src>
import jax
import jax.numpy as jnp
from jax.experimental import pallas as pl
from jax.experimental.pallas import tpu as pltpu

# ---- small, module-consistent demo shapes (module: N=6, 623->154, 73x36) ----
N = 2           # batch
C_IN = 8        # in channels
C_OUT = 16      # out channels
H = W = 15      # spatial
K = 6           # kernel size
P = 2           # padding
NEG_SLOPE = -0.608

PAD = K - 1 - P                    # = 3  zero-pad of the equivalent correlation
H_OUT = H - 1 + K - 2 * P          # = 16
W_OUT = W - 1 + K - 2 * P          # = 16

W_LPAD = 8                         # over-padded left margin -> aligned interior store
W_OFF = W_LPAD - PAD               # = 5  shift applied to every kw window offset
H_PAD = H + 2 * PAD                # = 21
W_PAD = W_LPAD + W + PAD           # = 26 (cols [0, W_OFF) are unused zeros)

RB = 8                             # output rows per grid step (M = RB*W_OUT = 128)
NRB = H_OUT // RB                  # row blocks per batch element
M = RB * W_OUT                     # matmul M dim = 128
KKC = K * K * C_IN                 # im2col contraction length = 288
CO_PAD = ((C_OUT + 127) // 128) * 128   # lane-dense padded output channels
INV_COUNT = 1.0 / float(H_OUT * W_OUT)

assert H_OUT % RB == 0, "demo shapes must tile exactly (see TODO above)"
assert W_OUT % 8 == 0, "W_OUT must stay sublane-tile aligned for the (RB,W_OUT,C)->(M,C) merge"


def _fused_kernel(x_ref, w_ref, b_ref, o_ref, xpad_ref, pool_ref):
    # x_ref    : (1, H, W, C_IN)          bf16  one batch element (unpadded)
    # w_ref    : (KKC, CO_PAD)            bf16  im2col weight (kh,kw,ci row-major), grid-invariant
    # b_ref    : (1, CO_PAD)              f32   bias, grid-invariant
    # o_ref    : (1, 1, CO_PAD)           f32   pooled output for this batch element
    # xpad_ref : VMEM (H_PAD, W_PAD, C_IN) bf16  zero-padded frame (per batch element)
    # pool_ref : VMEM (1, CO_PAD)          f32   pooled partial sum (per batch element)
    #
    # NOTE: the per-batch carried scratch state (xpad built at rb==0, pool
    # accumulated over rb) relies on rb being the innermost, sequential
    # ("arbitrary") grid axis.
    rb = pl.program_id(1)

    # Fused zero-pad: build the padded frame once per batch element; the
    # interior store starts at W offset 8 (sublane-aligned -> unmasked stores).
    @pl.when(rb == 0)
    def _build_pad():
        xpad_ref[...] = jnp.zeros_like(xpad_ref)
        xpad_ref[pl.ds(PAD, H), pl.ds(W_LPAD, W), :] = x_ref[0]

    row0 = pl.multiple_of(rb * RB, RB)

    # In-kernel im2col: one (M, K*K*C_IN) slab, taps concatenated on the lane
    # axis in (kh, kw, ci) order (matches the wrapper's weight reshape).
    # Static Python loops -> fully unrolled for the scheduler.
    slabs = []
    for kh in range(K):
        band = xpad_ref[pl.ds(row0 + kh, RB), :, :]               # (RB, W_PAD, C_IN)
        slabs.append(jnp.concatenate(
            [band[:, W_OFF + kw:W_OFF + kw + W_OUT, :] for kw in range(K)],
            axis=-1))                                             # (RB, W_OUT, K*C_IN)
    patch = jnp.concatenate(slabs, axis=-1)                       # (RB, W_OUT, KKC)
    patch2d = patch.reshape(M, KKC)                               # aligned outer->sublane merge

    # Single MXU contraction per row block; accumulator stays in vregs, bias is
    # folded straight into the epilogue (no VMEM round trips).
    y = jnp.dot(patch2d, w_ref[...], preferred_element_type=jnp.float32)
    y = y + b_ref[...]                                            # (M, CO_PAD) f32
    y = jnp.where(y > 0, y, y * NEG_SLOPE)                        # torch.where(k1>0, k1, -0.608*k1)
    partial = jnp.sum(y, axis=0, keepdims=True)                   # (1, CO_PAD)

    @pl.when(rb == 0)
    def _init_pool():
        pool_ref[...] = jnp.zeros_like(pool_ref)

    pool_ref[...] += partial

    @pl.when(rb == pl.num_programs(1) - 1)
    def _finalize():
        o_ref[0, 0, :] = pool_ref[0, :] * INV_COUNT


def model_forward(x_nchw, w_pt, bias):
    """x_nchw: (N, C_IN, H, W) f32; w_pt: (C_IN, C_OUT, K, K) (PyTorch
    ConvTranspose2d layout); bias: (C_OUT,).  Returns (N, C_OUT, 1, 1) f32."""
    # Layout plumbing (once, cheap): NCHW->NHWC + bf16 cast for x; flip/transpose
    # + im2col-flatten + lane-pad the conv-transpose weight; pad the bias.
    x_nhwc = jnp.transpose(x_nchw, (0, 2, 3, 1)).astype(jnp.bfloat16)
    # Effective correlation weight: w_eff[kh, kw, ci, co] = w_pt[ci, co, K-1-kh, K-1-kw]
    w_eff = jnp.transpose(w_pt[:, :, ::-1, ::-1], (2, 3, 0, 1))       # (K, K, C_IN, C_OUT)
    w_im2col = w_eff.reshape(K * K * C_IN, C_OUT)                     # (kh,kw,ci) row-major
    w_im2col = jnp.pad(w_im2col, ((0, 0), (0, CO_PAD - C_OUT))).astype(jnp.bfloat16)
    b_pad = jnp.pad(bias, (0, CO_PAD - C_OUT)).reshape(1, CO_PAD).astype(jnp.float32)

    out = pl.pallas_call(
        _fused_kernel,
        out_shape=jax.ShapeDtypeStruct((N, 1, CO_PAD), jnp.float32),
        grid_spec=pltpu.PrefetchScalarGridSpec(
            num_scalar_prefetch=0,
            grid=(N, NRB),
            in_specs=[
                pl.BlockSpec((1, H, W, C_IN), lambda n, rb: (n, 0, 0, 0)),
                # Grid-invariant -> DMA'd once, stays resident.  At real module
                # shapes on v7x: add pipeline_mode=pl.Buffered(1) and tile C_IN
                # on a third 'arbitrary' grid axis (64 MiB VMEM budget).
                pl.BlockSpec((KKC, CO_PAD), lambda n, rb: (0, 0)),
                pl.BlockSpec((1, CO_PAD), lambda n, rb: (0, 0)),
            ],
            out_specs=pl.BlockSpec((1, 1, CO_PAD), lambda n, rb: (n, 0, 0)),
            scratch_shapes=[
                pltpu.VMEM((H_PAD, W_PAD, C_IN), jnp.bfloat16),   # padded frame
                pltpu.VMEM((1, CO_PAD), jnp.float32),             # pooled sum
            ],
        ),
        compiler_params=pltpu.CompilerParams(
            # rb carries the padded frame + pooled sum -> must stay sequential.
            dimension_semantics=("parallel", "arbitrary"),
            # Plenty for demo shapes.  Real shapes: raise toward 64-96 MiB on
            # v5e/v6e (128 MiB VMEM) for deeper buffering; keep tight on v7x.
            vmem_limit_bytes=32 * 1024 * 1024),
    )(x_nhwc, w_im2col, b_pad)

    return out[:, 0, :C_OUT].reshape(N, C_OUT, 1, 1)


def _reference(x_nchw, w_pt, bias):
    """Independent pure-JAX reference: explicit ConvTranspose2d scatter,
    leaky-where, global average pool."""
    n, ci, h, w = x_nchw.shape
    co = w_pt.shape[1]
    full = jnp.zeros((n, co, h + K - 1, w + K - 1), jnp.float32)
    for kh in range(K):
        for kw in range(K):
            tap = jnp.einsum('nchw,cd->ndhw', x_nchw, w_pt[:, :, kh, kw])
            full = full.at[:, :, kh:kh + h, kw:kw + w].add(tap)
    y = full[:, :, P:h + K - 1 - P, P:w + K - 1 - P] + bias.reshape(1, co, 1, 1)
    y = jnp.where(y > 0, y, y * NEG_SLOPE)
    return jnp.mean(y, axis=(2, 3), keepdims=True)


if __name__ == "__main__":
    key = jax.random.PRNGKey(0)
    kx, kw_, kb = jax.random.split(key, 3)
    x = jax.random.normal(kx, (N, C_IN, H, W), jnp.float32)
    # deterministic "parameters" (PyTorch ConvTranspose2d weight: (Cin, Cout, K, K))
    fan = C_IN * K * K
    bound = 1.0 / (fan ** 0.5)
    w = jax.random.uniform(kw_, (C_IN, C_OUT, K, K), jnp.float32, -bound, bound)
    b = jax.random.uniform(kb, (C_OUT,), jnp.float32, -bound, bound)

    out = model_forward(x, w, b)
    jax.block_until_ready(out)

    ref = _reference(x, w, b)
    assert out.shape == (N, C_OUT, 1, 1)
    # bf16 operands with f32 accumulation -> compare loosely against f32 reference
    assert jnp.allclose(out, ref, atol=2e-2, rtol=2e-2), (
        jnp.max(jnp.abs(out - ref)))
    print("KERNEL_OK")
</pallas_src>

<mosaic_0001>
module attributes {stable_mosaic.version = 11 : i64} {
  func.func @_fused_kernel(%arg0: i32, %arg1: i32, %arg2: memref<1x15x15x8xbf16, #tpu.memory_space<vmem>>, %arg3: memref<288x128xbf16, #tpu.memory_space<vmem>>, %arg4: memref<1x128xf32, #tpu.memory_space<vmem>>, %arg5: memref<1x1x128xf32, #tpu.memory_space<vmem>>, %arg6: memref<21x26x8xbf16, #tpu.memory_space<vmem>>, %arg7: memref<1x128xf32, #tpu.memory_space<vmem>>) attributes {dimension_semantics = [#tpu.dimension_semantics<parallel>, #tpu.dimension_semantics<arbitrary>], iteration_bounds = array<i64: 2, 2>, scalar_prefetch = 0 : i64, scratch_operands = 2 : i64, tpu.core_type = #tpu.core_type<tc>, window_params = [{transform_indices = @transform_0, window_bounds = array<i64: 1, 15, 15, 8>}, {pipeline_mode = #tpu.pipeline_mode<synchronous>, transform_indices = @transform_1, window_bounds = array<i64: 288, 128>}, {pipeline_mode = #tpu.pipeline_mode<synchronous>, transform_indices = @transform_2, window_bounds = array<i64: 1, 128>}, {transform_indices = @transform_3, window_bounds = array<i64: 1, 1, 128>}]} {
    %c0_i32 = arith.constant 0 : i32
    %0 = arith.cmpi eq, %arg1, %c0_i32 : i32
    %1 = arith.extui %0 : i1 to i32
    %c0_i32_0 = arith.constant 0 : i32
    %2 = arith.cmpi ne, %1, %c0_i32_0 : i32
    scf.if %2 {
      %cst_28 = arith.constant 0.000000e+00 : bf16
      %88 = vector.broadcast %cst_28 : bf16 to vector<21x26x8xbf16>
      %c0_29 = arith.constant 0 : index
      %c0_30 = arith.constant 0 : index
      %c0_31 = arith.constant 0 : index
      %89 = vector.load %arg6[%c0_29, %c0_30, %c0_31] : memref<21x26x8xbf16, #tpu.memory_space<vmem>>, vector<21x26x8xbf16>
      tpu.vector_store %arg6[%c0_29, %c0_30, %c0_31], %88 {strides = array<i32>} : memref<21x26x8xbf16, #tpu.memory_space<vmem>>, vector<21x26x8xbf16>,
      %c0_32 = arith.constant 0 : index
      %c0_33 = arith.constant 0 : index
      %c0_34 = arith.constant 0 : index
      %c0_35 = arith.constant 0 : index
      %90 = vector.load %arg2[%c0_32, %c0_33, %c0_34, %c0_35] : memref<1x15x15x8xbf16, #tpu.memory_space<vmem>>, vector<1x15x15x8xbf16>
      %91 = vector.shape_cast %90 : vector<1x15x15x8xbf16> to vector<15x15x8xbf16>
      %c3 = arith.constant 3 : index
      %c8 = arith.constant 8 : index
      %c0_36 = arith.constant 0 : index
      %92 = vector.load %arg6[%c3, %c8, %c0_36] : memref<21x26x8xbf16, #tpu.memory_space<vmem>>, vector<15x15x8xbf16>
      tpu.vector_store %arg6[%c3, %c8, %c0_36], %91 {strides = array<i32>} : memref<21x26x8xbf16, #tpu.memory_space<vmem>>, vector<15x15x8xbf16>,
    } else {
    }
    %c8_i32 = arith.constant 8 : i32
    %3 = arith.muli %arg1, %c8_i32 : i32
    %4 = tpu.assume_multiple %3, 8 : i32
    %c0_i32_1 = arith.constant 0 : i32
    %5 = arith.addi %4, %c0_i32_1 : i32
    %6 = arith.index_cast %5 : i32 to index
    %c0 = arith.constant 0 : index
    %c0_2 = arith.constant 0 : index
    %7 = vector.load %arg6[%6, %c0, %c0_2] : memref<21x26x8xbf16, #tpu.memory_space<vmem>>, vector<8x26x8xbf16>
    %8 = vector.extract_strided_slice %7 {offsets = [0, 5, 0], sizes = [8, 16, 8], strides = [1, 1, 1]} : vector<8x26x8xbf16> to vector<8x16x8xbf16>
    %9 = vector.extract_strided_slice %7 {offsets = [0, 6, 0], sizes = [8, 16, 8], strides = [1, 1, 1]} : vector<8x26x8xbf16> to vector<8x16x8xbf16>
    %10 = vector.extract_strided_slice %7 {offsets = [0, 7, 0], sizes = [8, 16, 8], strides = [1, 1, 1]} : vector<8x26x8xbf16> to vector<8x16x8xbf16>
    %11 = vector.extract_strided_slice %7 {offsets = [0, 8, 0], sizes = [8, 16, 8], strides = [1, 1, 1]} : vector<8x26x8xbf16> to vector<8x16x8xbf16>
    %12 = vector.extract_strided_slice %7 {offsets = [0, 9, 0], sizes = [8, 16, 8], strides = [1, 1, 1]} : vector<8x26x8xbf16> to vector<8x16x8xbf16>
    %13 = vector.extract_strided_slice %7 {offsets = [0, 10, 0], sizes = [8, 16, 8], strides = [1, 1, 1]} : vector<8x26x8xbf16> to vector<8x16x8xbf16>
    %14 = tpu.concatenate %8, %9, %10, %11, %12, %13 in 2 : vector<8x16x8xbf16>, vector<8x16x8xbf16>, vector<8x16x8xbf16>, vector<8x16x8xbf16>, vector<8x16x8xbf16>, vector<8x16x8xbf16> -> vector<8x16x48xbf16>
    %c1_i32 = arith.constant 1 : i32
    %15 = arith.addi %4, %c1_i32 : i32
    %16 = arith.index_cast %15 : i32 to index
    %c0_3 = arith.constant 0 : index
    %c0_4 = arith.constant 0 : index
    %17 = vector.load %arg6[%16, %c0_3, %c0_4] : memref<21x26x8xbf16, #tpu.memory_space<vmem>>, vector<8x26x8xbf16>
    %18 = vector.extract_strided_slice %17 {offsets = [0, 5, 0], sizes = [8, 16, 8], strides = [1, 1, 1]} : vector<8x26x8xbf16> to vector<8x16x8xbf16>
    %19 = vector.extract_strided_slice %17 {offsets = [0, 6, 0], sizes = [8, 16, 8], strides = [1, 1, 1]} : vector<8x26x8xbf16> to vector<8x16x8xbf16>
    %20 = vector.extract_strided_slice %17 {offsets = [0, 7, 0], sizes = [8, 16, 8], strides = [1, 1, 1]} : vector<8x26x8xbf16> to vector<8x16x8xbf16>
    %21 = vector.extract_strided_slice %17 {offsets = [0, 8, 0], sizes = [8, 16, 8], strides = [1, 1, 1]} : vector<8x26x8xbf16> to vector<8x16x8xbf16>
    %22 = vector.extract_strided_slice %17 {offsets = [0, 9, 0], sizes = [8, 16, 8], strides = [1, 1, 1]} : vector<8x26x8xbf16> to vector<8x16x8xbf16>
    %23 = vector.extract_strided_slice %17 {offsets = [0, 10, 0], sizes = [8, 16, 8], strides = [1, 1, 1]} : vector<8x26x8xbf16> to vector<8x16x8xbf16>
    %24 = tpu.concatenate %18, %19, %20, %21, %22, %23 in 2 : vector<8x16x8xbf16>, vector<8x16x8xbf16>, vector<8x16x8xbf16>, vector<8x16x8xbf16>, vector<8x16x8xbf16>, vector<8x16x8xbf16> -> vector<8x16x48xbf16>
    %c2_i32 = arith.constant 2 : i32
    %25 = arith.addi %4, %c2_i32 : i32
    %26 = arith.index_cast %25 : i32 to index
    %c0_5 = arith.constant 0 : index
    %c0_6 = arith.constant 0 : index
    %27 = vector.load %arg6[%26, %c0_5, %c0_6] : memref<21x26x8xbf16, #tpu.memory_space<vmem>>, vector<8x26x8xbf16>
    %28 = vector.extract_strided_slice %27 {offsets = [0, 5, 0], sizes = [8, 16, 8], strides = [1, 1, 1]} : vector<8x26x8xbf16> to vector<8x16x8xbf16>
    %29 = vector.extract_strided_slice %27 {offsets = [0, 6, 0], sizes = [8, 16, 8], strides = [1, 1, 1]} : vector<8x26x8xbf16> to vector<8x16x8xbf16>
    %30 = vector.extract_strided_slice %27 {offsets = [0, 7, 0], sizes = [8, 16, 8], strides = [1, 1, 1]} : vector<8x26x8xbf16> to vector<8x16x8xbf16>
    %31 = vector.extract_strided_slice %27 {offsets = [0, 8, 0], sizes = [8, 16, 8], strides = [1, 1, 1]} : vector<8x26x8xbf16> to vector<8x16x8xbf16>
    %32 = vector.extract_strided_slice %27 {offsets = [0, 9, 0], sizes = [8, 16, 8], strides = [1, 1, 1]} : vector<8x26x8xbf16> to vector<8x16x8xbf16>
    %33 = vector.extract_strided_slice %27 {offsets = [0, 10, 0], sizes = [8, 16, 8], strides = [1, 1, 1]} : vector<8x26x8xbf16> to vector<8x16x8xbf16>
    %34 = tpu.concatenate %28, %29, %30, %31, %32, %33 in 2 : vector<8x16x8xbf16>, vector<8x16x8xbf16>, vector<8x16x8xbf16>, vector<8x16x8xbf16>, vector<8x16x8xbf16>, vector<8x16x8xbf16> -> vector<8x16x48xbf16>
    %c3_i32 = arith.constant 3 : i32
    %35 = arith.addi %4, %c3_i32 : i32
    %36 = arith.index_cast %35 : i32 to index
    %c0_7 = arith.constant 0 : index
    %c0_8 = arith.constant 0 : index
    %37 = vector.load %arg6[%36, %c0_7, %c0_8] : memref<21x26x8xbf16, #tpu.memory_space<vmem>>, vector<8x26x8xbf16>
    %38 = vector.extract_strided_slice %37 {offsets = [0, 5, 0], sizes = [8, 16, 8], strides = [1, 1, 1]} : vector<8x26x8xbf16> to vector<8x16x8xbf16>
    %39 = vector.extract_strided_slice %37 {offsets = [0, 6, 0], sizes = [8, 16, 8], strides = [1, 1, 1]} : vector<8x26x8xbf16> to vector<8x16x8xbf16>
    %40 = vector.extract_strided_slice %37 {offsets = [0, 7, 0], sizes = [8, 16, 8], strides = [1, 1, 1]} : vector<8x26x8xbf16> to vector<8x16x8xbf16>
    %41 = vector.extract_strided_slice %37 {offsets = [0, 8, 0], sizes = [8, 16, 8], strides = [1, 1, 1]} : vector<8x26x8xbf16> to vector<8x16x8xbf16>
    %42 = vector.extract_strided_slice %37 {offsets = [0, 9, 0], sizes = [8, 16, 8], strides = [1, 1, 1]} : vector<8x26x8xbf16> to vector<8x16x8xbf16>
    %43 = vector.extract_strided_slice %37 {offsets = [0, 10, 0], sizes = [8, 16, 8], strides = [1, 1, 1]} : vector<8x26x8xbf16> to vector<8x16x8xbf16>
    %44 = tpu.concatenate %38, %39, %40, %41, %42, %43 in 2 : vector<8x16x8xbf16>, vector<8x16x8xbf16>, vector<8x16x8xbf16>, vector<8x16x8xbf16>, vector<8x16x8xbf16>, vector<8x16x8xbf16> -> vector<8x16x48xbf16>
    %c4_i32 = arith.constant 4 : i32
    %45 = arith.addi %4, %c4_i32 : i32
    %46 = arith.index_cast %45 : i32 to index
    %c0_9 = arith.constant 0 : index
    %c0_10 = arith.constant 0 : index
    %47 = vector.load %arg6[%46, %c0_9, %c0_10] : memref<21x26x8xbf16, #tpu.memory_space<vmem>>, vector<8x26x8xbf16>
    %48 = vector.extract_strided_slice %47 {offsets = [0, 5, 0], sizes = [8, 16, 8], strides = [1, 1, 1]} : vector<8x26x8xbf16> to vector<8x16x8xbf16>
    %49 = vector.extract_strided_slice %47 {offsets = [0, 6, 0], sizes = [8, 16, 8], strides = [1, 1, 1]} : vector<8x26x8xbf16> to vector<8x16x8xbf16>
    %50 = vector.extract_strided_slice %47 {offsets = [0, 7, 0], sizes = [8, 16, 8], strides = [1, 1, 1]} : vector<8x26x8xbf16> to vector<8x16x8xbf16>
    %51 = vector.extract_strided_slice %47 {offsets = [0, 8, 0], sizes = [8, 16, 8], strides = [1, 1, 1]} : vector<8x26x8xbf16> to vector<8x16x8xbf16>
    %52 = vector.extract_strided_slice %47 {offsets = [0, 9, 0], sizes = [8, 16, 8], strides = [1, 1, 1]} : vector<8x26x8xbf16> to vector<8x16x8xbf16>
    %53 = vector.extract_strided_slice %47 {offsets = [0, 10, 0], sizes = [8, 16, 8], strides = [1, 1, 1]} : vector<8x26x8xbf16> to vector<8x16x8xbf16>
    %54 = tpu.concatenate %48, %49, %50, %51, %52, %53 in 2 : vector<8x16x8xbf16>, vector<8x16x8xbf16>, vector<8x16x8xbf16>, vector<8x16x8xbf16>, vector<8x16x8xbf16>, vector<8x16x8xbf16> -> vector<8x16x48xbf16>
    %c5_i32 = arith.constant 5 : i32
    %55 = arith.addi %4, %c5_i32 : i32
    %56 = arith.index_cast %55 : i32 to index
    %c0_11 = arith.constant 0 : index
    %c0_12 = arith.constant 0 : index
    %57 = vector.load %arg6[%56, %c0_11, %c0_12] : memref<21x26x8xbf16, #tpu.memory_space<vmem>>, vector<8x26x8xbf16>
    %58 = vector.extract_strided_slice %57 {offsets = [0, 5, 0], sizes = [8, 16, 8], strides = [1, 1, 1]} : vector<8x26x8xbf16> to vector<8x16x8xbf16>
    %59 = vector.extract_strided_slice %57 {offsets = [0, 6, 0], sizes = [8, 16, 8], strides = [1, 1, 1]} : vector<8x26x8xbf16> to vector<8x16x8xbf16>
    %60 = vector.extract_strided_slice %57 {offsets = [0, 7, 0], sizes = [8, 16, 8], strides = [1, 1, 1]} : vector<8x26x8xbf16> to vector<8x16x8xbf16>
    %61 = vector.extract_strided_slice %57 {offsets = [0, 8, 0], sizes = [8, 16, 8], strides = [1, 1, 1]} : vector<8x26x8xbf16> to vector<8x16x8xbf16>
    %62 = vector.extract_strided_slice %57 {offsets = [0, 9, 0], sizes = [8, 16, 8], strides = [1, 1, 1]} : vector<8x26x8xbf16> to vector<8x16x8xbf16>
    %63 = vector.extract_strided_slice %57 {offsets = [0, 10, 0], sizes = [8, 16, 8], strides = [1, 1, 1]} : vector<8x26x8xbf16> to vector<8x16x8xbf16>
    %64 = tpu.concatenate %58, %59, %60, %61, %62, %63 in 2 : vector<8x16x8xbf16>, vector<8x16x8xbf16>, vector<8x16x8xbf16>, vector<8x16x8xbf16>, vector<8x16x8xbf16>, vector<8x16x8xbf16> -> vector<8x16x48xbf16>
    %65 = tpu.concatenate %14, %24, %34, %44, %54, %64 in 2 : vector<8x16x48xbf16>, vector<8x16x48xbf16>, vector<8x16x48xbf16>, vector<8x16x48xbf16>, vector<8x16x48xbf16>, vector<8x16x48xbf16> -> vector<8x16x288xbf16>
    %66 = vector.shape_cast %65 : vector<8x16x288xbf16> to vector<128x288xbf16>
    %c0_13 = arith.constant 0 : index
    %c0_14 = arith.constant 0 : index
    %67 = vector.load %arg3[%c0_13, %c0_14] : memref<288x128xbf16, #tpu.memory_space<vmem>>, vector<288x128xbf16>
    %cst = arith.constant dense<0.000000e+00> : vector<128x128xf32>
    %68 = tpu.matmul %66, %67, %cst {dimension_numbers = #tpu.dot_dimension_numbers<[1], [0], [0], [1], [0, 0, 1, 1], [], []>} : vector<128x288xbf16>, vector<288x128xbf16>, vector<128x128xf32> -> vector<128x128xf32>
    %c0_15 = arith.constant 0 : index
    %c0_16 = arith.constant 0 : index
    %69 = vector.load %arg4[%c0_15, %c0_16] : memref<1x128xf32, #tpu.memory_space<vmem>>, vector<1x128xf32>
    %70 = vector.broadcast %69 : vector<1x128xf32> to vector<128x128xf32>
    %71 = arith.addf %68, %70 : vector<128x128xf32>
    %cst_17 = arith.constant 0.000000e+00 : f32
    %72 = vector.broadcast %cst_17 : f32 to vector<128x128xf32>
    %73 = arith.cmpf ogt, %71, %72 : vector<128x128xf32>
    %cst_18 = arith.constant -0.60799998 : f32
    %74 = vector.broadcast %cst_18 : f32 to vector<128x128xf32>
    %75 = arith.mulf %71, %74 : vector<128x128xf32>
    %76 = arith.select %73, %71, %75 : vector<128x128xi1>, vector<128x128xf32>
    %cst_19 = arith.constant dense<0.000000e+00> : vector<128xf32>
    %77 = vector.multi_reduction <add>, %76, %cst_19 [0] : vector<128x128xf32> to vector<128xf32>
    %78 = vector.shape_cast %77 : vector<128xf32> to vector<1x128xf32>
    %c0_i32_20 = arith.constant 0 : i32
    %79 = arith.cmpi eq, %arg1, %c0_i32_20 : i32
    %80 = arith.extui %79 : i1 to i32
    %c0_i32_21 = arith.constant 0 : i32
    %81 = arith.cmpi ne, %80, %c0_i32_21 : i32
    scf.if %81 {
      %cst_28 = arith.constant 0.000000e+00 : f32
      %88 = vector.broadcast %cst_28 : f32 to vector<1x128xf32>
      %c0_29 = arith.constant 0 : index
      %c0_30 = arith.constant 0 : index
      %89 = vector.load %arg7[%c0_29, %c0_30] : memref<1x128xf32, #tpu.memory_space<vmem>>, vector<1x128xf32>
      tpu.vector_store %arg7[%c0_29, %c0_30], %88 {strides = array<i32>} : memref<1x128xf32, #tpu.memory_space<vmem>>, vector<1x128xf32>,
    } else {
    }
    %c0_22 = arith.constant 0 : index
    %c0_23 = arith.constant 0 : index
    %82 = vector.load %arg7[%c0_22, %c0_23] : memref<1x128xf32, #tpu.memory_space<vmem>>, vector<1x128xf32>
    %83 = arith.addf %82, %78 : vector<1x128xf32>
    %c0_24 = arith.constant 0 : index
    %c0_25 = arith.constant 0 : index
    %84 = vector.load %arg7[%c0_24, %c0_25] : memref<1x128xf32, #tpu.memory_space<vmem>>, vector<1x128xf32>
    tpu.vector_store %arg7[%c0_24, %c0_25], %83 {strides = array<i32>} : memref<1x128xf32, #tpu.memory_space<vmem>>, vector<1x128xf32>,
    %c1_i32_26 = arith.constant 1 : i32
    %85 = arith.cmpi eq, %arg1, %c1_i32_26 : i32
    %86 = arith.extui %85 : i1 to i32
    %c0_i32_27 = arith.constant 0 : i32
    %87 = arith.cmpi ne, %86, %c0_i32_27 : i32
    scf.if %87 {
      %c0_28 = arith.constant 0 : index
      %c0_29 = arith.constant 0 : index
      %88 = vector.load %arg7[%c0_28, %c0_29] : memref<1x128xf32, #tpu.memory_space<vmem>>, vector<1x128xf32>
      %89 = vector.shape_cast %88 : vector<1x128xf32> to vector<128xf32>
      %cst_30 = arith.constant 3.906250e-03 : f32
      %90 = vector.broadcast %cst_30 : f32 to vector<128xf32>
      %91 = arith.mulf %89, %90 : vector<128xf32>
      %c0_31 = arith.constant 0 : index
      %c0_32 = arith.constant 0 : index
      %c0_33 = arith.constant 0 : index
      %92 = vector.load %arg5[%c0_31, %c0_32, %c0_33] : memref<1x1x128xf32, #tpu.memory_space<vmem>>, vector<1x1x128xf32>
      %93 = vector.shape_cast %92 : vector<1x1x128xf32> to vector<128xf32>
      %94 = vector.shape_cast %91 : vector<128xf32> to vector<1x1x128xf32>
      tpu.vector_store %arg5[%c0_31, %c0_32, %c0_33], %94 {strides = array<i32>} : memref<1x1x128xf32, #tpu.memory_space<vmem>>, vector<1x1x128xf32>,
    } else {
    }
    return
  }
  func.func @transform_0(%arg0: i32, %arg1: i32) -> (i32, i32, i32, i32) {
    %c0_i32 = arith.constant 0 : i32
    %c0_i32_0 = arith.constant 0 : i32
    %c0_i32_1 = arith.constant 0 : i32
    %c0_i32_2 = arith.constant 0 : i32
    return %arg0, %c0_i32, %c0_i32_0, %c0_i32_1 : i32, i32, i32, i32
  }
  func.func @transform_1(%arg0: i32, %arg1: i32) -> (i32, i32) {
    %c0_i32 = arith.constant 0 : i32
    %c0_i32_0 = arith.constant 0 : i32
    %c0_i32_1 = arith.constant 0 : i32
    return %c0_i32, %c0_i32_0 : i32, i32
  }
  func.func @transform_2(%arg0: i32, %arg1: i32) -> (i32, i32) {
    %c0_i32 = arith.constant 0 : i32
    %c0_i32_0 = arith.constant 0 : i32
    %c0_i32_1 = arith.constant 0 : i32
    return %c0_i32, %c0_i32_0 : i32, i32
  }
  func.func @transform_3(%arg0: i32, %arg1: i32) -> (i32, i32, i32) {
    %c0_i32 = arith.constant 0 : i32
    %c0_i32_0 = arith.constant 0 : i32
    %c0_i32_1 = arith.constant 0 : i32
    return %arg0, %c0_i32, %c0_i32_0 : i32, i32, i32
  }
}

</mosaic_0001>

<llo_original>
// kernel: tpu_custom_call.1
$region0: #{tpu_custom_call.1}
  #allocation0 [shape = 'u32[]', space=smem, size = 0x4, offset = 0x4, fixed_abs, tag = 'smem constant byte address 0x4 - core index']
  #allocation1 [shape = 'u32[72,128]{1,0:T(1,128)}', space=vmem, size = 0x9000, scoped, tag = 'internal scratch']
  #allocation2 [shape = 'bf16[21,26,8]{2,1,0:T(8,128)(2,1)}', space=vmem, size = 0x2a000, scoped, tag = 'scratch operand']
  #allocation3 [shape = 'f32[1,128]{1,0:T(1,128)}', space=vmem, size = 0x200, scoped, tag = 'scratch operand']
  %s0 = inlined_call_operand.vmem [shape: bf16[2,15,15,8], index: 0, kind: input, shape index: {}]
  %s1 = inlined_call_operand.vmem [shape: bf16[288,128], index: 1, kind: input, shape index: {}]
  %s2 = inlined_call_operand.vmem [shape: f32[1,128], index: 2, kind: input, shape index: {}]
  %s3 = inlined_call_operand.hbm [shape: f32[2,1,128], index: 3, kind: output, shape index: {}]
  %s4 = sld [smem:[#allocation0]]
  $region57: #{tpu_custom_call.1} parent=0
    _
  %s6 = ssub.s32 1, %s4
  %s7 = scalar_select 0, %s6, %s4
  $region1: #{tpu_custom_call.1} parent=0
    #allocation4 [shape = 'u8[1024]{0}', space=vmem, size = 0x400, scoped, tag = 'output window, operand 0']
    #allocation5 [shape = 's32[2]{0}', space=sflag, size = 0x8, scoped, tag = 'scoped memory for tpu_custom_call.1']
    %8 = vsyncpa [#allocation5], 0
    %s9 = scalar_lea.sflag [#allocation5], 1
    %10 = vsyncpa %s9, 0
    loop: start=0, step=1, limit=6
    $region2: #{tpu_custom_call.1} parent=1 // loop_pre_header
      _
    $region3: #{tpu_custom_call.1} parent=1 // loop_header
      %s12 = sphi 0, %s16
      %p13 = scmp.ge.s32.totalorder %s12, 6
      %s19 = sphi 0, %s31
      %s20 = sphi 0, %s27
      %s21 = sphi 0, %s19
      %s22 = sphi 0, %s20
      %s23 = sphi 0, %s21
      %s24 = sphi 0, %s22
      %s34 = sphi 0, %s36
      %s37 = sphi 0, %s34
      %s38 = sphi 0, %s37
      %s54 = sphi 0, %s38
      %s58 = sphi 0, %s58
      %s60 = sphi 0, %s58
      %s61 = sphi 0, %s60
      %s75 = sphi 0, %s61
      %s79 = sphi 0, %s79
      %s81 = sphi 0, %s79
      %s82 = sphi 0, %s81
      %s96 = sphi 0, %s82
      %s102 = sphi 0, %s104
      %s105 = sphi 0, %s102
      %s106 = sphi 0, %s105
      %s122 = sphi 0, %s106
    $region4: #{tpu_custom_call.1} parent=1 // loop_header_branch
      %15 = sbr.rel (%p13) target = $region8
    $region5: #{tpu_custom_call.1} parent=1 // loop_body
      %s17 = ssub.s32 %s12, 1
      %s18 = ssub.s32 %s12, 2
      %s25 = sadd.s32 1, %s20
      %p26 = scmp.ge.s32.totalorder %s25, 2
      %s27 = scalar_select %p26, 0, %s25
      %s28 = sadd.s32 1, %s19
      %s29 = scalar_select %p26, %s28, %s19
      %p30 = scmp.ge.s32.totalorder %s29, 2
      %s31 = scalar_select %p30, 0, %s29
      %s32 = ssub.s32 %s19, %s31
      %p33 = scmp.eq.s32.totalorder %s32, 0
      %s35 = sadd.s32 %s34, 1
      %s36 = scalar_select %p33, %s34, %s35
      %p39 = pneg %p33
      %p40 = scmp.eq.s32.totalorder %s12, 3
      %p41 = por %p39, %p40
      %p42 = scmp.ne.s32.totalorder %s34, %s37
      %p43 = scmp.eq.s32.totalorder %s12, 0
      %p44 = por %p42, %p43
      %p45 = scmp.ne.s32.totalorder %s34, %s37
      %p46 = scmp.eq.s32.totalorder %s17, 3
      %p47 = por %p45, %p46
      %p48 = scmp.ne.s32.totalorder %s37, %s38
      %p49 = scmp.eq.s32.totalorder %s17, 0
      %p50 = por %p48, %p49
      %p51 = scmp.ne.s32.totalorder %s37, %s38
      %p52 = scmp.eq.s32.totalorder %s18, 3
      %p53 = por %p51, %p52
      %p55 = scmp.ne.s32.totalorder %s38, %s54
      %p56 = scmp.eq.s32.totalorder %s18, 0
      %p57 = por %p55, %p56
      %s59 = sadd.s32 %s58, 1
      %p62 = scmp.eq.s32.totalorder %s12, 3
      %p63 = scmp.ne.s32.totalorder %s58, %s60
      %p64 = scmp.eq.s32.totalorder %s12, 0
      %p65 = por %p63, %p64
      %p66 = scmp.ne.s32.totalorder %s58, %s60
      %p67 = scmp.eq.s32.totalorder %s17, 3
      %p68 = por %p66, %p67
      %p69 = scmp.ne.s32.totalorder %s60, %s61
      %p70 = scmp.eq.s32.totalorder %s17, 0
      %p71 = por %p69, %p70
      %p72 = scmp.ne.s32.totalorder %s60, %s61
      %p73 = scmp.eq.s32.totalorder %s18, 3
      %p74 = por %p72, %p73
      %p76 = scmp.ne.s32.totalorder %s61, %s75
      %p77 = scmp.eq.s32.totalorder %s18, 0
      %p78 = por %p76, %p77
      %s80 = sadd.s32 %s79, 1
      %p83 = scmp.eq.s32.totalorder %s12, 3
      %p84 = scmp.ne.s32.totalorder %s79, %s81
      %p85 = scmp.eq.s32.totalorder %s12, 0
      %p86 = por %p84, %p85
      %p87 = scmp.ne.s32.totalorder %s79, %s81
      %p88 = scmp.eq.s32.totalorder %s17, 3
      %p89 = por %p87, %p88
      %p90 = scmp.ne.s32.totalorder %s81, %s82
      %p91 = scmp.eq.s32.totalorder %s17, 0
      %p92 = por %p90, %p91
      %p93 = scmp.ne.s32.totalorder %s81, %s82
      %p94 = scmp.eq.s32.totalorder %s18, 3
      %p95 = por %p93, %p94
      %p97 = scmp.ne.s32.totalorder %s82, %s96
      %p98 = scmp.eq.s32.totalorder %s18, 0
      %p99 = por %p97, %p98
      %s100 = ssub.s32 %s19, %s31
      %p101 = scmp.eq.s32.totalorder %s100, 0
      %s103 = sadd.s32 %s102, 1
      %s104 = scalar_select %p101, %s102, %s103
      %p107 = pneg %p101
      %p108 = scmp.eq.s32.totalorder %s12, 3
      %p109 = por %p107, %p108
      %p110 = scmp.ne.s32.totalorder %s102, %s105
      %p111 = scmp.eq.s32.totalorder %s12, 0
      %p112 = por %p110, %p111
      %p113 = scmp.ne.s32.totalorder %s102, %s105
      %p114 = scmp.eq.s32.totalorder %s17, 3
      %p115 = por %p113, %p114
      %p116 = scmp.ne.s32.totalorder %s105, %s106
      %p117 = scmp.eq.s32.totalorder %s17, 0
      %p118 = por %p116, %p117
      %p119 = scmp.ne.s32.totalorder %s105, %s106
      %p120 = scmp.eq.s32.totalorder %s18, 3
      %p121 = por %p119, %p120
      %p123 = scmp.ne.s32.totalorder %s106, %s122
      %p124 = scmp.eq.s32.totalorder %s18, 0
      %p125 = por %p123, %p124
      %p126 = scmp.le.s32.totalorder 1, %s12
      %p127 = scmp.lt.s32.totalorder %s12, 5
      %p128 = pnand %p126, %p127
      %p129 = pneg %p128
      // Predicated region
      $region9: #{tpu_custom_call.1} parent=5 // pred_check
        _
      $region10: #{tpu_custom_call.1} parent=5 // pred_check_branch
        %131 = sbr.rel (%p128) target = $region12
      $region11: #{tpu_custom_call.1} parent=5 // pred_region
        %s132 = ssub.s32 %s12, 1
        // Predicated region
        $region13: #{tpu_custom_call.1} parent=11 // pred_check
          %p133 = pneg %p71
        $region14: #{tpu_custom_call.1} parent=11 // pred_check_branch
          %135 = sbr.rel (%p133) target = $region16
        $region15: #{tpu_custom_call.1} parent=11 // pred_region
          _
        $region16: #{tpu_custom_call.1} parent=11 // pred_fallthru
          _
        // Predicated region
        $region17: #{tpu_custom_call.1} parent=11 // pred_check
          %p136 = pneg %p92
        $region18: #{tpu_custom_call.1} parent=11 // pred_check_branch
          %138 = sbr.rel (%p136) target = $region20
        $region19: #{tpu_custom_call.1} parent=11 // pred_region
          _
        $region20: #{tpu_custom_call.1} parent=11 // pred_fallthru
          _
      $region12: #{tpu_custom_call.1} parent=5 // pred_fallthru
        _
      %p139 = scmp.lt.s32.totalorder %s12, 4
      // Predicated region
      $region21: #{tpu_custom_call.1} parent=5 // pred_check
        %p140 = pneg %p139
      $region22: #{tpu_custom_call.1} parent=5 // pred_check_branch
        %142 = sbr.rel (%p140) target = $region24
      $region23: #{tpu_custom_call.1} parent=5 // pred_region
        // Predicated region
        $region25: #{tpu_custom_call.1} parent=23 // pred_check
          %p143 = pneg %p44
        $region26: #{tpu_custom_call.1} parent=23 // pred_check_branch
          %145 = sbr.rel (%p143) target = $region28
        $region27: #{tpu_custom_call.1} parent=23 // pred_region
          %p146 = scmp.lt.s32.totalorder %s19, 1
          %s147 = scalar_select %p146, %s19, 1
          %s148 = smul.addr %s147, 30
          %s149 = smul.addr %s148, 4
          %s150 = scalar_lea.vmem %s0, %s149
        $region28: #{tpu_custom_call.1} parent=23 // pred_fallthru
          _
      $region24: #{tpu_custom_call.1} parent=5 // pred_fallthru
        _
      %p151 = scmp.le.s32.totalorder 1, %s12
      %p152 = scmp.lt.s32.totalorder %s12, 5
      %p153 = pnand %p151, %p152
      %p154 = pneg %p153
      // Predicated region
      $region29: #{tpu_custom_call.1} parent=5 // pred_check
        _
      $region30: #{tpu_custom_call.1} parent=5 // pred_check_branch
        %156 = sbr.rel (%p153) target = $region32
      $region31: #{tpu_custom_call.1} parent=5 // pred_region
        %s157 = ssub.s32 %s12, 1
        %p158 = scmp.lt.s32.totalorder %s21, 1
        %s159 = scalar_select %p158, %s21, 1
        %s160 = smul.addr %s159, 30
        %s161 = smul.addr %s160, 4
        %s162 = scalar_lea.vmem %s0, %s161
        %p163 = pneg %p50
        %p164 = pneg %p47
        %p165 = pneg %p71
        %p166 = pneg %p68
        %p167 = pneg %p92
        %p168 = pneg %p89
        %p169 = pneg %p118
        %p170 = pneg %p115
        %s171 = sand.u32 %s105, 1
        %s172 = scalar_lea.sflag [#allocation5], %s171
        %s173 = sand.u32 %s105, 1
        %s174 = scalar_lea.vmem [#allocation4], %s173
        %p175 = scmp.lt.s32.totalorder %s21, 1
        %s176 = scalar_select %p175, %s21, 1
        %s177 = smul.addr %s176, 30
        %s178 = smul.addr %s177, 4
        %s179 = scalar_lea.vmem %s0, %s178
        %p181 = scmp.eq.s32.totalorder %s22, 0
        // Predicated region
        $region33: #{tpu_custom_call.1} parent=31 // pred_check
          %p182 = pneg %p181
        $region34: #{tpu_custom_call.1} parent=31 // pred_check_branch
          %184 = sbr.rel (%p182) target = $region36
        $region35: #{tpu_custom_call.1} parent=31 // pred_region
          %vm185 = vcmask 60416
          %186 = vst.msk [vmem:[#allocation2] sm:$0xf] %vm185, 0
          %187 = vst.msk [vmem:[#allocation2 + $0x4] sm:$0xf] %vm185, 0
          %188 = vst.msk [vmem:[#allocation2 + $0x8] sm:$0xf] %vm185, 0
          %vm189 = vcmask 57344
          %190 = vst.msk [vmem:[#allocation2 + $0xc] sm:$0x1] %vm189, 0
          %191 = vst.msk [vmem:[#allocation2 + $0x10] sm:$0xf] %vm185, 0
          %192 = vst.msk [vmem:[#allocation2 + $0x14] sm:$0xf] %vm185, 0
          %193 = vst.msk [vmem:[#allocation2 + $0x18] sm:$0xf] %vm185, 0
          %194 = vst.msk [vmem:[#allocation2 + $0x1c] sm:$0x1] %vm189, 0
          %195 = vst.msk [vmem:[#allocation2 + $0x20] sm:$0xf] %vm185, 0
          %196 = vst.msk [vmem:[#allocation2 + $0x24] sm:$0xf] %vm185, 0
          %197 = vst.msk [vmem:[#allocation2 + $0x28] sm:$0xf] %vm185, 0
          %198 = vst.msk [vmem:[#allocation2 + $0x2c] sm:$0x1] %vm189, 0
          %199 = vst.msk [vmem:[#allocation2 + $0x30] sm:$0xf] %vm185, 0
          %200 = vst.msk [vmem:[#allocation2 + $0x34] sm:$0xf] %vm185, 0
          %201 = vst.msk [vmem:[#allocation2 + $0x38] sm:$0xf] %vm185, 0
          %202 = vst.msk [vmem:[#allocation2 + $0x3c] sm:$0x1] %vm189, 0
          %203 = vst.msk [vmem:[#allocation2 + $0x40] sm:$0xf] %vm185, 0
          %204 = vst.msk [vmem:[#allocation2 + $0x44] sm:$0xf] %vm185, 0
          %205 = vst.msk [vmem:[#allocation2 + $0x48] sm:$0xf] %vm185, 0
          %206 = vst.msk [vmem:[#allocation2 + $0x4c] sm:$0x1] %vm189, 0
          %207 = vst.msk [vmem:[#allocation2 + $0x50] sm:$0xf] %vm185, 0
          %208 = vst.msk [vmem:[#allocation2 + $0x54] sm:$0xf] %vm185, 0
          %209 = vst.msk [vmem:[#allocation2 + $0x58] sm:$0xf] %vm185, 0
          %210 = vst.msk [vmem:[#allocation2 + $0x5c] sm:$0x1] %vm189, 0
          %211 = vst.msk [vmem:[#allocation2 + $0x60] sm:$0xf] %vm185, 0
          %212 = vst.msk [vmem:[#allocation2 + $0x64] sm:$0xf] %vm185, 0
          %213 = vst.msk [vmem:[#allocation2 + $0x68] sm:$0xf] %vm185, 0
          %214 = vst.msk [vmem:[#allocation2 + $0x6c] sm:$0x1] %vm189, 0
          %215 = vst.msk [vmem:[#allocation2 + $0x70] sm:$0xf] %vm185, 0
          %216 = vst.msk [vmem:[#allocation2 + $0x74] sm:$0xf] %vm185, 0
          %217 = vst.msk [vmem:[#allocation2 + $0x78] sm:$0xf] %vm185, 0
          %218 = vst.msk [vmem:[#allocation2 + $0x7c] sm:$0x1] %vm189, 0
          %219 = vst.msk [vmem:[#allocation2 + $0x80] sm:$0xf] %vm185, 0
          %220 = vst.msk [vmem:[#allocation2 + $0x84] sm:$0xf] %vm185, 0
          %221 = vst.msk [vmem:[#allocation2 + $0x88] sm:$0xf] %vm185, 0
          %222 = vst.msk [vmem:[#allocation2 + $0x8c] sm:$0x1] %vm189, 0
          %223 = vst.msk [vmem:[#allocation2 + $0x90] sm:$0xf] %vm185, 0
          %224 = vst.msk [vmem:[#allocation2 + $0x94] sm:$0xf] %vm185, 0
          %225 = vst.msk [vmem:[#allocation2 + $0x98] sm:$0xf] %vm185, 0
          %226 = vst.msk [vmem:[#allocation2 + $0x9c] sm:$0x1] %vm189, 0
          %227 = vst.msk [vmem:[#allocation2 + $0xa0] sm:$0xf] %vm185, 0
          %228 = vst.msk [vmem:[#allocation2 + $0xa4] sm:$0xf] %vm185, 0
          %229 = vst.msk [vmem:[#allocation2 + $0xa8] sm:$0xf] %vm185, 0
          %230 = vst.msk [vmem:[#allocation2 + $0xac] sm:$0x1] %vm189, 0
          %231 = vst.msk [vmem:[#allocation2 + $0xb0] sm:$0xf] %vm185, 0
          %232 = vst.msk [vmem:[#allocation2 + $0xb4] sm:$0xf] %vm185, 0
          %233 = vst.msk [vmem:[#allocation2 + $0xb8] sm:$0xf] %vm185, 0
          %234 = vst.msk [vmem:[#allocation2 + $0xbc] sm:$0x1] %vm189, 0
          %235 = vst.msk [vmem:[#allocation2 + $0xc0] sm:$0xf] %vm185, 0
          %236 = vst.msk [vmem:[#allocation2 + $0xc4] sm:$0xf] %vm185, 0
          %237 = vst.msk [vmem:[#allocation2 + $0xc8] sm:$0xf] %vm185, 0
          %238 = vst.msk [vmem:[#allocation2 + $0xcc] sm:$0x1] %vm189, 0
          %239 = vst.msk [vmem:[#allocation2 + $0xd0] sm:$0xf] %vm185, 0
          %240 = vst.msk [vmem:[#allocation2 + $0xd4] sm:$0xf] %vm185, 0
          %241 = vst.msk [vmem:[#allocation2 + $0xd8] sm:$0xf] %vm185, 0
          %242 = vst.msk [vmem:[#allocation2 + $0xdc] sm:$0x1] %vm189, 0
          %243 = vst.msk [vmem:[#allocation2 + $0xe0] sm:$0xf] %vm185, 0
          %244 = vst.msk [vmem:[#allocation2 + $0xe4] sm:$0xf] %vm185, 0
          %245 = vst.msk [vmem:[#allocation2 + $0xe8] sm:$0xf] %vm185, 0
          %246 = vst.msk [vmem:[#allocation2 + $0xec] sm:$0x1] %vm189, 0
          %247 = vst.msk [vmem:[#allocation2 + $0xf0] sm:$0xf] %vm185, 0
          %248 = vst.msk [vmem:[#allocation2 + $0xf4] sm:$0xf] %vm185, 0
          %249 = vst.msk [vmem:[#allocation2 + $0xf8] sm:$0xf] %vm185, 0
          %250 = vst.msk [vmem:[#allocation2 + $0xfc] sm:$0x1] %vm189, 0
          %251 = vst.msk [vmem:[#allocation2 + $0x100] sm:$0xf] %vm185, 0
          %252 = vst.msk [vmem:[#allocation2 + $0x104] sm:$0xf] %vm185, 0
          %253 = vst.msk [vmem:[#allocation2 + $0x108] sm:$0xf] %vm185, 0
          %254 = vst.msk [vmem:[#allocation2 + $0x10c] sm:$0x1] %vm189, 0
          %255 = vst.msk [vmem:[#allocation2 + $0x110] sm:$0xf] %vm185, 0
          %256 = vst.msk [vmem:[#allocation2 + $0x114] sm:$0xf] %vm185, 0
          %257 = vst.msk [vmem:[#allocation2 + $0x118] sm:$0xf] %vm185, 0
          %258 = vst.msk [vmem:[#allocation2 + $0x11c] sm:$0x1] %vm189, 0
          %259 = vst.msk [vmem:[#allocation2 + $0x120] sm:$0xf] %vm185, 0
          %260 = vst.msk [vmem:[#allocation2 + $0x124] sm:$0xf] %vm185, 0
          %261 = vst.msk [vmem:[#allocation2 + $0x128] sm:$0xf] %vm185, 0
          %262 = vst.msk [vmem:[#allocation2 + $0x12c] sm:$0x1] %vm189, 0
          %263 = vst.msk [vmem:[#allocation2 + $0x130] sm:$0xf] %vm185, 0
          %264 = vst.msk [vmem:[#allocation2 + $0x134] sm:$0xf] %vm185, 0
          %265 = vst.msk [vmem:[#allocation2 + $0x138] sm:$0xf] %vm185, 0
          %266 = vst.msk [vmem:[#allocation2 + $0x13c] sm:$0x1] %vm189, 0
          %267 = vst.msk [vmem:[#allocation2 + $0x140] sm:$0xf] %vm185, 0
          %268 = vst.msk [vmem:[#allocation2 + $0x144] sm:$0xf] %vm185, 0
          %269 = vst.msk [vmem:[#allocation2 + $0x148] sm:$0xf] %vm185, 0
          %270 = vst.msk [vmem:[#allocation2 + $0x14c] sm:$0x1] %vm189, 0
          %v271 = vld [vmem:[%s179] sm:$0xf]
          %v272 = vld [vmem:[%s179 + $0x4] sm:$0xf]
          %v273 = vld [vmem:[%s179 + $0x8] sm:$0xf]
          %v274 = vld [vmem:[%s179 + $0xc] sm:$0xf]
          %v275 = vld [vmem:[%s179 + $0x10] sm:$0xf]
          %v276 = vld [vmem:[%s179 + $0x14] sm:$0xf]
          %v277 = vld [vmem:[%s179 + $0x18] sm:$0xf]
          %v278 = vld [vmem:[%s179 + $0x1c] sm:$0xf]
          %v279 = vld [vmem:[%s179 + $0x20] sm:$0xf]
          %v280 = vld [vmem:[%s179 + $0x24] sm:$0xf]
          %v281 = vld [vmem:[%s179 + $0x28] sm:$0xf]
          %v282 = vld [vmem:[%s179 + $0x2c] sm:$0xf]
          %v283 = vld [vmem:[%s179 + $0x30] sm:$0xf]
          %v284 = vld [vmem:[%s179 + $0x34] sm:$0xf]
          %v285 = vld [vmem:[%s179 + $0x38] sm:$0xf]
          %v286 = vld [vmem:[%s179 + $0x3c] sm:$0xf]
          %v287 = vld [vmem:[%s179 + $0x40] sm:$0xf]
          %v288 = vld [vmem:[%s179 + $0x44] sm:$0xf]
          %v289 = vld [vmem:[%s179 + $0x48] sm:$0xf]
          %v290 = vld [vmem:[%s179 + $0x4c] sm:$0xf]
          %v291 = vld [vmem:[%s179 + $0x50] sm:$0xf]
          %v292 = vld [vmem:[%s179 + $0x54] sm:$0xf]
          %v293 = vld [vmem:[%s179 + $0x58] sm:$0xf]
          %v294 = vld [vmem:[%s179 + $0x5c] sm:$0xf]
          %v295 = vld [vmem:[%s179 + $0x60] sm:$0xf]
          %v296 = vld [vmem:[%s179 + $0x64] sm:$0xf]
          %v297 = vld [vmem:[%s179 + $0x68] sm:$0xf]
          %v298 = vld [vmem:[%s179 + $0x6c] sm:$0xf]
          %v299 = vld [vmem:[%s179 + $0x70] sm:$0xf]
          %v300 = vld [vmem:[%s179 + $0x74] sm:$0xf]
          %s301 = scalar_lea.vmem [#allocation2], 48
          %302 = vst.msk [vmem:[%s301 + $0x4] sm:$0xf] %vm185, %v271
          %vm303 = vcmask 60416
          %vm304 = vsmask.f32 3328
          %vm305 = vmand %vm303, %vm304
          %v306 = vld [vmem:[%s301 + $0x8] sm:$0xf]
          %v307 = vsel %vm305, %v272, %v306
          %308 = vst [vmem:[%s301 + $0x8] sm:$0xf] %v307
          %309 = vst.msk [vmem:[%s301 + $0x14] sm:$0xf] %vm185, %v273
          %v310 = vld [vmem:[%s301 + $0x18] sm:$0xf]
          %v311 = vsel %vm305, %v274, %v310
          %312 = vst [vmem:[%s301 + $0x18] sm:$0xf] %v311
          %313 = vst.msk [vmem:[%s301 + $0x24] sm:$0xf] %vm185, %v275
          %v314 = vld [vmem:[%s301 + $0x28] sm:$0xf]
          %v315 = vsel %vm305, %v276, %v314
          %316 = vst [vmem:[%s301 + $0x28] sm:$0xf] %v315
          %317 = vst.msk [vmem:[%s301 + $0x34] sm:$0xf] %vm185, %v277
          %v318 = vld [vmem:[%s301 + $0x38] sm:$0xf]
          %v319 = vsel %vm305, %v278, %v318
          %320 = vst [vmem:[%s301 + $0x38] sm:$0xf] %v319
          %321 = vst.msk [vmem:[%s301 + $0x44] sm:$0xf] %vm185, %v279
          %v322 = vld [vmem:[%s301 + $0x48] sm:$0xf]
          %v323 = vsel %vm305, %v280, %v322
          %324 = vst [vmem:[%s301 + $0x48] sm:$0xf] %v323
          %325 = vst.msk [vmem:[%s301 + $0x54] sm:$0xf] %vm185, %v281
          %v326 = vld [vmem:[%s301 + $0x58] sm:$0xf]
          %v327 = vsel %vm305, %v282, %v326
          %328 = vst [vmem:[%s301 + $0x58] sm:$0xf] %v327
          %329 = vst.msk [vmem:[%s301 + $0x64] sm:$0xf] %vm185, %v283
          %v330 = vld [vmem:[%s301 + $0x68] sm:$0xf]
          %v331 = vsel %vm305, %v284, %v330
          %332 = vst [vmem:[%s301 + $0x68] sm:$0xf] %v331
          %333 = vst.msk [vmem:[%s301 + $0x74] sm:$0xf] %vm185, %v285
          %v334 = vld [vmem:[%s301 + $0x78] sm:$0xf]
          %v335 = vsel %vm305, %v286, %v334
          %336 = vst [vmem:[%s301 + $0x78] sm:$0xf] %v335
          %337 = vst.msk [vmem:[%s301 + $0x84] sm:$0xf] %vm185, %v287
          %v338 = vld [vmem:[%s301 + $0x88] sm:$0xf]
          %v339 = vsel %vm305, %v288, %v338
          %340 = vst [vmem:[%s301 + $0x88] sm:$0xf] %v339
          %341 = vst.msk [vmem:[%s301 + $0x94] sm:$0xf] %vm185, %v289
          %v342 = vld [vmem:[%s301 + $0x98] sm:$0xf]
          %v343 = vsel %vm305, %v290, %v342
          %344 = vst [vmem:[%s301 + $0x98] sm:$0xf] %v343
          %345 = vst.msk [vmem:[%s301 + $0xa4] sm:$0xf] %vm185, %v291
          %v346 = vld [vmem:[%s301 + $0xa8] sm:$0xf]
          %v347 = vsel %vm305, %v292, %v346
          %348 = vst [vmem:[%s301 + $0xa8] sm:$0xf] %v347
          %349 = vst.msk [vmem:[%s301 + $0xb4] sm:$0xf] %vm185, %v293
          %v350 = vld [vmem:[%s301 + $0xb8] sm:$0xf]
          %v351 = vsel %vm305, %v294, %v350
          %352 = vst [vmem:[%s301 + $0xb8] sm:$0xf] %v351
          %353 = vst.msk [vmem:[%s301 + $0xc4] sm:$0xf] %vm185, %v295
          %v354 = vld [vmem:[%s301 + $0xc8] sm:$0xf]
          %v355 = vsel %vm305, %v296, %v354
          %356 = vst [vmem:[%s301 + $0xc8] sm:$0xf] %v355
          %357 = vst.msk [vmem:[%s301 + $0xd4] sm:$0xf] %vm185, %v297
          %v358 = vld [vmem:[%s301 + $0xd8] sm:$0xf]
          %v359 = vsel %vm305, %v298, %v358
          %360 = vst [vmem:[%s301 + $0xd8] sm:$0xf] %v359
          %361 = vst.msk [vmem:[%s301 + $0xe4] sm:$0xf] %vm185, %v299
          %v362 = vld [vmem:[%s301 + $0xe8] sm:$0xf]
          %v363 = vsel %vm305, %v300, %v362
          %364 = vst [vmem:[%s301 + $0xe8] sm:$0xf] %v363
        $region36: #{tpu_custom_call.1} parent=31 // pred_fallthru
          _
        %s365 = smul.u32 %s22, 8
        %s366 = smul.u32 %s365, 4
        %s367 = smul.addr %s366, 4
        %s368 = scalar_lea.vmem [#allocation2], %s367
        %v369 = vld [vmem:[%s368] sm:$0xf]
        %v370 = vld [vmem:[%s368 + $0x4] sm:$0xf]
        %v371 = vld [vmem:[%s368 + $0x8] sm:$0xf]
        %v372 = vld [vmem:[%s368 + $0xc] sm:$0x1]
        %v373 = vld [vmem:[%s368 + $0x10] sm:$0xf]
        %v374 = vld [vmem:[%s368 + $0x14] sm:$0xf]
        %v375 = vld [vmem:[%s368 + $0x18] sm:$0xf]
        %v376 = vld [vmem:[%s368 + $0x1c] sm:$0x1]
        %v377 = vld [vmem:[%s368 + $0x20] sm:$0xf]
        %v378 = vld [vmem:[%s368 + $0x24] sm:$0xf]
        %v379 = vld [vmem:[%s368 + $0x28] sm:$0xf]
        %v380 = vld [vmem:[%s368 + $0x2c] sm:$0x1]
        %v381 = vld [vmem:[%s368 + $0x30] sm:$0xf]
        %v382 = vld [vmem:[%s368 + $0x34] sm:$0xf]
        %v383 = vld [vmem:[%s368 + $0x38] sm:$0xf]
        %v384 = vld [vmem:[%s368 + $0x3c] sm:$0x1]
        %v385 = vld [vmem:[%s368 + $0x40] sm:$0xf]
        %v386 = vld [vmem:[%s368 + $0x44] sm:$0xf]
        %v387 = vld [vmem:[%s368 + $0x48] sm:$0xf]
        %v388 = vld [vmem:[%s368 + $0x4c] sm:$0x1]
        %v389 = vld [vmem:[%s368 + $0x50] sm:$0xf]
        %v390 = vld [vmem:[%s368 + $0x54] sm:$0xf]
        %v391 = vld [vmem:[%s368 + $0x58] sm:$0xf]
        %v392 = vld [vmem:[%s368 + $0x5c] sm:$0x1]
        %v393 = vld [vmem:[%s368 + $0x60] sm:$0xf]
        %v394 = vld [vmem:[%s368 + $0x64] sm:$0xf]
        %v395 = vld [vmem:[%s368 + $0x68] sm:$0xf]
        %v396 = vld [vmem:[%s368 + $0x6c] sm:$0x1]
        %v397 = vld [vmem:[%s368 + $0x70] sm:$0xf]
        %v398 = vld [vmem:[%s368 + $0x74] sm:$0xf]
        %v399 = vld [vmem:[%s368 + $0x78] sm:$0xf]
        %v400 = vld [vmem:[%s368 + $0x7c] sm:$0x1]
        %v425 = vunpack.c.l.b16 %v369
        %v426 = vunpack.c.l.b16 %v370
        %v427 = vunpack.c.l.b16 %v371
        %v428 = vunpack.c.l.b16 %v373
        %v429 = vunpack.c.l.b16 %v374
        %v430 = vunpack.c.l.b16 %v375
        %v431 = vunpack.c.l.b16 %v377
        %v432 = vunpack.c.l.b16 %v378
        %v433 = vunpack.c.l.b16 %v379
        %v434 = vunpack.c.l.b16 %v381
        %v435 = vunpack.c.l.b16 %v382
        %v436 = vunpack.c.l.b16 %v383
        %v437 = vunpack.c.l.b16 %v385
        %v438 = vunpack.c.l.b16 %v386
        %v439 = vunpack.c.l.b16 %v387
        %v440 = vunpack.c.l.b16 %v389
        %v441 = vunpack.c.l.b16 %v390
        %v442 = vunpack.c.l.b16 %v391
        %v443 = vunpack.c.l.b16 %v393
        %v444 = vunpack.c.l.b16 %v394
        %v445 = vunpack.c.l.b16 %v395
        %v446 = vunpack.c.l.b16 %v397
        %v447 = vunpack.c.l.b16 %v398
        %v448 = vunpack.c.l.b16 %v399
        %v449 = vpack.c.b16 %v426, %v425
        %v450 = vpack.c.b16 %v427, %v427
        %v451 = vpack.c.b16 %v429, %v428
        %v452 = vpack.c.b16 %v430, %v430
        %v453 = vpack.c.b16 %v432, %v431
        %v454 = vpack.c.b16 %v433, %v433
        %v455 = vpack.c.b16 %v435, %v434
        %v456 = vpack.c.b16 %v436, %v436
        %v457 = vpack.c.b16 %v438, %v437
        %v458 = vpack.c.b16 %v439, %v439
        %v459 = vpack.c.b16 %v441, %v440
        %v460 = vpack.c.b16 %v442, %v442
        %v461 = vpack.c.b16 %v444, %v443
        %v462 = vpack.c.b16 %v445, %v445
        %v463 = vpack.c.b16 %v447, %v446
        %v464 = vpack.c.b16 %v448, %v448
        %vm465 = vsmask.f32 7424
        %v467 = vshrl.u32 %v449, 16
        %v469 = vshll.u32 %v449, 16
        %v471 = vrot.slane %v469, 1
        %v472 = vor.u32 %v467, %v471
        %v474 = vshll.u32 %v450, 16
        %v476 = vrot.slane %v474, 1
        %v477 = vsel %vm465, %v472, %v476
        %v478 = vshrl.u32 %v450, 16
        %v480 = vor.u32 %v478, %v476
        %v482 = vshrl.u32 %v451, 16
        %v484 = vshll.u32 %v451, 16
        %v486 = vrot.slane %v484, 1
        %v487 = vor.u32 %v482, %v486
        %v489 = vshll.u32 %v452, 16
        %v491 = vrot.slane %v489, 1
        %v492 = vsel %vm465, %v487, %v491
        %v493 = vshrl.u32 %v452, 16
        %v495 = vor.u32 %v493, %v491
        %v497 = vshrl.u32 %v453, 16
        %v499 = vshll.u32 %v453, 16
        %v501 = vrot.slane %v499, 1
        %v502 = vor.u32 %v497, %v501
        %v504 = vshll.u32 %v454, 16
        %v506 = vrot.slane %v504, 1
        %v507 = vsel %vm465, %v502, %v506
        %v508 = vshrl.u32 %v454, 16
        %v510 = vor.u32 %v508, %v506
        %v512 = vshrl.u32 %v455, 16
        %v514 = vshll.u32 %v455, 16
        %v516 = vrot.slane %v514, 1
        %v517 = vor.u32 %v512, %v516
        %v519 = vshll.u32 %v456, 16
        %v521 = vrot.slane %v519, 1
        %v522 = vsel %vm465, %v517, %v521
        %v523 = vshrl.u32 %v456, 16
        %v525 = vor.u32 %v523, %v521
        %v527 = vshrl.u32 %v457, 16
        %v529 = vshll.u32 %v457, 16
        %v531 = vrot.slane %v529, 1
        %v532 = vor.u32 %v527, %v531
        %v534 = vshll.u32 %v458, 16
        %v536 = vrot.slane %v534, 1
        %v537 = vsel %vm465, %v532, %v536
        %v538 = vshrl.u32 %v458, 16
        %v540 = vor.u32 %v538, %v536
        %v542 = vshrl.u32 %v459, 16
        %v544 = vshll.u32 %v459, 16
        %v546 = vrot.slane %v544, 1
        %v547 = vor.u32 %v542, %v546
        %v549 = vshll.u32 %v460, 16
        %v551 = vrot.slane %v549, 1
        %v552 = vsel %vm465, %v547, %v551
        %v553 = vshrl.u32 %v460, 16
        %v555 = vor.u32 %v553, %v551
        %v557 = vshrl.u32 %v461, 16
        %v559 = vshll.u32 %v461, 16
        %v561 = vrot.slane %v559, 1
        %v562 = vor.u32 %v557, %v561
        %v564 = vshll.u32 %v462, 16
        %v566 = vrot.slane %v564, 1
        %v567 = vsel %vm465, %v562, %v566
        %v568 = vshrl.u32 %v462, 16
        %v570 = vor.u32 %v568, %v566
        %v572 = vshrl.u32 %v463, 16
        %v574 = vshll.u32 %v463, 16
        %v576 = vrot.slane %v574, 1
        %v577 = vor.u32 %v572, %v576
        %v579 = vshll.u32 %v464, 16
        %v581 = vrot.slane %v579, 1
        %v582 = vsel %vm465, %v577, %v581
        %v583 = vshrl.u32 %v464, 16
        %v585 = vor.u32 %v583, %v581
        %586 = vrot.lane.b32.xlu0 %v477, 8
        %v587 = vpop.permute.xlu0 %586
        %588 = vrot.lane.b32.xlu0 %v480, 8
        %v589 = vpop.permute.xlu0 %588
        %590 = vrot.lane.b32.xlu0 %v492, 8
        %v591 = vpop.permute.xlu0 %590
        %592 = vrot.lane.b32.xlu0 %v495, 8
        %v593 = vpop.permute.xlu0 %592
        %594 = vrot.lane.b32.xlu0 %v507, 8
        %v595 = vpop.permute.xlu0 %594
        %596 = vrot.lane.b32.xlu0 %v510, 8
        %v597 = vpop.permute.xlu0 %596
        %598 = vrot.lane.b32.xlu0 %v522, 8
        %v599 = vpop.permute.xlu0 %598
        %600 = vrot.lane.b32.xlu0 %v525, 8
        %v601 = vpop.permute.xlu0 %600
        %602 = vrot.lane.b32.xlu0 %v537, 8
        %v603 = vpop.permute.xlu0 %602
        %604 = vrot.lane.b32.xlu0 %v540, 8
        %v605 = vpop.permute.xlu0 %604
        %606 = vrot.lane.b32.xlu0 %v552, 8
        %v607 = vpop.permute.xlu0 %606
        %608 = vrot.lane.b32.xlu0 %v555, 8
        %v609 = vpop.permute.xlu0 %608
        %610 = vrot.lane.b32.xlu0 %v567, 8
        %v611 = vpop.permute.xlu0 %610
        %612 = vrot.lane.b32.xlu0 %v570, 8
        %v613 = vpop.permute.xlu0 %612
        %614 = vrot.lane.b32.xlu0 %v582, 8
        %v615 = vpop.permute.xlu0 %614
        %616 = vrot.lane.b32.xlu0 %v585, 8
        %v617 = vpop.permute.xlu0 %616
        %vm618 = vcmask 1046528
        %v619 = vrot.slane %v449, 1
        %v620 = vrot.slane %v450, 1
        %v621 = vsel %vm618, %v619, %v620
        %v622 = vrot.slane %v451, 1
        %v623 = vrot.slane %v452, 1
        %v624 = vsel %vm618, %v622, %v623
        %v625 = vrot.slane %v453, 1
        %v626 = vrot.slane %v454, 1
        %v627 = vsel %vm618, %v625, %v626
        %v628 = vrot.slane %v455, 1
        %v629 = vrot.slane %v456, 1
        %v630 = vsel %vm618, %v628, %v629
        %v631 = vrot.slane %v457, 1
        %v632 = vrot.slane %v458, 1
        %v633 = vsel %vm618, %v631, %v632
        %v634 = vrot.slane %v459, 1
        %v635 = vrot.slane %v460, 1
        %v636 = vsel %vm618, %v634, %v635
        %v637 = vrot.slane %v461, 1
        %v638 = vrot.slane %v462, 1
        %v639 = vsel %vm618, %v637, %v638
        %v640 = vrot.slane %v463, 1
        %v641 = vrot.slane %v464, 1
        %v642 = vsel %vm618, %v640, %v641
        %643 = vrot.lane.b32.xlu0 %v621, 16
        %v644 = vpop.permute.xlu0 %643
        %645 = vrot.lane.b32.xlu0 %v620, 16
        %v646 = vpop.permute.xlu0 %645
        %647 = vrot.lane.b32.xlu0 %v624, 16
        %v648 = vpop.permute.xlu0 %647
        %649 = vrot.lane.b32.xlu0 %v623, 16
        %v650 = vpop.permute.xlu0 %649
        %651 = vrot.lane.b32.xlu0 %v627, 16
        %v652 = vpop.permute.xlu0 %651
        %653 = vrot.lane.b32.xlu0 %v626, 16
        %v654 = vpop.permute.xlu0 %653
        %655 = vrot.lane.b32.xlu0 %v630, 16
        %v656 = vpop.permute.xlu0 %655
        %657 = vrot.lane.b32.xlu0 %v629, 16
        %v658 = vpop.permute.xlu0 %657
        %659 = vrot.lane.b32.xlu0 %v633, 16
        %v660 = vpop.permute.xlu0 %659
        %661 = vrot.lane.b32.xlu0 %v632, 16
        %v662 = vpop.permute.xlu0 %661
        %663 = vrot.lane.b32.xlu0 %v636, 16
        %v664 = vpop.permute.xlu0 %663
        %665 = vrot.lane.b32.xlu0 %v635, 16
        %v666 = vpop.permute.xlu0 %665
        %667 = vrot.lane.b32.xlu0 %v639, 16
        %v668 = vpop.permute.xlu0 %667
        %669 = vrot.lane.b32.xlu0 %v638, 16
        %v670 = vpop.permute.xlu0 %669
        %671 = vrot.lane.b32.xlu0 %v642, 16
        %v672 = vpop.permute.xlu0 %671
        %673 = vrot.lane.b32.xlu0 %v641, 16
        %v674 = vpop.permute.xlu0 %673
        %v675 = vpack.c.b16 %v427, %v426
        %v676 = vpack.c.b16 %v430, %v429
        %v677 = vpack.c.b16 %v433, %v432
        %v678 = vpack.c.b16 %v436, %v435
        %v679 = vpack.c.b16 %v439, %v438
        %v680 = vpack.c.b16 %v442, %v441
        %v681 = vpack.c.b16 %v445, %v444
        %v682 = vpack.c.b16 %v448, %v447
        %v684 = vshrl.u32 %v675, 16
        %v686 = vrot.slane %v684, 5
        %v687 = vshll.u32 %v675, 16
        %v689 = vrot.slane %v687, 6
        %v690 = vor.u32 %v686, %v689
        %v692 = vshrl.u32 %v676, 16
        %v694 = vrot.slane %v692, 5
        %v695 = vshll.u32 %v676, 16
        %v697 = vrot.slane %v695, 6
        %v698 = vor.u32 %v694, %v697
        %v700 = vshrl.u32 %v677, 16
        %v702 = vrot.slane %v700, 5
        %v703 = vshll.u32 %v677, 16
        %v705 = vrot.slane %v703, 6
        %v706 = vor.u32 %v702, %v705
        %v708 = vshrl.u32 %v678, 16
        %v710 = vrot.slane %v708, 5
        %v711 = vshll.u32 %v678, 16
        %v713 = vrot.slane %v711, 6
        %v714 = vor.u32 %v710, %v713
        %v716 = vshrl.u32 %v679, 16
        %v718 = vrot.slane %v716, 5
        %v719 = vshll.u32 %v679, 16
        %v721 = vrot.slane %v719, 6
        %v722 = vor.u32 %v718, %v721
        %v724 = vshrl.u32 %v680, 16
        %v726 = vrot.slane %v724, 5
        %v727 = vshll.u32 %v680, 16
        %v729 = vrot.slane %v727, 6
        %v730 = vor.u32 %v726, %v729
        %v732 = vshrl.u32 %v681, 16
        %v734 = vrot.slane %v732, 5
        %v735 = vshll.u32 %v681, 16
        %v737 = vrot.slane %v735, 6
        %v738 = vor.u32 %v734, %v737
        %v740 = vshrl.u32 %v682, 16
        %v742 = vrot.slane %v740, 5
        %v743 = vshll.u32 %v682, 16
        %v745 = vrot.slane %v743, 6
        %v746 = vor.u32 %v742, %v745
        %747 = vrot.lane.b32.xlu0 %v690, 24
        %v748 = vpop.permute.xlu0 %747
        %749 = vrot.lane.b32.xlu0 %v698, 24
        %v750 = vpop.permute.xlu0 %749
        %751 = vrot.lane.b32.xlu0 %v706, 24
        %v752 = vpop.permute.xlu0 %751
        %753 = vrot.lane.b32.xlu0 %v714, 24
        %v754 = vpop.permute.xlu0 %753
        %755 = vrot.lane.b32.xlu0 %v722, 24
        %v756 = vpop.permute.xlu0 %755
        %757 = vrot.lane.b32.xlu0 %v730, 24
        %v758 = vpop.permute.xlu0 %757
        %759 = vrot.lane.b32.xlu0 %v738, 24
        %v760 = vpop.permute.xlu0 %759
        %761 = vrot.lane.b32.xlu0 %v746, 24
        %v762 = vpop.permute.xlu0 %761
        %v771 = vunpack.c.l.b16 %v372
        %v772 = vunpack.c.l.b16 %v376
        %v773 = vunpack.c.l.b16 %v380
        %v774 = vunpack.c.l.b16 %v384
        %v775 = vunpack.c.l.b16 %v388
        %v776 = vunpack.c.l.b16 %v392
        %v777 = vunpack.c.l.b16 %v396
        %v778 = vunpack.c.l.b16 %v400
        %v779 = vpack.c.b16 %v771, %v771
        %v780 = vpack.c.b16 %v772, %v772
        %v781 = vpack.c.b16 %v773, %v773
        %v782 = vpack.c.b16 %v774, %v774
        %v783 = vpack.c.b16 %v775, %v775
        %v784 = vpack.c.b16 %v776, %v776
        %v785 = vpack.c.b16 %v777, %v777
        %v786 = vpack.c.b16 %v778, %v778
        %vm787 = vcmask 1041408
        %v788 = vrot.slane %v675, 6
        %v789 = vrot.slane %v779, 6
        %v790 = vsel %vm787, %v788, %v789
        %v791 = vrot.slane %v676, 6
        %v792 = vrot.slane %v780, 6
        %v793 = vsel %vm787, %v791, %v792
        %v794 = vrot.slane %v677, 6
        %v795 = vrot.slane %v781, 6
        %v796 = vsel %vm787, %v794, %v795
        %v797 = vrot.slane %v678, 6
        %v798 = vrot.slane %v782, 6
        %v799 = vsel %vm787, %v797, %v798
        %v800 = vrot.slane %v679, 6
        %v801 = vrot.slane %v783, 6
        %v802 = vsel %vm787, %v800, %v801
        %v803 = vrot.slane %v680, 6
        %v804 = vrot.slane %v784, 6
        %v805 = vsel %vm787, %v803, %v804
        %v806 = vrot.slane %v681, 6
        %v807 = vrot.slane %v785, 6
        %v808 = vsel %vm787, %v806, %v807
        %v809 = vrot.slane %v682, 6
        %v810 = vrot.slane %v786, 6
        %v811 = vsel %vm787, %v809, %v810
        %812 = vrot.lane.b32.xlu0 %v788, 32
        %v813 = vpop.permute.xlu0 %812
        %814 = vrot.lane.b32.xlu0 %v790, 32
        %v815 = vpop.permute.xlu0 %814
        %816 = vrot.lane.b32.xlu0 %v791, 32
        %v817 = vpop.permute.xlu0 %816
        %818 = vrot.lane.b32.xlu0 %v793, 32
        %v819 = vpop.permute.xlu0 %818
        %820 = vrot.lane.b32.xlu0 %v794, 32
        %v821 = vpop.permute.xlu0 %820
        %822 = vrot.lane.b32.xlu0 %v796, 32
        %v823 = vpop.permute.xlu0 %822
        %824 = vrot.lane.b32.xlu0 %v797, 32
        %v825 = vpop.permute.xlu0 %824
        %826 = vrot.lane.b32.xlu0 %v799, 32
        %v827 = vpop.permute.xlu0 %826
        %828 = vrot.lane.b32.xlu0 %v800, 32
        %v829 = vpop.permute.xlu0 %828
        %830 = vrot.lane.b32.xlu0 %v802, 32
        %v831 = vpop.permute.xlu0 %830
        %832 = vrot.lane.b32.xlu0 %v803, 32
        %v833 = vpop.permute.xlu0 %832
        %834 = vrot.lane.b32.xlu0 %v805, 32
        %v835 = vpop.permute.xlu0 %834
        %836 = vrot.lane.b32.xlu0 %v806, 32
        %v837 = vpop.permute.xlu0 %836
        %838 = vrot.lane.b32.xlu0 %v808, 32
        %v839 = vpop.permute.xlu0 %838
        %840 = vrot.lane.b32.xlu0 %v809, 32
        %v841 = vpop.permute.xlu0 %840
        %842 = vrot.lane.b32.xlu0 %v811, 32
        %v843 = vpop.permute.xlu0 %842
        %vm844 = vsmask.f32 1280
        %v845 = vrot.slane %v684, 6
        %v846 = vrot.slane %v687, 7
        %v847 = vor.u32 %v845, %v846
        %v849 = vshrl.u32 %v779, 16
        %v851 = vrot.slane %v849, 6
        %v852 = vshll.u32 %v779, 16
        %v854 = vrot.slane %v852, 7
        %v855 = vor.u32 %v851, %v854
        %v856 = vsel %vm844, %v847, %v855
        %v857 = vrot.slane %v692, 6
        %v858 = vrot.slane %v695, 7
        %v859 = vor.u32 %v857, %v858
        %v861 = vshrl.u32 %v780, 16
        %v863 = vrot.slane %v861, 6
        %v864 = vshll.u32 %v780, 16
        %v866 = vrot.slane %v864, 7
        %v867 = vor.u32 %v863, %v866
        %v868 = vsel %vm844, %v859, %v867
        %v869 = vrot.slane %v700, 6
        %v870 = vrot.slane %v703, 7
        %v871 = vor.u32 %v869, %v870
        %v873 = vshrl.u32 %v781, 16
        %v875 = vrot.slane %v873, 6
        %v876 = vshll.u32 %v781, 16
        %v878 = vrot.slane %v876, 7
        %v879 = vor.u32 %v875, %v878
        %v880 = vsel %vm844, %v871, %v879
        %v881 = vrot.slane %v708, 6
        %v882 = vrot.slane %v711, 7
        %v883 = vor.u32 %v881, %v882
        %v885 = vshrl.u32 %v782, 16
        %v887 = vrot.slane %v885, 6
        %v888 = vshll.u32 %v782, 16
        %v890 = vrot.slane %v888, 7
        %v891 = vor.u32 %v887, %v890
        %v892 = vsel %vm844, %v883, %v891
        %v893 = vrot.slane %v716, 6
        %v894 = vrot.slane %v719, 7
        %v895 = vor.u32 %v893, %v894
        %v897 = vshrl.u32 %v783, 16
        %v899 = vrot.slane %v897, 6
        %v900 = vshll.u32 %v783, 16
        %v902 = vrot.slane %v900, 7
        %v903 = vor.u32 %v899, %v902
        %v904 = vsel %vm844, %v895, %v903
        %v905 = vrot.slane %v724, 6
        %v906 = vrot.slane %v727, 7
        %v907 = vor.u32 %v905, %v906
        %v909 = vshrl.u32 %v784, 16
        %v911 = vrot.slane %v909, 6
        %v912 = vshll.u32 %v784, 16
        %v914 = vrot.slane %v912, 7
        %v915 = vor.u32 %v911, %v914
        %v916 = vsel %vm844, %v907, %v915
        %v917 = vrot.slane %v732, 6
        %v918 = vrot.slane %v735, 7
        %v919 = vor.u32 %v917, %v918
        %v921 = vshrl.u32 %v785, 16
        %v923 = vrot.slane %v921, 6
        %v924 = vshll.u32 %v785, 16
        %v926 = vrot.slane %v924, 7
        %v927 = vor.u32 %v923, %v926
        %v928 = vsel %vm844, %v919, %v927
        %v929 = vrot.slane %v740, 6
        %v930 = vrot.slane %v743, 7
        %v931 = vor.u32 %v929, %v930
        %v933 = vshrl.u32 %v786, 16
        %v935 = vrot.slane %v933, 6
        %v936 = vshll.u32 %v786, 16
        %v938 = vrot.slane %v936, 7
        %v939 = vor.u32 %v935, %v938
        %v940 = vsel %vm844, %v931, %v939
        %941 = vrot.lane.b32.xlu0 %v847, 40
        %v942 = vpop.permute.xlu0 %941
        %943 = vrot.lane.b32.xlu0 %v856, 40
        %v944 = vpop.permute.xlu0 %943
        %945 = vrot.lane.b32.xlu0 %v859, 40
        %v946 = vpop.permute.xlu0 %945
        %947 = vrot.lane.b32.xlu0 %v868, 40
        %v948 = vpop.permute.xlu0 %947
        %949 = vrot.lane.b32.xlu0 %v871, 40
        %v950 = vpop.permute.xlu0 %949
        %951 = vrot.lane.b32.xlu0 %v880, 40
        %v952 = vpop.permute.xlu0 %951
        %953 = vrot.lane.b32.xlu0 %v883, 40
        %v954 = vpop.permute.xlu0 %953
        %955 = vrot.lane.b32.xlu0 %v892, 40
        %v956 = vpop.permute.xlu0 %955
        %957 = vrot.lane.b32.xlu0 %v895, 40
        %v958 = vpop.permute.xlu0 %957
        %959 = vrot.lane.b32.xlu0 %v904, 40
        %v960 = vpop.permute.xlu0 %959
        %961 = vrot.lane.b32.xlu0 %v907, 40
        %v962 = vpop.permute.xlu0 %961
        %963 = vrot.lane.b32.xlu0 %v916, 40
        %v964 = vpop.permute.xlu0 %963
        %965 = vrot.lane.b32.xlu0 %v919, 40
        %v966 = vpop.permute.xlu0 %965
        %967 = vrot.lane.b32.xlu0 %v928, 40
        %v968 = vpop.permute.xlu0 %967
        %969 = vrot.lane.b32.xlu0 %v931, 40
        %v970 = vpop.permute.xlu0 %969
        %971 = vrot.lane.b32.xlu0 %v940, 40
        %v972 = vpop.permute.xlu0 %971
        %vm973 = vcmask 64512
        %v975 = vsel %vm973, %v449, %v587
        %v977 = vsel %vm973, %v450, %v589
        %v979 = vsel %vm973, %v451, %v591
        %v981 = vsel %vm973, %v452, %v593
        %v983 = vsel %vm973, %v453, %v595
        %v985 = vsel %vm973, %v454, %v597
        %v987 = vsel %vm973, %v455, %v599
        %v989 = vsel %vm973, %v456, %v601
        %v991 = vsel %vm973, %v457, %v603
        %v993 = vsel %vm973, %v458, %v605
        %v995 = vsel %vm973, %v459, %v607
        %v997 = vsel %vm973, %v460, %v609
        %v999 = vsel %vm973, %v461, %v611
        %v1001 = vsel %vm973, %v462, %v613
        %v1003 = vsel %vm973, %v463, %v615
        %v1005 = vsel %vm973, %v464, %v617
        %vm1006 = vcmask 130048
        %v1008 = vsel %vm1006, %v975, %v644
        %v1010 = vsel %vm1006, %v977, %v646
        %v1012 = vsel %vm1006, %v979, %v648
        %v1014 = vsel %vm1006, %v981, %v650
        %v1016 = vsel %vm1006, %v983, %v652
        %v1018 = vsel %vm1006, %v985, %v654
        %v1020 = vsel %vm1006, %v987, %v656
        %v1022 = vsel %vm1006, %v989, %v658
        %v1024 = vsel %vm1006, %v991, %v660
        %v1026 = vsel %vm1006, %v993, %v662
        %v1028 = vsel %vm1006, %v995, %v664
        %v1030 = vsel %vm1006, %v997, %v666
        %v1032 = vsel %vm1006, %v999, %v668
        %v1034 = vsel %vm1006, %v1001, %v670
        %v1036 = vsel %vm1006, %v1003, %v672
        %v1038 = vsel %vm1006, %v1005, %v674
        %vm1039 = vcmask 195584
        %v1041 = vsel %vm1039, %v1008, %v748
        %v1042 = vsel %vm1039, %v1010, %v748
        %v1044 = vsel %vm1039, %v1012, %v750
        %v1045 = vsel %vm1039, %v1014, %v750
        %v1047 = vsel %vm1039, %v1016, %v752
        %v1048 = vsel %vm1039, %v1018, %v752
        %v1050 = vsel %vm1039, %v1020, %v754
        %v1051 = vsel %vm1039, %v1022, %v754
        %v1053 = vsel %vm1039, %v1024, %v756
        %v1054 = vsel %vm1039, %v1026, %v756
        %v1056 = vsel %vm1039, %v1028, %v758
        %v1057 = vsel %vm1039, %v1030, %v758
        %v1059 = vsel %vm1039, %v1032, %v760
        %v1060 = vsel %vm1039, %v1034, %v760
        %v1062 = vsel %vm1039, %v1036, %v762
        %v1063 = vsel %vm1039, %v1038, %v762
        %vm1064 = vcmask 261120
        %v1066 = vsel %vm1064, %v1041, %v813
        %v1068 = vsel %vm1064, %v1042, %v815
        %v1070 = vsel %vm1064, %v1044, %v817
        %v1072 = vsel %vm1064, %v1045, %v819
        %v1074 = vsel %vm1064, %v1047, %v821
        %v1076 = vsel %vm1064, %v1048, %v823
        %v1078 = vsel %vm1064, %v1050, %v825
        %v1080 = vsel %vm1064, %v1051, %v827
        %v1082 = vsel %vm1064, %v1053, %v829
        %v1084 = vsel %vm1064, %v1054, %v831
        %v1086 = vsel %vm1064, %v1056, %v833
        %v1088 = vsel %vm1064, %v1057, %v835
        %v1090 = vsel %vm1064, %v1059, %v837
        %v1092 = vsel %vm1064, %v1060, %v839
        %v1094 = vsel %vm1064, %v1062, %v841
        %v1096 = vsel %vm1064, %v1063, %v843
        %vm1097 = vcmask 326656
        %v1099 = vsel %vm1097, %v1066, %v942
        %v1101 = vsel %vm1097, %v1068, %v944
        %v1103 = vsel %vm1097, %v1070, %v946
        %v1105 = vsel %vm1097, %v1072, %v948
        %v1107 = vsel %vm1097, %v1074, %v950
        %v1109 = vsel %vm1097, %v1076, %v952
        %v1111 = vsel %vm1097, %v1078, %v954
        %v1113 = vsel %vm1097, %v1080, %v956
        %v1115 = vsel %vm1097, %v1082, %v958
        %v1117 = vsel %vm1097, %v1084, %v960
        %v1119 = vsel %vm1097, %v1086, %v962
        %v1121 = vsel %vm1097, %v1088, %v964
        %v1123 = vsel %vm1097, %v1090, %v966
        %v1125 = vsel %vm1097, %v1092, %v968
        %v1127 = vsel %vm1097, %v1094, %v970
        %v1129 = vsel %vm1097, %v1096, %v972
        %s1130 = sadd.s32 %s365, 1
        %s1131 = smul.u32 %s1130, 4
        %s1132 = smul.addr %s1131, 4
        %s1133 = scalar_lea.vmem [#allocation2], %s1132
        %v1134 = vld [vmem:[%s1133] sm:$0xf]
        %v1135 = vld [vmem:[%s1133 + $0x4] sm:$0xf]
        %v1136 = vld [vmem:[%s1133 + $0x8] sm:$0xf]
        %v1137 = vld [vmem:[%s1133 + $0xc] sm:$0x1]
        %v1138 = vld [vmem:[%s1133 + $0x10] sm:$0xf]
        %v1139 = vld [vmem:[%s1133 + $0x14] sm:$0xf]
        %v1140 = vld [vmem:[%s1133 + $0x18] sm:$0xf]
        %v1141 = vld [vmem:[%s1133 + $0x1c] sm:$0x1]
        %v1142 = vld [vmem:[%s1133 + $0x20] sm:$0xf]
        %v1143 = vld [vmem:[%s1133 + $0x24] sm:$0xf]
        %v1144 = vld [vmem:[%s1133 + $0x28] sm:$0xf]
        %v1145 = vld [vmem:[%s1133 + $0x2c] sm:$0x1]
        %v1146 = vld [vmem:[%s1133 + $0x30] sm:$0xf]
        %v1147 = vld [vmem:[%s1133 + $0x34] sm:$0xf]
        %v1148 = vld [vmem:[%s1133 + $0x38] sm:$0xf]
        %v1149 = vld [vmem:[%s1133 + $0x3c] sm:$0x1]
        %v1150 = vld [vmem:[%s1133 + $0x40] sm:$0xf]
        %v1151 = vld [vmem:[%s1133 + $0x44] sm:$0xf]
        %v1152 = vld [vmem:[%s1133 + $0x48] sm:$0xf]
        %v1153 = vld [vmem:[%s1133 + $0x4c] sm:$0x1]
        %v1154 = vld [vmem:[%s1133 + $0x50] sm:$0xf]
        %v1155 = vld [vmem:[%s1133 + $0x54] sm:$0xf]
        %v1156 = vld [vmem:[%s1133 + $0x58] sm:$0xf]
        %v1157 = vld [vmem:[%s1133 + $0x5c] sm:$0x1]
        %v1158 = vld [vmem:[%s1133 + $0x60] sm:$0xf]
        %v1159 = vld [vmem:[%s1133 + $0x64] sm:$0xf]
        %v1160 = vld [vmem:[%s1133 + $0x68] sm:$0xf]
        %v1161 = vld [vmem:[%s1133 + $0x6c] sm:$0x1]
        %v1162 = vld [vmem:[%s1133 + $0x70] sm:$0xf]
        %v1163 = vld [vmem:[%s1133 + $0x74] sm:$0xf]
        %v1164 = vld [vmem:[%s1133 + $0x78] sm:$0xf]
        %v1165 = vld [vmem:[%s1133 + $0x7c] sm:$0x1]
        %v1190 = vunpack.c.l.b16 %v1134
        %v1191 = vunpack.c.l.b16 %v1135
        %v1192 = vunpack.c.l.b16 %v1136
        %v1193 = vunpack.c.l.b16 %v1138
        %v1194 = vunpack.c.l.b16 %v1139
        %v1195 = vunpack.c.l.b16 %v1140
        %v1196 = vunpack.c.l.b16 %v1142
        %v1197 = vunpack.c.l.b16 %v1143
        %v1198 = vunpack.c.l.b16 %v1144
        %v1199 = vunpack.c.l.b16 %v1146
        %v1200 = vunpack.c.l.b16 %v1147
        %v1201 = vunpack.c.l.b16 %v1148
        %v1202 = vunpack.c.l.b16 %v1150
        %v1203 = vunpack.c.l.b16 %v1151
        %v1204 = vunpack.c.l.b16 %v1152
        %v1205 = vunpack.c.l.b16 %v1154
        %v1206 = vunpack.c.l.b16 %v1155
        %v1207 = vunpack.c.l.b16 %v1156
        %v1208 = vunpack.c.l.b16 %v1158
        %v1209 = vunpack.c.l.b16 %v1159
        %v1210 = vunpack.c.l.b16 %v1160
        %v1211 = vunpack.c.l.b16 %v1162
        %v1212 = vunpack.c.l.b16 %v1163
        %v1213 = vunpack.c.l.b16 %v1164
        %v1214 = vpack.c.b16 %v1191, %v1190
        %v1215 = vpack.c.b16 %v1192, %v1192
        %v1216 = vpack.c.b16 %v1194, %v1193
        %v1217 = vpack.c.b16 %v1195, %v1195
        %v1218 = vpack.c.b16 %v1197, %v1196
        %v1219 = vpack.c.b16 %v1198, %v1198
        %v1220 = vpack.c.b16 %v1200, %v1199
        %v1221 = vpack.c.b16 %v1201, %v1201
        %v1222 = vpack.c.b16 %v1203, %v1202
        %v1223 = vpack.c.b16 %v1204, %v1204
        %v1224 = vpack.c.b16 %v1206, %v1205
        %v1225 = vpack.c.b16 %v1207, %v1207
        %v1226 = vpack.c.b16 %v1209, %v1208
        %v1227 = vpack.c.b16 %v1210, %v1210
        %v1228 = vpack.c.b16 %v1212, %v1211
        %v1229 = vpack.c.b16 %v1213, %v1213
        %v1231 = vshrl.u32 %v1214, 16
        %v1233 = vshll.u32 %v1214, 16
        %v1235 = vrot.slane %v1233, 1
        %v1236 = vor.u32 %v1231, %v1235
        %v1238 = vshll.u32 %v1215, 16
        %v1240 = vrot.slane %v1238, 1
        %v1241 = vsel %vm465, %v1236, %v1240
        %v1242 = vshrl.u32 %v1215, 16
        %v1244 = vor.u32 %v1242, %v1240
        %v1246 = vshrl.u32 %v1216, 16
        %v1248 = vshll.u32 %v1216, 16
        %v1250 = vrot.slane %v1248, 1
        %v1251 = vor.u32 %v1246, %v1250
        %v1253 = vshll.u32 %v1217, 16
        %v1255 = vrot.slane %v1253, 1
        %v1256 = vsel %vm465, %v1251, %v1255
        %v1257 = vshrl.u32 %v1217, 16
        %v1259 = vor.u32 %v1257, %v1255
        %v1261 = vshrl.u32 %v1218, 16
        %v1263 = vshll.u32 %v1218, 16
        %v1265 = vrot.slane %v1263, 1
        %v1266 = vor.u32 %v1261, %v1265
        %v1268 = vshll.u32 %v1219, 16
        %v1270 = vrot.slane %v1268, 1
        %v1271 = vsel %vm465, %v1266, %v1270
        %v1272 = vshrl.u32 %v1219, 16
        %v1274 = vor.u32 %v1272, %v1270
        %v1276 = vshrl.u32 %v1220, 16
        %v1278 = vshll.u32 %v1220, 16
        %v1280 = vrot.slane %v1278, 1
        %v1281 = vor.u32 %v1276, %v1280
        %v1283 = vshll.u32 %v1221, 16
        %v1285 = vrot.slane %v1283, 1
        %v1286 = vsel %vm465, %v1281, %v1285
        %v1287 = vshrl.u32 %v1221, 16
        %v1289 = vor.u32 %v1287, %v1285
        %v1291 = vshrl.u32 %v1222, 16
        %v1293 = vshll.u32 %v1222, 16
        %v1295 = vrot.slane %v1293, 1
        %v1296 = vor.u32 %v1291, %v1295
        %v1298 = vshll.u32 %v1223, 16
        %v1300 = vrot.slane %v1298, 1
        %v1301 = vsel %vm465, %v1296, %v1300
        %v1302 = vshrl.u32 %v1223, 16
        %v1304 = vor.u32 %v1302, %v1300
        %v1306 = vshrl.u32 %v1224, 16
        %v1308 = vshll.u32 %v1224, 16
        %v1310 = vrot.slane %v1308, 1
        %v1311 = vor.u32 %v1306, %v1310
        %v1313 = vshll.u32 %v1225, 16
        %v1315 = vrot.slane %v1313, 1
        %v1316 = vsel %vm465, %v1311, %v1315
        %v1317 = vshrl.u32 %v1225, 16
        %v1319 = vor.u32 %v1317, %v1315
        %v1321 = vshrl.u32 %v1226, 16
        %v1323 = vshll.u32 %v1226, 16
        %v1325 = vrot.slane %v1323, 1
        %v1326 = vor.u32 %v1321, %v1325
        %v1328 = vshll.u32 %v1227, 16
        %v1330 = vrot.slane %v1328, 1
        %v1331 = vsel %vm465, %v1326, %v1330
        %v1332 = vshrl.u32 %v1227, 16
        %v1334 = vor.u32 %v1332, %v1330
        %v1336 = vshrl.u32 %v1228, 16
        %v1338 = vshll.u32 %v1228, 16
        %v1340 = vrot.slane %v1338, 1
        %v1341 = vor.u32 %v1336, %v1340
        %v1343 = vshll.u32 %v1229, 16
        %v1345 = vrot.slane %v1343, 1
        %v1346 = vsel %vm465, %v1341, %v1345
        %v1347 = vshrl.u32 %v1229, 16
        %v1349 = vor.u32 %v1347, %v1345
        %1350 = vrot.lane.b32.xlu0 %v1241, 8
        %v1351 = vpop.permute.xlu0 %1350
        %1352 = vrot.lane.b32.xlu0 %v1244, 8
        %v1353 = vpop.permute.xlu0 %1352
        %1354 = vrot.lane.b32.xlu0 %v1256, 8
        %v1355 = vpop.permute.xlu0 %1354
        %1356 = vrot.lane.b32.xlu0 %v1259, 8
        %v1357 = vpop.permute.xlu0 %1356
        %1358 = vrot.lane.b32.xlu0 %v1271, 8
        %v1359 = vpop.permute.xlu0 %1358
        %1360 = vrot.lane.b32.xlu0 %v1274, 8
        %v1361 = vpop.permute.xlu0 %1360
        %1362 = vrot.lane.b32.xlu0 %v1286, 8
        %v1363 = vpop.permute.xlu0 %1362
        %1364 = vrot.lane.b32.xlu0 %v1289, 8
        %v1365 = vpop.permute.xlu0 %1364
        %1366 = vrot.lane.b32.xlu0 %v1301, 8
        %v1367 = vpop.permute.xlu0 %1366
        %1368 = vrot.lane.b32.xlu0 %v1304, 8
        %v1369 = vpop.permute.xlu0 %1368
        %1370 = vrot.lane.b32.xlu0 %v1316, 8
        %v1371 = vpop.permute.xlu0 %1370
        %1372 = vrot.lane.b32.xlu0 %v1319, 8
        %v1373 = vpop.permute.xlu0 %1372
        %1374 = vrot.lane.b32.xlu0 %v1331, 8
        %v1375 = vpop.permute.xlu0 %1374
        %1376 = vrot.lane.b32.xlu0 %v1334, 8
        %v1377 = vpop.permute.xlu0 %1376
        %1378 = vrot.lane.b32.xlu0 %v1346, 8
        %v1379 = vpop.permute.xlu0 %1378
        %1380 = vrot.lane.b32.xlu0 %v1349, 8
        %v1381 = vpop.permute.xlu0 %1380
        %v1382 = vrot.slane %v1214, 1
        %v1383 = vrot.slane %v1215, 1
        %v1384 = vsel %vm618, %v1382, %v1383
        %v1385 = vrot.slane %v1216, 1
        %v1386 = vrot.slane %v1217, 1
        %v1387 = vsel %vm618, %v1385, %v1386
        %v1388 = vrot.slane %v1218, 1
        %v1389 = vrot.slane %v1219, 1
        %v1390 = vsel %vm618, %v1388, %v1389
        %v1391 = vrot.slane %v1220, 1
        %v1392 = vrot.slane %v1221, 1
        %v1393 = vsel %vm618, %v1391, %v1392
        %v1394 = vrot.slane %v1222, 1
        %v1395 = vrot.slane %v1223, 1
        %v1396 = vsel %vm618, %v1394, %v1395
        %v1397 = vrot.slane %v1224, 1
        %v1398 = vrot.slane %v1225, 1
        %v1399 = vsel %vm618, %v1397, %v1398
        %v1400 = vrot.slane %v1226, 1
        %v1401 = vrot.slane %v1227, 1
        %v1402 = vsel %vm618, %v1400, %v1401
        %v1403 = vrot.slane %v1228, 1
        %v1404 = vrot.slane %v1229, 1
        %v1405 = vsel %vm618, %v1403, %v1404
        %1406 = vrot.lane.b32.xlu0 %v1384, 16
        %v1407 = vpop.permute.xlu0 %1406
        %1408 = vrot.lane.b32.xlu0 %v1383, 16
        %v1409 = vpop.permute.xlu0 %1408
        %1410 = vrot.lane.b32.xlu0 %v1387, 16
        %v1411 = vpop.permute.xlu0 %1410
        %1412 = vrot.lane.b32.xlu0 %v1386, 16
        %v1413 = vpop.permute.xlu0 %1412
        %1414 = vrot.lane.b32.xlu0 %v1390, 16
        %v1415 = vpop.permute.xlu0 %1414
        %1416 = vrot.lane.b32.xlu0 %v1389, 16
        %v1417 = vpop.permute.xlu0 %1416
        %1418 = vrot.lane.b32.xlu0 %v1393, 16
        %v1419 = vpop.permute.xlu0 %1418
        %1420 = vrot.lane.b32.xlu0 %v1392, 16
        %v1421 = vpop.permute.xlu0 %1420
        %1422 = vrot.lane.b32.xlu0 %v1396, 16
        %v1423 = vpop.permute.xlu0 %1422
        %1424 = vrot.lane.b32.xlu0 %v1395, 16
        %v1425 = vpop.permute.xlu0 %1424
        %1426 = vrot.lane.b32.xlu0 %v1399, 16
        %v1427 = vpop.permute.xlu0 %1426
        %1428 = vrot.lane.b32.xlu0 %v1398, 16
        %v1429 = vpop.permute.xlu0 %1428
        %1430 = vrot.lane.b32.xlu0 %v1402, 16
        %v1431 = vpop.permute.xlu0 %1430
        %1432 = vrot.lane.b32.xlu0 %v1401, 16
        %v1433 = vpop.permute.xlu0 %1432
        %1434 = vrot.lane.b32.xlu0 %v1405, 16
        %v1435 = vpop.permute.xlu0 %1434
        %1436 = vrot.lane.b32.xlu0 %v1404, 16
        %v1437 = vpop.permute.xlu0 %1436
        %v1438 = vpack.c.b16 %v1192, %v1191
        %v1439 = vpack.c.b16 %v1195, %v1194
        %v1440 = vpack.c.b16 %v1198, %v1197
        %v1441 = vpack.c.b16 %v1201, %v1200
        %v1442 = vpack.c.b16 %v1204, %v1203
        %v1443 = vpack.c.b16 %v1207, %v1206
        %v1444 = vpack.c.b16 %v1210, %v1209
        %v1445 = vpack.c.b16 %v1213, %v1212
        %v1447 = vshrl.u32 %v1438, 16
        %v1449 = vrot.slane %v1447, 5
        %v1450 = vshll.u32 %v1438, 16
        %v1452 = vrot.slane %v1450, 6
        %v1453 = vor.u32 %v1449, %v1452
        %v1455 = vshrl.u32 %v1439, 16
        %v1457 = vrot.slane %v1455, 5
        %v1458 = vshll.u32 %v1439, 16
        %v1460 = vrot.slane %v1458, 6
        %v1461 = vor.u32 %v1457, %v1460
        %v1463 = vshrl.u32 %v1440, 16
        %v1465 = vrot.slane %v1463, 5
        %v1466 = vshll.u32 %v1440, 16
        %v1468 = vrot.slane %v1466, 6
        %v1469 = vor.u32 %v1465, %v1468
        %v1471 = vshrl.u32 %v1441, 16
        %v1473 = vrot.slane %v1471, 5
        %v1474 = vshll.u32 %v1441, 16
        %v1476 = vrot.slane %v1474, 6
        %v1477 = vor.u32 %v1473, %v1476
        %v1479 = vshrl.u32 %v1442, 16
        %v1481 = vrot.slane %v1479, 5
        %v1482 = vshll.u32 %v1442, 16
        %v1484 = vrot.slane %v1482, 6
        %v1485 = vor.u32 %v1481, %v1484
        %v1487 = vshrl.u32 %v1443, 16
        %v1489 = vrot.slane %v1487, 5
        %v1490 = vshll.u32 %v1443, 16
        %v1492 = vrot.slane %v1490, 6
        %v1493 = vor.u32 %v1489, %v1492
        %v1495 = vshrl.u32 %v1444, 16
        %v1497 = vrot.slane %v1495, 5
        %v1498 = vshll.u32 %v1444, 16
        %v1500 = vrot.slane %v1498, 6
        %v1501 = vor.u32 %v1497, %v1500
        %v1503 = vshrl.u32 %v1445, 16
        %v1505 = vrot.slane %v1503, 5
        %v1506 = vshll.u32 %v1445, 16
        %v1508 = vrot.slane %v1506, 6
        %v1509 = vor.u32 %v1505, %v1508
        %1510 = vrot.lane.b32.xlu0 %v1453, 24
        %v1511 = vpop.permute.xlu0 %1510
        %1512 = vrot.lane.b32.xlu0 %v1461, 24
        %v1513 = vpop.permute.xlu0 %1512
        %1514 = vrot.lane.b32.xlu0 %v1469, 24
        %v1515 = vpop.permute.xlu0 %1514
        %1516 = vrot.lane.b32.xlu0 %v1477, 24
        %v1517 = vpop.permute.xlu0 %1516
        %1518 = vrot.lane.b32.xlu0 %v1485, 24
        %v1519 = vpop.permute.xlu0 %1518
        %1520 = vrot.lane.b32.xlu0 %v1493, 24
        %v1521 = vpop.permute.xlu0 %1520
        %1522 = vrot.lane.b32.xlu0 %v1501, 24
        %v1523 = vpop.permute.xlu0 %1522
        %1524 = vrot.lane.b32.xlu0 %v1509, 24
        %v1525 = vpop.permute.xlu0 %1524
        %v1534 = vunpack.c.l.b16 %v1137
        %v1535 = vunpack.c.l.b16 %v1141
        %v1536 = vunpack.c.l.b16 %v1145
        %v1537 = vunpack.c.l.b16 %v1149
        %v1538 = vunpack.c.l.b16 %v1153
        %v1539 = vunpack.c.l.b16 %v1157
        %v1540 = vunpack.c.l.b16 %v1161
        %v1541 = vunpack.c.l.b16 %v1165
        %v1542 = vpack.c.b16 %v1534, %v1534
        %v1543 = vpack.c.b16 %v1535, %v1535
        %v1544 = vpack.c.b16 %v1536, %v1536
        %v1545 = vpack.c.b16 %v1537, %v1537
        %v1546 = vpack.c.b16 %v1538, %v1538
        %v1547 = vpack.c.b16 %v1539, %v1539
        %v1548 = vpack.c.b16 %v1540, %v1540
        %v1549 = vpack.c.b16 %v1541, %v1541
        %v1550 = vrot.slane %v1438, 6
        %v1551 = vrot.slane %v1542, 6
        %v1552 = vsel %vm787, %v1550, %v1551
        %v1553 = vrot.slane %v1439, 6
        %v1554 = vrot.slane %v1543, 6
        %v1555 = vsel %vm787, %v1553, %v1554
        %v1556 = vrot.slane %v1440, 6
        %v1557 = vrot.slane %v1544, 6
        %v1558 = vsel %vm787, %v1556, %v1557
        %v1559 = vrot.slane %v1441, 6
        %v1560 = vrot.slane %v1545, 6
        %v1561 = vsel %vm787, %v1559, %v1560
        %v1562 = vrot.slane %v1442, 6
        %v1563 = vrot.slane %v1546, 6
        %v1564 = vsel %vm787, %v1562, %v1563
        %v1565 = vrot.slane %v1443, 6
        %v1566 = vrot.slane %v1547, 6
        %v1567 = vsel %vm787, %v1565, %v1566
        %v1568 = vrot.slane %v1444, 6
        %v1569 = vrot.slane %v1548, 6
        %v1570 = vsel %vm787, %v1568, %v1569
        %v1571 = vrot.slane %v1445, 6
        %v1572 = vrot.slane %v1549, 6
        %v1573 = vsel %vm787, %v1571, %v1572
        %1574 = vrot.lane.b32.xlu0 %v1550, 32
        %v1575 = vpop.permute.xlu0 %1574
        %1576 = vrot.lane.b32.xlu0 %v1552, 32
        %v1577 = vpop.permute.xlu0 %1576
        %1578 = vrot.lane.b32.xlu0 %v1553, 32
        %v1579 = vpop.permute.xlu0 %1578
        %1580 = vrot.lane.b32.xlu0 %v1555, 32
        %v1581 = vpop.permute.xlu0 %1580
        %1582 = vrot.lane.b32.xlu0 %v1556, 32
        %v1583 = vpop.permute.xlu0 %1582
        %1584 = vrot.lane.b32.xlu0 %v1558, 32
        %v1585 = vpop.permute.xlu0 %1584
        %1586 = vrot.lane.b32.xlu0 %v1559, 32
        %v1587 = vpop.permute.xlu0 %1586
        %1588 = vrot.lane.b32.xlu0 %v1561, 32
        %v1589 = vpop.permute.xlu0 %1588
        %1590 = vrot.lane.b32.xlu0 %v1562, 32
        %v1591 = vpop.permute.xlu0 %1590
        %1592 = vrot.lane.b32.xlu0 %v1564, 32
        %v1593 = vpop.permute.xlu0 %1592
        %1594 = vrot.lane.b32.xlu0 %v1565, 32
        %v1595 = vpop.permute.xlu0 %1594
        %1596 = vrot.lane.b32.xlu0 %v1567, 32
        %v1597 = vpop.permute.xlu0 %1596
        %1598 = vrot.lane.b32.xlu0 %v1568, 32
        %v1599 = vpop.permute.xlu0 %1598
        %1600 = vrot.lane.b32.xlu0 %v1570, 32
        %v1601 = vpop.permute.xlu0 %1600
        %1602 = vrot.lane.b32.xlu0 %v1571, 32
        %v1603 = vpop.permute.xlu0 %1602
        %1604 = vrot.lane.b32.xlu0 %v1573, 32
        %v1605 = vpop.permute.xlu0 %1604
        %v1606 = vrot.slane %v1447, 6
        %v1607 = vrot.slane %v1450, 7
        %v1608 = vor.u32 %v1606, %v1607
        %v1610 = vshrl.u32 %v1542, 16
        %v1612 = vrot.slane %v1610, 6
        %v1613 = vshll.u32 %v1542, 16
        %v1615 = vrot.slane %v1613, 7
        %v1616 = vor.u32 %v1612, %v1615
        %v1617 = vsel %vm844, %v1608, %v1616
        %v1618 = vrot.slane %v1455, 6
        %v1619 = vrot.slane %v1458, 7
        %v1620 = vor.u32 %v1618, %v1619
        %v1622 = vshrl.u32 %v1543, 16
        %v1624 = vrot.slane %v1622, 6
        %v1625 = vshll.u32 %v1543, 16
        %v1627 = vrot.slane %v1625, 7
        %v1628 = vor.u32 %v1624, %v1627
        %v1629 = vsel %vm844, %v1620, %v1628
        %v1630 = vrot.slane %v1463, 6
        %v1631 = vrot.slane %v1466, 7
        %v1632 = vor.u32 %v1630, %v1631
        %v1634 = vshrl.u32 %v1544, 16
        %v1636 = vrot.slane %v1634, 6
        %v1637 = vshll.u32 %v1544, 16
        %v1639 = vrot.slane %v1637, 7
        %v1640 = vor.u32 %v1636, %v1639
        %v1641 = vsel %vm844, %v1632, %v1640
        %v1642 = vrot.slane %v1471, 6
        %v1643 = vrot.slane %v1474, 7
        %v1644 = vor.u32 %v1642, %v1643
        %v1646 = vshrl.u32 %v1545, 16
        %v1648 = vrot.slane %v1646, 6
        %v1649 = vshll.u32 %v1545, 16
        %v1651 = vrot.slane %v1649, 7
        %v1652 = vor.u32 %v1648, %v1651
        %v1653 = vsel %vm844, %v1644, %v1652
        %v1654 = vrot.slane %v1479, 6
        %v1655 = vrot.slane %v1482, 7
        %v1656 = vor.u32 %v1654, %v1655
        %v1658 = vshrl.u32 %v1546, 16
        %v1660 = vrot.slane %v1658, 6
        %v1661 = vshll.u32 %v1546, 16
        %v1663 = vrot.slane %v1661, 7
        %v1664 = vor.u32 %v1660, %v1663
        %v1665 = vsel %vm844, %v1656, %v1664
        %v1666 = vrot.slane %v1487, 6
        %v1667 = vrot.slane %v1490, 7
        %v1668 = vor.u32 %v1666, %v1667
        %v1670 = vshrl.u32 %v1547, 16
        %v1672 = vrot.slane %v1670, 6
        %v1673 = vshll.u32 %v1547, 16
        %v1675 = vrot.slane %v1673, 7
        %v1676 = vor.u32 %v1672, %v1675
        %v1677 = vsel %vm844, %v1668, %v1676
        %v1678 = vrot.slane %v1495, 6
        %v1679 = vrot.slane %v1498, 7
        %v1680 = vor.u32 %v1678, %v1679
        %v1682 = vshrl.u32 %v1548, 16
        %v1684 = vrot.slane %v1682, 6
        %v1685 = vshll.u32 %v1548, 16
        %v1687 = vrot.slane %v1685, 7
        %v1688 = vor.u32 %v1684, %v1687
        %v1689 = vsel %vm844, %v1680, %v1688
        %v1690 = vrot.slane %v1503, 6
        %v1691 = vrot.slane %v1506, 7
        %v1692 = vor.u32 %v1690, %v1691
        %v1694 = vshrl.u32 %v1549, 16
        %v1696 = vrot.slane %v1694, 6
        %v1697 = vshll.u32 %v1549, 16
        %v1699 = vrot.slane %v1697, 7
        %v1700 = vor.u32 %v1696, %v1699
        %v1701 = vsel %vm844, %v1692, %v1700
        %1702 = vrot.lane.b32.xlu0 %v1608, 40
        %v1703 = vpop.permute.xlu0 %1702
        %1704 = vrot.lane.b32.xlu0 %v1617, 40
        %v1705 = vpop.permute.xlu0 %1704
        %1706 = vrot.lane.b32.xlu0 %v1620, 40
        %v1707 = vpop.permute.xlu0 %1706
        %1708 = vrot.lane.b32.xlu0 %v1629, 40
        %v1709 = vpop.permute.xlu0 %1708
        %1710 = vrot.lane.b32.xlu0 %v1632, 40
        %v1711 = vpop.permute.xlu0 %1710
        %1712 = vrot.lane.b32.xlu0 %v1641, 40
        %v1713 = vpop.permute.xlu0 %1712
        %1714 = vrot.lane.b32.xlu0 %v1644, 40
        %v1715 = vpop.permute.xlu0 %1714
        %1716 = vrot.lane.b32.xlu0 %v1653, 40
        %v1717 = vpop.permute.xlu0 %1716
        %1718 = vrot.lane.b32.xlu0 %v1656, 40
        %v1719 = vpop.permute.xlu0 %1718
        %1720 = vrot.lane.b32.xlu0 %v1665, 40
        %v1721 = vpop.permute.xlu0 %1720
        %1722 = vrot.lane.b32.xlu0 %v1668, 40
        %v1723 = vpop.permute.xlu0 %1722
        %1724 = vrot.lane.b32.xlu0 %v1677, 40
        %v1725 = vpop.permute.xlu0 %1724
        %1726 = vrot.lane.b32.xlu0 %v1680, 40
        %v1727 = vpop.permute.xlu0 %1726
        %1728 = vrot.lane.b32.xlu0 %v1689, 40
        %v1729 = vpop.permute.xlu0 %1728
        %1730 = vrot.lane.b32.xlu0 %v1692, 40
        %v1731 = vpop.permute.xlu0 %1730
        %1732 = vrot.lane.b32.xlu0 %v1701, 40
        %v1733 = vpop.permute.xlu0 %1732
        %v1735 = vsel %vm973, %v1214, %v1351
        %v1737 = vsel %vm973, %v1215, %v1353
        %v1739 = vsel %vm973, %v1216, %v1355
        %v1741 = vsel %vm973, %v1217, %v1357
        %v1743 = vsel %vm973, %v1218, %v1359
        %v1745 = vsel %vm973, %v1219, %v1361
        %v1747 = vsel %vm973, %v1220, %v1363
        %v1749 = vsel %vm973, %v1221, %v1365
        %v1751 = vsel %vm973, %v1222, %v1367
        %v1753 = vsel %vm973, %v1223, %v1369
        %v1755 = vsel %vm973, %v1224, %v1371
        %v1757 = vsel %vm973, %v1225, %v1373
        %v1759 = vsel %vm973, %v1226, %v1375
        %v1761 = vsel %vm973, %v1227, %v1377
        %v1763 = vsel %vm973, %v1228, %v1379
        %v1765 = vsel %vm973, %v1229, %v1381
        %v1767 = vsel %vm1006, %v1735, %v1407
        %v1769 = vsel %vm1006, %v1737, %v1409
        %v1771 = vsel %vm1006, %v1739, %v1411
        %v1773 = vsel %vm1006, %v1741, %v1413
        %v1775 = vsel %vm1006, %v1743, %v1415
        %v1777 = vsel %vm1006, %v1745, %v1417
        %v1779 = vsel %vm1006, %v1747, %v1419
        %v1781 = vsel %vm1006, %v1749, %v1421
        %v1783 = vsel %vm1006, %v1751, %v1423
        %v1785 = vsel %vm1006, %v1753, %v1425
        %v1787 = vsel %vm1006, %v1755, %v1427
        %v1789 = vsel %vm1006, %v1757, %v1429
        %v1791 = vsel %vm1006, %v1759, %v1431
        %v1793 = vsel %vm1006, %v1761, %v1433
        %v1795 = vsel %vm1006, %v1763, %v1435
        %v1797 = vsel %vm1006, %v1765, %v1437
        %v1799 = vsel %vm1039, %v1767, %v1511
        %v1800 = vsel %vm1039, %v1769, %v1511
        %v1802 = vsel %vm1039, %v1771, %v1513
        %v1803 = vsel %vm1039, %v1773, %v1513
        %v1805 = vsel %vm1039, %v1775, %v1515
        %v1806 = vsel %vm1039, %v1777, %v1515
        %v1808 = vsel %vm1039, %v1779, %v1517
        %v1809 = vsel %vm1039, %v1781, %v1517
        %v1811 = vsel %vm1039, %v1783, %v1519
        %v1812 = vsel %vm1039, %v1785, %v1519
        %v1814 = vsel %vm1039, %v1787, %v1521
        %v1815 = vsel %vm1039, %v1789, %v1521
        %v1817 = vsel %vm1039, %v1791, %v1523
        %v1818 = vsel %vm1039, %v1793, %v1523
        %v1820 = vsel %vm1039, %v1795, %v1525
        %v1821 = vsel %vm1039, %v1797, %v1525
        %v1823 = vsel %vm1064, %v1799, %v1575
        %v1825 = vsel %vm1064, %v1800, %v1577
        %v1827 = vsel %vm1064, %v1802, %v1579
        %v1829 = vsel %vm1064, %v1803, %v1581
        %v1831 = vsel %vm1064, %v1805, %v1583
        %v1833 = vsel %vm1064, %v1806, %v1585
        %v1835 = vsel %vm1064, %v1808, %v1587
        %v1837 = vsel %vm1064, %v1809, %v1589
        %v1839 = vsel %vm1064, %v1811, %v1591
        %v1841 = vsel %vm1064, %v1812, %v1593
        %v1843 = vsel %vm1064, %v1814, %v1595
        %v1845 = vsel %vm1064, %v1815, %v1597
        %v1847 = vsel %vm1064, %v1817, %v1599
        %v1849 = vsel %vm1064, %v1818, %v1601
        %v1851 = vsel %vm1064, %v1820, %v1603
        %v1853 = vsel %vm1064, %v1821, %v1605
        %v1855 = vsel %vm1097, %v1823, %v1703
        %v1857 = vsel %vm1097, %v1825, %v1705
        %v1859 = vsel %vm1097, %v1827, %v1707
        %v1861 = vsel %vm1097, %v1829, %v1709
        %v1863 = vsel %vm1097, %v1831, %v1711
        %v1865 = vsel %vm1097, %v1833, %v1713
        %v1867 = vsel %vm1097, %v1835, %v1715
        %v1869 = vsel %vm1097, %v1837, %v1717
        %v1871 = vsel %vm1097, %v1839, %v1719
        %v1873 = vsel %vm1097, %v1841, %v1721
        %v1875 = vsel %vm1097, %v1843, %v1723
        %v1877 = vsel %vm1097, %v1845, %v1725
        %v1879 = vsel %vm1097, %v1847, %v1727
        %v1881 = vsel %vm1097, %v1849, %v1729
        %v1883 = vsel %vm1097, %v1851, %v1731
        %v1885 = vsel %vm1097, %v1853, %v1733
        %s1886 = sadd.s32 %s365, 2
        %s1887 = smul.u32 %s1886, 4
        %s1888 = smul.addr %s1887, 4
        %s1889 = scalar_lea.vmem [#allocation2], %s1888
        %v1890 = vld [vmem:[%s1889] sm:$0xf]
        %v1891 = vld [vmem:[%s1889 + $0x4] sm:$0xf]
        %v1892 = vld [vmem:[%s1889 + $0x8] sm:$0xf]
        %v1893 = vld [vmem:[%s1889 + $0xc] sm:$0x1]
        %v1894 = vld [vmem:[%s1889 + $0x10] sm:$0xf]
        %v1895 = vld [vmem:[%s1889 + $0x14] sm:$0xf]
        %v1896 = vld [vmem:[%s1889 + $0x18] sm:$0xf]
        %v1897 = vld [vmem:[%s1889 + $0x1c] sm:$0x1]
        %v1898 = vld [vmem:[%s1889 + $0x20] sm:$0xf]
        %v1899 = vld [vmem:[%s1889 + $0x24] sm:$0xf]
        %v1900 = vld [vmem:[%s1889 + $0x28] sm:$0xf]
        %v1901 = vld [vmem:[%s1889 + $0x2c] sm:$0x1]
        %v1902 = vld [vmem:[%s1889 + $0x30] sm:$0xf]
        %v1903 = vld [vmem:[%s1889 + $0x34] sm:$0xf]
        %v1904 = vld [vmem:[%s1889 + $0x38] sm:$0xf]
        %v1905 = vld [vmem:[%s1889 + $0x3c] sm:$0x1]
        %v1906 = vld [vmem:[%s1889 + $0x40] sm:$0xf]
        %v1907 = vld [vmem:[%s1889 + $0x44] sm:$0xf]
        %v1908 = vld [vmem:[%s1889 + $0x48] sm:$0xf]
        %v1909 = vld [vmem:[%s1889 + $0x4c] sm:$0x1]
        %v1910 = vld [vmem:[%s1889 + $0x50] sm:$0xf]
        %v1911 = vld [vmem:[%s1889 + $0x54] sm:$0xf]
        %v1912 = vld [vmem:[%s1889 + $0x58] sm:$0xf]
        %v1913 = vld [vmem:[%s1889 + $0x5c] sm:$0x1]
        %v1914 = vld [vmem:[%s1889 + $0x60] sm:$0xf]
        %v1915 = vld [vmem:[%s1889 + $0x64] sm:$0xf]
        %v1916 = vld [vmem:[%s1889 + $0x68] sm:$0xf]
        %v1917 = vld [vmem:[%s1889 + $0x6c] sm:$0x1]
        %v1918 = vld [vmem:[%s1889 + $0x70] sm:$0xf]
        %v1919 = vld [vmem:[%s1889 + $0x74] sm:$0xf]
        %v1920 = vld [vmem:[%s1889 + $0x78] sm:$0xf]
        %v1921 = vld [vmem:[%s1889 + $0x7c] sm:$0x1]
        %v1946 = vunpack.c.l.b16 %v1890
        %v1947 = vunpack.c.l.b16 %v1891
        %v1948 = vunpack.c.l.b16 %v1892
        %v1949 = vunpack.c.l.b16 %v1894
        %v1950 = vunpack.c.l.b16 %v1895
        %v1951 = vunpack.c.l.b16 %v1896
        %v1952 = vunpack.c.l.b16 %v1898
        %v1953 = vunpack.c.l.b16 %v1899
        %v1954 = vunpack.c.l.b16 %v1900
        %v1955 = vunpack.c.l.b16 %v1902
        %v1956 = vunpack.c.l.b16 %v1903
        %v1957 = vunpack.c.l.b16 %v1904
        %v1958 = vunpack.c.l.b16 %v1906
        %v1959 = vunpack.c.l.b16 %v1907
        %v1960 = vunpack.c.l.b16 %v1908
        %v1961 = vunpack.c.l.b16 %v1910
        %v1962 = vunpack.c.l.b16 %v1911
        %v1963 = vunpack.c.l.b16 %v1912
        %v1964 = vunpack.c.l.b16 %v1914
        %v1965 = vunpack.c.l.b16 %v1915
        %v1966 = vunpack.c.l.b16 %v1916
        %v1967 = vunpack.c.l.b16 %v1918
        %v1968 = vunpack.c.l.b16 %v1919
        %v1969 = vunpack.c.l.b16 %v1920
        %v1970 = vpack.c.b16 %v1947, %v1946
        %v1971 = vpack.c.b16 %v1948, %v1948
        %v1972 = vpack.c.b16 %v1950, %v1949
        %v1973 = vpack.c.b16 %v1951, %v1951
        %v1974 = vpack.c.b16 %v1953, %v1952
        %v1975 = vpack.c.b16 %v1954, %v1954
        %v1976 = vpack.c.b16 %v1956, %v1955
        %v1977 = vpack.c.b16 %v1957, %v1957
        %v1978 = vpack.c.b16 %v1959, %v1958
        %v1979 = vpack.c.b16 %v1960, %v1960
        %v1980 = vpack.c.b16 %v1962, %v1961
        %v1981 = vpack.c.b16 %v1963, %v1963
        %v1982 = vpack.c.b16 %v1965, %v1964
        %v1983 = vpack.c.b16 %v1966, %v1966
        %v1984 = vpack.c.b16 %v1968, %v1967
        %v1985 = vpack.c.b16 %v1969, %v1969
        %v1987 = vshrl.u32 %v1970, 16
        %v1989 = vshll.u32 %v1970, 16
        %v1991 = vrot.slane %v1989, 1
        %v1992 = vor.u32 %v1987, %v1991
        %v1994 = vshll.u32 %v1971, 16
        %v1996 = vrot.slane %v1994, 1
        %v1997 = vsel %vm465, %v1992, %v1996
        %v1998 = vshrl.u32 %v1971, 16
        %v2000 = vor.u32 %v1998, %v1996
        %v2002 = vshrl.u32 %v1972, 16
        %v2004 = vshll.u32 %v1972, 16
        %v2006 = vrot.slane %v2004, 1
        %v2007 = vor.u32 %v2002, %v2006
        %v2009 = vshll.u32 %v1973, 16
        %v2011 = vrot.slane %v2009, 1
        %v2012 = vsel %vm465, %v2007, %v2011
        %v2013 = vshrl.u32 %v1973, 16
        %v2015 = vor.u32 %v2013, %v2011
        %v2017 = vshrl.u32 %v1974, 16
        %v2019 = vshll.u32 %v1974, 16
        %v2021 = vrot.slane %v2019, 1
        %v2022 = vor.u32 %v2017, %v2021
        %v2024 = vshll.u32 %v1975, 16
        %v2026 = vrot.slane %v2024, 1
        %v2027 = vsel %vm465, %v2022, %v2026
        %v2028 = vshrl.u32 %v1975, 16
        %v2030 = vor.u32 %v2028, %v2026
        %v2032 = vshrl.u32 %v1976, 16
        %v2034 = vshll.u32 %v1976, 16
        %v2036 = vrot.slane %v2034, 1
        %v2037 = vor.u32 %v2032, %v2036
        %v2039 = vshll.u32 %v1977, 16
        %v2041 = vrot.slane %v2039, 1
        %v2042 = vsel %vm465, %v2037, %v2041
        %v2043 = vshrl.u32 %v1977, 16
        %v2045 = vor.u32 %v2043, %v2041
        %v2047 = vshrl.u32 %v1978, 16
        %v2049 = vshll.u32 %v1978, 16
        %v2051 = vrot.slane %v2049, 1
        %v2052 = vor.u32 %v2047, %v2051
        %v2054 = vshll.u32 %v1979, 16
        %v2056 = vrot.slane %v2054, 1
        %v2057 = vsel %vm465, %v2052, %v2056
        %v2058 = vshrl.u32 %v1979, 16
        %v2060 = vor.u32 %v2058, %v2056
        %v2062 = vshrl.u32 %v1980, 16
        %v2064 = vshll.u32 %v1980, 16
        %v2066 = vrot.slane %v2064, 1
        %v2067 = vor.u32 %v2062, %v2066
        %v2069 = vshll.u32 %v1981, 16
        %v2071 = vrot.slane %v2069, 1
        %v2072 = vsel %vm465, %v2067, %v2071
        %v2073 = vshrl.u32 %v1981, 16
        %v2075 = vor.u32 %v2073, %v2071
        %v2077 = vshrl.u32 %v1982, 16
        %v2079 = vshll.u32 %v1982, 16
        %v2081 = vrot.slane %v2079, 1
        %v2082 = vor.u32 %v2077, %v2081
        %v2084 = vshll.u32 %v1983, 16
        %v2086 = vrot.slane %v2084, 1
        %v2087 = vsel %vm465, %v2082, %v2086
        %v2088 = vshrl.u32 %v1983, 16
        %v2090 = vor.u32 %v2088, %v2086
        %v2092 = vshrl.u32 %v1984, 16
        %v2094 = vshll.u32 %v1984, 16
        %v2096 = vrot.slane %v2094, 1
        %v2097 = vor.u32 %v2092, %v2096
        %v2099 = vshll.u32 %v1985, 16
        %v2101 = vrot.slane %v2099, 1
        %v2102 = vsel %vm465, %v2097, %v2101
        %v2103 = vshrl.u32 %v1985, 16
        %v2105 = vor.u32 %v2103, %v2101
        %2106 = vrot.lane.b32.xlu0 %v1997, 8
        %v2107 = vpop.permute.xlu0 %2106
        %2108 = vrot.lane.b32.xlu0 %v2000, 8
        %v2109 = vpop.permute.xlu0 %2108
        %2110 = vrot.lane.b32.xlu0 %v2012, 8
        %v2111 = vpop.permute.xlu0 %2110
        %2112 = vrot.lane.b32.xlu0 %v2015, 8
        %v2113 = vpop.permute.xlu0 %2112
        %2114 = vrot.lane.b32.xlu0 %v2027, 8
        %v2115 = vpop.permute.xlu0 %2114
        %2116 = vrot.lane.b32.xlu0 %v2030, 8
        %v2117 = vpop.permute.xlu0 %2116
        %2118 = vrot.lane.b32.xlu0 %v2042, 8
        %v2119 = vpop.permute.xlu0 %2118
        %2120 = vrot.lane.b32.xlu0 %v2045, 8
        %v2121 = vpop.permute.xlu0 %2120
        %2122 = vrot.lane.b32.xlu0 %v2057, 8
        %v2123 = vpop.permute.xlu0 %2122
        %2124 = vrot.lane.b32.xlu0 %v2060, 8
        %v2125 = vpop.permute.xlu0 %2124
        %2126 = vrot.lane.b32.xlu0 %v2072, 8
        %v2127 = vpop.permute.xlu0 %2126
        %2128 = vrot.lane.b32.xlu0 %v2075, 8
        %v2129 = vpop.permute.xlu0 %2128
        %2130 = vrot.lane.b32.xlu0 %v2087, 8
        %v2131 = vpop.permute.xlu0 %2130
        %2132 = vrot.lane.b32.xlu0 %v2090, 8
        %v2133 = vpop.permute.xlu0 %2132
        %2134 = vrot.lane.b32.xlu0 %v2102, 8
        %v2135 = vpop.permute.xlu0 %2134
        %2136 = vrot.lane.b32.xlu0 %v2105, 8
        %v2137 = vpop.permute.xlu0 %2136
        %v2138 = vrot.slane %v1970, 1
        %v2139 = vrot.slane %v1971, 1
        %v2140 = vsel %vm618, %v2138, %v2139
        %v2141 = vrot.slane %v1972, 1
        %v2142 = vrot.slane %v1973, 1
        %v2143 = vsel %vm618, %v2141, %v2142
        %v2144 = vrot.slane %v1974, 1
        %v2145 = vrot.slane %v1975, 1
        %v2146 = vsel %vm618, %v2144, %v2145
        %v2147 = vrot.slane %v1976, 1
        %v2148 = vrot.slane %v1977, 1
        %v2149 = vsel %vm618, %v2147, %v2148
        %v2150 = vrot.slane %v1978, 1
        %v2151 = vrot.slane %v1979, 1
        %v2152 = vsel %vm618, %v2150, %v2151
        %v2153 = vrot.slane %v1980, 1
        %v2154 = vrot.slane %v1981, 1
        %v2155 = vsel %vm618, %v2153, %v2154
        %v2156 = vrot.slane %v1982, 1
        %v2157 = vrot.slane %v1983, 1
        %v2158 = vsel %vm618, %v2156, %v2157
        %v2159 = vrot.slane %v1984, 1
        %v2160 = vrot.slane %v1985, 1
        %v2161 = vsel %vm618, %v2159, %v2160
        %2162 = vrot.lane.b32.xlu0 %v2140, 16
        %v2163 = vpop.permute.xlu0 %2162
        %2164 = vrot.lane.b32.xlu0 %v2139, 16
        %v2165 = vpop.permute.xlu0 %2164
        %2166 = vrot.lane.b32.xlu0 %v2143, 16
        %v2167 = vpop.permute.xlu0 %2166
        %2168 = vrot.lane.b32.xlu0 %v2142, 16
        %v2169 = vpop.permute.xlu0 %2168
        %2170 = vrot.lane.b32.xlu0 %v2146, 16
        %v2171 = vpop.permute.xlu0 %2170
        %2172 = vrot.lane.b32.xlu0 %v2145, 16
        %v2173 = vpop.permute.xlu0 %2172
        %2174 = vrot.lane.b32.xlu0 %v2149, 16
        %v2175 = vpop.permute.xlu0 %2174
        %2176 = vrot.lane.b32.xlu0 %v2148, 16
        %v2177 = vpop.permute.xlu0 %2176
        %2178 = vrot.lane.b32.xlu0 %v2152, 16
        %v2179 = vpop.permute.xlu0 %2178
        %2180 = vrot.lane.b32.xlu0 %v2151, 16
        %v2181 = vpop.permute.xlu0 %2180
        %2182 = vrot.lane.b32.xlu0 %v2155, 16
        %v2183 = vpop.permute.xlu0 %2182
        %2184 = vrot.lane.b32.xlu0 %v2154, 16
        %v2185 = vpop.permute.xlu0 %2184
        %2186 = vrot.lane.b32.xlu0 %v2158, 16
        %v2187 = vpop.permute.xlu0 %2186
        %2188 = vrot.lane.b32.xlu0 %v2157, 16
        %v2189 = vpop.permute.xlu0 %2188
        %2190 = vrot.lane.b32.xlu0 %v2161, 16
        %v2191 = vpop.permute.xlu0 %2190
        %2192 = vrot.lane.b32.xlu0 %v2160, 16
        %v2193 = vpop.permute.xlu0 %2192
        %v2194 = vpack.c.b16 %v1948, %v1947
        %v2195 = vpack.c.b16 %v1951, %v1950
        %v2196 = vpack.c.b16 %v1954, %v1953
        %v2197 = vpack.c.b16 %v1957, %v1956
        %v2198 = vpack.c.b16 %v1960, %v1959
        %v2199 = vpack.c.b16 %v1963, %v1962
        %v2200 = vpack.c.b16 %v1966, %v1965
        %v2201 = vpack.c.b16 %v1969, %v1968
        %v2203 = vshrl.u32 %v2194, 16
        %v2205 = vrot.slane %v2203, 5
        %v2206 = vshll.u32 %v2194, 16
        %v2208 = vrot.slane %v2206, 6
        %v2209 = vor.u32 %v2205, %v2208
        %v2211 = vshrl.u32 %v2195, 16
        %v2213 = vrot.slane %v2211, 5
        %v2214 = vshll.u32 %v2195, 16
        %v2216 = vrot.slane %v2214, 6
        %v2217 = vor.u32 %v2213, %v2216
        %v2219 = vshrl.u32 %v2196, 16
        %v2221 = vrot.slane %v2219, 5
        %v2222 = vshll.u32 %v2196, 16
        %v2224 = vrot.slane %v2222, 6
        %v2225 = vor.u32 %v2221, %v2224
        %v2227 = vshrl.u32 %v2197, 16
        %v2229 = vrot.slane %v2227, 5
        %v2230 = vshll.u32 %v2197, 16
        %v2232 = vrot.slane %v2230, 6
        %v2233 = vor.u32 %v2229, %v2232
        %v2235 = vshrl.u32 %v2198, 16
        %v2237 = vrot.slane %v2235, 5
        %v2238 = vshll.u32 %v2198, 16
        %v2240 = vrot.slane %v2238, 6
        %v2241 = vor.u32 %v2237, %v2240
        %v2243 = vshrl.u32 %v2199, 16
        %v2245 = vrot.slane %v2243, 5
        %v2246 = vshll.u32 %v2199, 16
        %v2248 = vrot.slane %v2246, 6
        %v2249 = vor.u32 %v2245, %v2248
        %v2251 = vshrl.u32 %v2200, 16
        %v2253 = vrot.slane %v2251, 5
        %v2254 = vshll.u32 %v2200, 16
        %v2256 = vrot.slane %v2254, 6
        %v2257 = vor.u32 %v2253, %v2256
        %v2259 = vshrl.u32 %v2201, 16
        %v2261 = vrot.slane %v2259, 5
        %v2262 = vshll.u32 %v2201, 16
        %v2264 = vrot.slane %v2262, 6
        %v2265 = vor.u32 %v2261, %v2264
        %2266 = vrot.lane.b32.xlu0 %v2209, 24
        %v2267 = vpop.permute.xlu0 %2266
        %2268 = vrot.lane.b32.xlu0 %v2217, 24
        %v2269 = vpop.permute.xlu0 %2268
        %2270 = vrot.lane.b32.xlu0 %v2225, 24
        %v2271 = vpop.permute.xlu0 %2270
        %2272 = vrot.lane.b32.xlu0 %v2233, 24
        %v2273 = vpop.permute.xlu0 %2272
        %2274 = vrot.lane.b32.xlu0 %v2241, 24
        %v2275 = vpop.permute.xlu0 %2274
        %2276 = vrot.lane.b32.xlu0 %v2249, 24
        %v2277 = vpop.permute.xlu0 %2276
        %2278 = vrot.lane.b32.xlu0 %v2257, 24
        %v2279 = vpop.permute.xlu0 %2278
        %2280 = vrot.lane.b32.xlu0 %v2265, 24
        %v2281 = vpop.permute.xlu0 %2280
        %v2290 = vunpack.c.l.b16 %v1893
        %v2291 = vunpack.c.l.b16 %v1897
        %v2292 = vunpack.c.l.b16 %v1901
        %v2293 = vunpack.c.l.b16 %v1905
        %v2294 = vunpack.c.l.b16 %v1909
        %v2295 = vunpack.c.l.b16 %v1913
        %v2296 = vunpack.c.l.b16 %v1917
        %v2297 = vunpack.c.l.b16 %v1921
        %v2298 = vpack.c.b16 %v2290, %v2290
        %v2299 = vpack.c.b16 %v2291, %v2291
        %v2300 = vpack.c.b16 %v2292, %v2292
        %v2301 = vpack.c.b16 %v2293, %v2293
        %v2302 = vpack.c.b16 %v2294, %v2294
        %v2303 = vpack.c.b16 %v2295, %v2295
        %v2304 = vpack.c.b16 %v2296, %v2296
        %v2305 = vpack.c.b16 %v2297, %v2297
        %v2306 = vrot.slane %v2194, 6
        %v2307 = vrot.slane %v2298, 6
        %v2308 = vsel %vm787, %v2306, %v2307
        %v2309 = vrot.slane %v2195, 6
        %v2310 = vrot.slane %v2299, 6
        %v2311 = vsel %vm787, %v2309, %v2310
        %v2312 = vrot.slane %v2196, 6
        %v2313 = vrot.slane %v2300, 6
        %v2314 = vsel %vm787, %v2312, %v2313
        %v2315 = vrot.slane %v2197, 6
        %v2316 = vrot.slane %v2301, 6
        %v2317 = vsel %vm787, %v2315, %v2316
        %v2318 = vrot.slane %v2198, 6
        %v2319 = vrot.slane %v2302, 6
        %v2320 = vsel %vm787, %v2318, %v2319
        %v2321 = vrot.slane %v2199, 6
        %v2322 = vrot.slane %v2303, 6
        %v2323 = vsel %vm787, %v2321, %v2322
        %v2324 = vrot.slane %v2200, 6
        %v2325 = vrot.slane %v2304, 6
        %v2326 = vsel %vm787, %v2324, %v2325
        %v2327 = vrot.slane %v2201, 6
        %v2328 = vrot.slane %v2305, 6
        %v2329 = vsel %vm787, %v2327, %v2328
        %2330 = vrot.lane.b32.xlu0 %v2306, 32
        %v2331 = vpop.permute.xlu0 %2330
        %2332 = vrot.lane.b32.xlu0 %v2308, 32
        %v2333 = vpop.permute.xlu0 %2332
        %2334 = vrot.lane.b32.xlu0 %v2309, 32
        %v2335 = vpop.permute.xlu0 %2334
        %2336 = vrot.lane.b32.xlu0 %v2311, 32
        %v2337 = vpop.permute.xlu0 %2336
        %2338 = vrot.lane.b32.xlu0 %v2312, 32
        %v2339 = vpop.permute.xlu0 %2338
        %2340 = vrot.lane.b32.xlu0 %v2314, 32
        %v2341 = vpop.permute.xlu0 %2340
        %2342 = vrot.lane.b32.xlu0 %v2315, 32
        %v2343 = vpop.permute.xlu0 %2342
        %2344 = vrot.lane.b32.xlu0 %v2317, 32
        %v2345 = vpop.permute.xlu0 %2344
        %2346 = vrot.lane.b32.xlu0 %v2318, 32
        %v2347 = vpop.permute.xlu0 %2346
        %2348 = vrot.lane.b32.xlu0 %v2320, 32
        %v2349 = vpop.permute.xlu0 %2348
        %2350 = vrot.lane.b32.xlu0 %v2321, 32
        %v2351 = vpop.permute.xlu0 %2350
        %2352 = vrot.lane.b32.xlu0 %v2323, 32
        %v2353 = vpop.permute.xlu0 %2352
        %2354 = vrot.lane.b32.xlu0 %v2324, 32
        %v2355 = vpop.permute.xlu0 %2354
        %2356 = vrot.lane.b32.xlu0 %v2326, 32
        %v2357 = vpop.permute.xlu0 %2356
        %2358 = vrot.lane.b32.xlu0 %v2327, 32
        %v2359 = vpop.permute.xlu0 %2358
        %2360 = vrot.lane.b32.xlu0 %v2329, 32
        %v2361 = vpop.permute.xlu0 %2360
        %v2362 = vrot.slane %v2203, 6
        %v2363 = vrot.slane %v2206, 7
        %v2364 = vor.u32 %v2362, %v2363
        %v2366 = vshrl.u32 %v2298, 16
        %v2368 = vrot.slane %v2366, 6
        %v2369 = vshll.u32 %v2298, 16
        %v2371 = vrot.slane %v2369, 7
        %v2372 = vor.u32 %v2368, %v2371
        %v2373 = vsel %vm844, %v2364, %v2372
        %v2374 = vrot.slane %v2211, 6
        %v2375 = vrot.slane %v2214, 7
        %v2376 = vor.u32 %v2374, %v2375
        %v2378 = vshrl.u32 %v2299, 16
        %v2380 = vrot.slane %v2378, 6
        %v2381 = vshll.u32 %v2299, 16
        %v2383 = vrot.slane %v2381, 7
        %v2384 = vor.u32 %v2380, %v2383
        %v2385 = vsel %vm844, %v2376, %v2384
        %v2386 = vrot.slane %v2219, 6
        %v2387 = vrot.slane %v2222, 7
        %v2388 = vor.u32 %v2386, %v2387
        %v2390 = vshrl.u32 %v2300, 16
        %v2392 = vrot.slane %v2390, 6
        %v2393 = vshll.u32 %v2300, 16
        %v2395 = vrot.slane %v2393, 7
        %v2396 = vor.u32 %v2392, %v2395
        %v2397 = vsel %vm844, %v2388, %v2396
        %v2398 = vrot.slane %v2227, 6
        %v2399 = vrot.slane %v2230, 7
        %v2400 = vor.u32 %v2398, %v2399
        %v2402 = vshrl.u32 %v2301, 16
        %v2404 = vrot.slane %v2402, 6
        %v2405 = vshll.u32 %v2301, 16
        %v2407 = vrot.slane %v2405, 7
        %v2408 = vor.u32 %v2404, %v2407
        %v2409 = vsel %vm844, %v2400, %v2408
        %v2410 = vrot.slane %v2235, 6
        %v2411 = vrot.slane %v2238, 7
        %v2412 = vor.u32 %v2410, %v2411
        %v2414 = vshrl.u32 %v2302, 16
        %v2416 = vrot.slane %v2414, 6
        %v2417 = vshll.u32 %v2302, 16
        %v2419 = vrot.slane %v2417, 7
        %v2420 = vor.u32 %v2416, %v2419
        %v2421 = vsel %vm844, %v2412, %v2420
        %v2422 = vrot.slane %v2243, 6
        %v2423 = vrot.slane %v2246, 7
        %v2424 = vor.u32 %v2422, %v2423
        %v2426 = vshrl.u32 %v2303, 16
        %v2428 = vrot.slane %v2426, 6
        %v2429 = vshll.u32 %v2303, 16
        %v2431 = vrot.slane %v2429, 7
        %v2432 = vor.u32 %v2428, %v2431
        %v2433 = vsel %vm844, %v2424, %v2432
        %v2434 = vrot.slane %v2251, 6
        %v2435 = vrot.slane %v2254, 7
        %v2436 = vor.u32 %v2434, %v2435
        %v2438 = vshrl.u32 %v2304, 16
        %v2440 = vrot.slane %v2438, 6
        %v2441 = vshll.u32 %v2304, 16
        %v2443 = vrot.slane %v2441, 7
        %v2444 = vor.u32 %v2440, %v2443
        %v2445 = vsel %vm844, %v2436, %v2444
        %v2446 = vrot.slane %v2259, 6
        %v2447 = vrot.slane %v2262, 7
        %v2448 = vor.u32 %v2446, %v2447
        %v2450 = vshrl.u32 %v2305, 16
        %v2452 = vrot.slane %v2450, 6
        %v2453 = vshll.u32 %v2305, 16
        %v2455 = vrot.slane %v2453, 7
        %v2456 = vor.u32 %v2452, %v2455
        %v2457 = vsel %vm844, %v2448, %v2456
        %2458 = vrot.lane.b32.xlu0 %v2364, 40
        %v2459 = vpop.permute.xlu0 %2458
        %2460 = vrot.lane.b32.xlu0 %v2373, 40
        %v2461 = vpop.permute.xlu0 %2460
        %2462 = vrot.lane.b32.xlu0 %v2376, 40
        %v2463 = vpop.permute.xlu0 %2462
        %2464 = vrot.lane.b32.xlu0 %v2385, 40
        %v2465 = vpop.permute.xlu0 %2464
        %2466 = vrot.lane.b32.xlu0 %v2388, 40
        %v2467 = vpop.permute.xlu0 %2466
        %2468 = vrot.lane.b32.xlu0 %v2397, 40
        %v2469 = vpop.permute.xlu0 %2468
        %2470 = vrot.lane.b32.xlu0 %v2400, 40
        %v2471 = vpop.permute.xlu0 %2470
        %2472 = vrot.lane.b32.xlu0 %v2409, 40
        %v2473 = vpop.permute.xlu0 %2472
        %2474 = vrot.lane.b32.xlu0 %v2412, 40
        %v2475 = vpop.permute.xlu0 %2474
        %2476 = vrot.lane.b32.xlu0 %v2421, 40
        %v2477 = vpop.permute.xlu0 %2476
        %2478 = vrot.lane.b32.xlu0 %v2424, 40
        %v2479 = vpop.permute.xlu0 %2478
        %2480 = vrot.lane.b32.xlu0 %v2433, 40
        %v2481 = vpop.permute.xlu0 %2480
        %2482 = vrot.lane.b32.xlu0 %v2436, 40
        %v2483 = vpop.permute.xlu0 %2482
        %2484 = vrot.lane.b32.xlu0 %v2445, 40
        %v2485 = vpop.permute.xlu0 %2484
        %2486 = vrot.lane.b32.xlu0 %v2448, 40
        %v2487 = vpop.permute.xlu0 %2486
        %2488 = vrot.lane.b32.xlu0 %v2457, 40
        %v2489 = vpop.permute.xlu0 %2488
        %v2491 = vsel %vm973, %v1970, %v2107
        %v2493 = vsel %vm973, %v1971, %v2109
        %v2495 = vsel %vm973, %v1972, %v2111
        %v2497 = vsel %vm973, %v1973, %v2113
        %v2499 = vsel %vm973, %v1974, %v2115
        %v2501 = vsel %vm973, %v1975, %v2117
        %v2503 = vsel %vm973, %v1976, %v2119
        %v2505 = vsel %vm973, %v1977, %v2121
        %v2507 = vsel %vm973, %v1978, %v2123
        %v2509 = vsel %vm973, %v1979, %v2125
        %v2511 = vsel %vm973, %v1980, %v2127
        %v2513 = vsel %vm973, %v1981, %v2129
        %v2515 = vsel %vm973, %v1982, %v2131
        %v2517 = vsel %vm973, %v1983, %v2133
        %v2519 = vsel %vm973, %v1984, %v2135
        %v2521 = vsel %vm973, %v1985, %v2137
        %v2523 = vsel %vm1006, %v2491, %v2163
        %v2525 = vsel %vm1006, %v2493, %v2165
        %v2527 = vsel %vm1006, %v2495, %v2167
        %v2529 = vsel %vm1006, %v2497, %v2169
        %v2531 = vsel %vm1006, %v2499, %v2171
        %v2533 = vsel %vm1006, %v2501, %v2173
        %v2535 = vsel %vm1006, %v2503, %v2175
        %v2537 = vsel %vm1006, %v2505, %v2177
        %v2539 = vsel %vm1006, %v2507, %v2179
        %v2541 = vsel %vm1006, %v2509, %v2181
        %v2543 = vsel %vm1006, %v2511, %v2183
        %v2545 = vsel %vm1006, %v2513, %v2185
        %v2547 = vsel %vm1006, %v2515, %v2187
        %v2549 = vsel %vm1006, %v2517, %v2189
        %v2551 = vsel %vm1006, %v2519, %v2191
        %v2553 = vsel %vm1006, %v2521, %v2193
        %v2555 = vsel %vm1039, %v2523, %v2267
        %v2556 = vsel %vm1039, %v2525, %v2267
        %v2558 = vsel %vm1039, %v2527, %v2269
        %v2559 = vsel %vm1039, %v2529, %v2269
        %v2561 = vsel %vm1039, %v2531, %v2271
        %v2562 = vsel %vm1039, %v2533, %v2271
        %v2564 = vsel %vm1039, %v2535, %v2273
        %v2565 = vsel %vm1039, %v2537, %v2273
        %v2567 = vsel %vm1039, %v2539, %v2275
        %v2568 = vsel %vm1039, %v2541, %v2275
        %v2570 = vsel %vm1039, %v2543, %v2277
        %v2571 = vsel %vm1039, %v2545, %v2277
        %v2573 = vsel %vm1039, %v2547, %v2279
        %v2574 = vsel %vm1039, %v2549, %v2279
        %v2576 = vsel %vm1039, %v2551, %v2281
        %v2577 = vsel %vm1039, %v2553, %v2281
        %v2579 = vsel %vm1064, %v2555, %v2331
        %v2581 = vsel %vm1064, %v2556, %v2333
        %v2583 = vsel %vm1064, %v2558, %v2335
        %v2585 = vsel %vm1064, %v2559, %v2337
        %v2587 = vsel %vm1064, %v2561, %v2339
        %v2589 = vsel %vm1064, %v2562, %v2341
        %v2591 = vsel %vm1064, %v2564, %v2343
        %v2593 = vsel %vm1064, %v2565, %v2345
        %v2595 = vsel %vm1064, %v2567, %v2347
        %v2597 = vsel %vm1064, %v2568, %v2349
        %v2599 = vsel %vm1064, %v2570, %v2351
        %v2601 = vsel %vm1064, %v2571, %v2353
        %v2603 = vsel %vm1064, %v2573, %v2355
        %v2605 = vsel %vm1064, %v2574, %v2357
        %v2607 = vsel %vm1064, %v2576, %v2359
        %v2609 = vsel %vm1064, %v2577, %v2361
        %v2611 = vsel %vm1097, %v2579, %v2459
        %v2613 = vsel %vm1097, %v2581, %v2461
        %v2615 = vsel %vm1097, %v2583, %v2463
        %v2617 = vsel %vm1097, %v2585, %v2465
        %v2619 = vsel %vm1097, %v2587, %v2467
        %v2621 = vsel %vm1097, %v2589, %v2469
        %v2623 = vsel %vm1097, %v2591, %v2471
        %v2625 = vsel %vm1097, %v2593, %v2473
        %v2627 = vsel %vm1097, %v2595, %v2475
        %v2629 = vsel %vm1097, %v2597, %v2477
        %v2631 = vsel %vm1097, %v2599, %v2479
        %v2633 = vsel %vm1097, %v2601, %v2481
        %v2635 = vsel %vm1097, %v2603, %v2483
        %v2637 = vsel %vm1097, %v2605, %v2485
        %v2639 = vsel %vm1097, %v2607, %v2487
        %v2641 = vsel %vm1097, %v2609, %v2489
        %s2642 = sadd.s32 %s365, 3
        %s2643 = smul.u32 %s2642, 4
        %s2644 = smul.addr %s2643, 4
        %s2645 = scalar_lea.vmem [#allocation2], %s2644
        %v2646 = vld [vmem:[%s2645] sm:$0xf]
        %v2647 = vld [vmem:[%s2645 + $0x4] sm:$0xf]
        %v2648 = vld [vmem:[%s2645 + $0x8] sm:$0xf]
        %v2649 = vld [vmem:[%s2645 + $0xc] sm:$0x1]
        %v2650 = vld [vmem:[%s2645 + $0x10] sm:$0xf]
        %v2651 = vld [vmem:[%s2645 + $0x14] sm:$0xf]
        %v2652 = vld [vmem:[%s2645 + $0x18] sm:$0xf]
        %v2653 = vld [vmem:[%s2645 + $0x1c] sm:$0x1]
        %v2654 = vld [vmem:[%s2645 + $0x20] sm:$0xf]
        %v2655 = vld [vmem:[%s2645 + $0x24] sm:$0xf]
        %v2656 = vld [vmem:[%s2645 + $0x28] sm:$0xf]
        %v2657 = vld [vmem:[%s2645 + $0x2c] sm:$0x1]
        %v2658 = vld [vmem:[%s2645 + $0x30] sm:$0xf]
        %v2659 = vld [vmem:[%s2645 + $0x34] sm:$0xf]
        %v2660 = vld [vmem:[%s2645 + $0x38] sm:$0xf]
        %v2661 = vld [vmem:[%s2645 + $0x3c] sm:$0x1]
        %v2662 = vld [vmem:[%s2645 + $0x40] sm:$0xf]
        %v2663 = vld [vmem:[%s2645 + $0x44] sm:$0xf]
        %v2664 = vld [vmem:[%s2645 + $0x48] sm:$0xf]
        %v2665 = vld [vmem:[%s2645 + $0x4c] sm:$0x1]
        %v2666 = vld [vmem:[%s2645 + $0x50] sm:$0xf]
        %v2667 = vld [vmem:[%s2645 + $0x54] sm:$0xf]
        %v2668 = vld [vmem:[%s2645 + $0x58] sm:$0xf]
        %v2669 = vld [vmem:[%s2645 + $0x5c] sm:$0x1]
        %v2670 = vld [vmem:[%s2645 + $0x60] sm:$0xf]
        %v2671 = vld [vmem:[%s2645 + $0x64] sm:$0xf]
        %v2672 = vld [vmem:[%s2645 + $0x68] sm:$0xf]
        %v2673 = vld [vmem:[%s2645 + $0x6c] sm:$0x1]
        %v2674 = vld [vmem:[%s2645 + $0x70] sm:$0xf]
        %v2675 = vld [vmem:[%s2645 + $0x74] sm:$0xf]
        %v2676 = vld [vmem:[%s2645 + $0x78] sm:$0xf]
        %v2677 = vld [vmem:[%s2645 + $0x7c] sm:$0x1]
        %v2702 = vunpack.c.l.b16 %v2646
        %v2703 = vunpack.c.l.b16 %v2647
        %v2704 = vunpack.c.l.b16 %v2648
        %v2705 = vunpack.c.l.b16 %v2650
        %v2706 = vunpack.c.l.b16 %v2651
        %v2707 = vunpack.c.l.b16 %v2652
        %v2708 = vunpack.c.l.b16 %v2654
        %v2709 = vunpack.c.l.b16 %v2655
        %v2710 = vunpack.c.l.b16 %v2656
        %v2711 = vunpack.c.l.b16 %v2658
        %v2712 = vunpack.c.l.b16 %v2659
        %v2713 = vunpack.c.l.b16 %v2660
        %v2714 = vunpack.c.l.b16 %v2662
        %v2715 = vunpack.c.l.b16 %v2663
        %v2716 = vunpack.c.l.b16 %v2664
        %v2717 = vunpack.c.l.b16 %v2666
        %v2718 = vunpack.c.l.b16 %v2667
        %v2719 = vunpack.c.l.b16 %v2668
        %v2720 = vunpack.c.l.b16 %v2670
        %v2721 = vunpack.c.l.b16 %v2671
        %v2722 = vunpack.c.l.b16 %v2672
        %v2723 = vunpack.c.l.b16 %v2674
        %v2724 = vunpack.c.l.b16 %v2675
        %v2725 = vunpack.c.l.b16 %v2676
        %v2726 = vpack.c.b16 %v2703, %v2702
        %v2727 = vpack.c.b16 %v2704, %v2704
        %v2728 = vpack.c.b16 %v2706, %v2705
        %v2729 = vpack.c.b16 %v2707, %v2707
        %v2730 = vpack.c.b16 %v2709, %v2708
        %v2731 = vpack.c.b16 %v2710, %v2710
        %v2732 = vpack.c.b16 %v2712, %v2711
        %v2733 = vpack.c.b16 %v2713, %v2713
        %v2734 = vpack.c.b16 %v2715, %v2714
        %v2735 = vpack.c.b16 %v2716, %v2716
        %v2736 = vpack.c.b16 %v2718, %v2717
        %v2737 = vpack.c.b16 %v2719, %v2719
        %v2738 = vpack.c.b16 %v2721, %v2720
        %v2739 = vpack.c.b16 %v2722, %v2722
        %v2740 = vpack.c.b16 %v2724, %v2723
        %v2741 = vpack.c.b16 %v2725, %v2725
        %v2743 = vshrl.u32 %v2726, 16
        %v2745 = vshll.u32 %v2726, 16
        %v2747 = vrot.slane %v2745, 1
        %v2748 = vor.u32 %v2743, %v2747
        %v2750 = vshll.u32 %v2727, 16
        %v2752 = vrot.slane %v2750, 1
        %v2753 = vsel %vm465, %v2748, %v2752
        %v2754 = vshrl.u32 %v2727, 16
        %v2756 = vor.u32 %v2754, %v2752
        %v2758 = vshrl.u32 %v2728, 16
        %v2760 = vshll.u32 %v2728, 16
        %v2762 = vrot.slane %v2760, 1
        %v2763 = vor.u32 %v2758, %v2762
        %v2765 = vshll.u32 %v2729, 16
        %v2767 = vrot.slane %v2765, 1
        %v2768 = vsel %vm465, %v2763, %v2767
        %v2769 = vshrl.u32 %v2729, 16
        %v2771 = vor.u32 %v2769, %v2767
        %v2773 = vshrl.u32 %v2730, 16
        %v2775 = vshll.u32 %v2730, 16
        %v2777 = vrot.slane %v2775, 1
        %v2778 = vor.u32 %v2773, %v2777
        %v2780 = vshll.u32 %v2731, 16
        %v2782 = vrot.slane %v2780, 1
        %v2783 = vsel %vm465, %v2778, %v2782
        %v2784 = vshrl.u32 %v2731, 16
        %v2786 = vor.u32 %v2784, %v2782
        %v2788 = vshrl.u32 %v2732, 16
        %v2790 = vshll.u32 %v2732, 16
        %v2792 = vrot.slane %v2790, 1
        %v2793 = vor.u32 %v2788, %v2792
        %v2795 = vshll.u32 %v2733, 16
        %v2797 = vrot.slane %v2795, 1
        %v2798 = vsel %vm465, %v2793, %v2797
        %v2799 = vshrl.u32 %v2733, 16
        %v2801 = vor.u32 %v2799, %v2797
        %v2803 = vshrl.u32 %v2734, 16
        %v2805 = vshll.u32 %v2734, 16
        %v2807 = vrot.slane %v2805, 1
        %v2808 = vor.u32 %v2803, %v2807
        %v2810 = vshll.u32 %v2735, 16
        %v2812 = vrot.slane %v2810, 1
        %v2813 = vsel %vm465, %v2808, %v2812
        %v2814 = vshrl.u32 %v2735, 16
        %v2816 = vor.u32 %v2814, %v2812
        %v2818 = vshrl.u32 %v2736, 16
        %v2820 = vshll.u32 %v2736, 16
        %v2822 = vrot.slane %v2820, 1
        %v2823 = vor.u32 %v2818, %v2822
        %v2825 = vshll.u32 %v2737, 16
        %v2827 = vrot.slane %v2825, 1
        %v2828 = vsel %vm465, %v2823, %v2827
        %v2829 = vshrl.u32 %v2737, 16
        %v2831 = vor.u32 %v2829, %v2827
        %v2833 = vshrl.u32 %v2738, 16
        %v2835 = vshll.u32 %v2738, 16
        %v2837 = vrot.slane %v2835, 1
        %v2838 = vor.u32 %v2833, %v2837
        %v2840 = vshll.u32 %v2739, 16
        %v2842 = vrot.slane %v2840, 1
        %v2843 = vsel %vm465, %v2838, %v2842
        %v2844 = vshrl.u32 %v2739, 16
        %v2846 = vor.u32 %v2844, %v2842
        %v2848 = vshrl.u32 %v2740, 16
        %v2850 = vshll.u32 %v2740, 16
        %v2852 = vrot.slane %v2850, 1
        %v2853 = vor.u32 %v2848, %v2852
        %v2855 = vshll.u32 %v2741, 16
        %v2857 = vrot.slane %v2855, 1
        %v2858 = vsel %vm465, %v2853, %v2857
        %v2859 = vshrl.u32 %v2741, 16
        %v2861 = vor.u32 %v2859, %v2857
        %2862 = vrot.lane.b32.xlu0 %v2753, 8
        %v2863 = vpop.permute.xlu0 %2862
        %2864 = vrot.lane.b32.xlu0 %v2756, 8
        %v2865 = vpop.permute.xlu0 %2864
        %2866 = vrot.lane.b32.xlu0 %v2768, 8
        %v2867 = vpop.permute.xlu0 %2866
        %2868 = vrot.lane.b32.xlu0 %v2771, 8
        %v2869 = vpop.permute.xlu0 %2868
        %2870 = vrot.lane.b32.xlu0 %v2783, 8
        %v2871 = vpop.permute.xlu0 %2870
        %2872 = vrot.lane.b32.xlu0 %v2786, 8
        %v2873 = vpop.permute.xlu0 %2872
        %2874 = vrot.lane.b32.xlu0 %v2798, 8
        %v2875 = vpop.permute.xlu0 %2874
        %2876 = vrot.lane.b32.xlu0 %v2801, 8
        %v2877 = vpop.permute.xlu0 %2876
        %2878 = vrot.lane.b32.xlu0 %v2813, 8
        %v2879 = vpop.permute.xlu0 %2878
        %2880 = vrot.lane.b32.xlu0 %v2816, 8
        %v2881 = vpop.permute.xlu0 %2880
        %2882 = vrot.lane.b32.xlu0 %v2828, 8
        %v2883 = vpop.permute.xlu0 %2882
        %2884 = vrot.lane.b32.xlu0 %v2831, 8
        %v2885 = vpop.permute.xlu0 %2884
        %2886 = vrot.lane.b32.xlu0 %v2843, 8
        %v2887 = vpop.permute.xlu0 %2886
        %2888 = vrot.lane.b32.xlu0 %v2846, 8
        %v2889 = vpop.permute.xlu0 %2888
        %2890 = vrot.lane.b32.xlu0 %v2858, 8
        %v2891 = vpop.permute.xlu0 %2890
        %2892 = vrot.lane.b32.xlu0 %v2861, 8
        %v2893 = vpop.permute.xlu0 %2892
        %v2894 = vrot.slane %v2726, 1
        %v2895 = vrot.slane %v2727, 1
        %v2896 = vsel %vm618, %v2894, %v2895
        %v2897 = vrot.slane %v2728, 1
        %v2898 = vrot.slane %v2729, 1
        %v2899 = vsel %vm618, %v2897, %v2898
        %v2900 = vrot.slane %v2730, 1
        %v2901 = vrot.slane %v2731, 1
        %v2902 = vsel %vm618, %v2900, %v2901
        %v2903 = vrot.slane %v2732, 1
        %v2904 = vrot.slane %v2733, 1
        %v2905 = vsel %vm618, %v2903, %v2904
        %v2906 = vrot.slane %v2734, 1
        %v2907 = vrot.slane %v2735, 1
        %v2908 = vsel %vm618, %v2906, %v2907
        %v2909 = vrot.slane %v2736, 1
        %v2910 = vrot.slane %v2737, 1
        %v2911 = vsel %vm618, %v2909, %v2910
        %v2912 = vrot.slane %v2738, 1
        %v2913 = vrot.slane %v2739, 1
        %v2914 = vsel %vm618, %v2912, %v2913
        %v2915 = vrot.slane %v2740, 1
        %v2916 = vrot.slane %v2741, 1
        %v2917 = vsel %vm618, %v2915, %v2916
        %2918 = vrot.lane.b32.xlu0 %v2896, 16
        %v2919 = vpop.permute.xlu0 %2918
        %2920 = vrot.lane.b32.xlu0 %v2895, 16
        %v2921 = vpop.permute.xlu0 %2920
        %2922 = vrot.lane.b32.xlu0 %v2899, 16
        %v2923 = vpop.permute.xlu0 %2922
        %2924 = vrot.lane.b32.xlu0 %v2898, 16
        %v2925 = vpop.permute.xlu0 %2924
        %2926 = vrot.lane.b32.xlu0 %v2902, 16
        %v2927 = vpop.permute.xlu0 %2926
        %2928 = vrot.lane.b32.xlu0 %v2901, 16
        %v2929 = vpop.permute.xlu0 %2928
        %2930 = vrot.lane.b32.xlu0 %v2905, 16
        %v2931 = vpop.permute.xlu0 %2930
        %2932 = vrot.lane.b32.xlu0 %v2904, 16
        %v2933 = vpop.permute.xlu0 %2932
        %2934 = vrot.lane.b32.xlu0 %v2908, 16
        %v2935 = vpop.permute.xlu0 %2934
        %2936 = vrot.lane.b32.xlu0 %v2907, 16
        %v2937 = vpop.permute.xlu0 %2936
        %2938 = vrot.lane.b32.xlu0 %v2911, 16
        %v2939 = vpop.permute.xlu0 %2938
        %2940 = vrot.lane.b32.xlu0 %v2910, 16
        %v2941 = vpop.permute.xlu0 %2940
        %2942 = vrot.lane.b32.xlu0 %v2914, 16
        %v2943 = vpop.permute.xlu0 %2942
        %2944 = vrot.lane.b32.xlu0 %v2913, 16
        %v2945 = vpop.permute.xlu0 %2944
        %2946 = vrot.lane.b32.xlu0 %v2917, 16
        %v2947 = vpop.permute.xlu0 %2946
        %2948 = vrot.lane.b32.xlu0 %v2916, 16
        %v2949 = vpop.permute.xlu0 %2948
        %v2950 = vpack.c.b16 %v2704, %v2703
        %v2951 = vpack.c.b16 %v2707, %v2706
        %v2952 = vpack.c.b16 %v2710, %v2709
        %v2953 = vpack.c.b16 %v2713, %v2712
        %v2954 = vpack.c.b16 %v2716, %v2715
        %v2955 = vpack.c.b16 %v2719, %v2718
        %v2956 = vpack.c.b16 %v2722, %v2721
        %v2957 = vpack.c.b16 %v2725, %v2724
        %v2959 = vshrl.u32 %v2950, 16
        %v2961 = vrot.slane %v2959, 5
        %v2962 = vshll.u32 %v2950, 16
        %v2964 = vrot.slane %v2962, 6
        %v2965 = vor.u32 %v2961, %v2964
        %v2967 = vshrl.u32 %v2951, 16
        %v2969 = vrot.slane %v2967, 5
        %v2970 = vshll.u32 %v2951, 16
        %v2972 = vrot.slane %v2970, 6
        %v2973 = vor.u32 %v2969, %v2972
        %v2975 = vshrl.u32 %v2952, 16
        %v2977 = vrot.slane %v2975, 5
        %v2978 = vshll.u32 %v2952, 16
        %v2980 = vrot.slane %v2978, 6
        %v2981 = vor.u32 %v2977, %v2980
        %v2983 = vshrl.u32 %v2953, 16
        %v2985 = vrot.slane %v2983, 5
        %v2986 = vshll.u32 %v2953, 16
        %v2988 = vrot.slane %v2986, 6
        %v2989 = vor.u32 %v2985, %v2988
        %v2991 = vshrl.u32 %v2954, 16
        %v2993 = vrot.slane %v2991, 5
        %v2994 = vshll.u32 %v2954, 16
        %v2996 = vrot.slane %v2994, 6
        %v2997 = vor.u32 %v2993, %v2996
        %v2999 = vshrl.u32 %v2955, 16
        %v3001 = vrot.slane %v2999, 5
        %v3002 = vshll.u32 %v2955, 16
        %v3004 = vrot.slane %v3002, 6
        %v3005 = vor.u32 %v3001, %v3004
        %v3007 = vshrl.u32 %v2956, 16
        %v3009 = vrot.slane %v3007, 5
        %v3010 = vshll.u32 %v2956, 16
        %v3012 = vrot.slane %v3010, 6
        %v3013 = vor.u32 %v3009, %v3012
        %v3015 = vshrl.u32 %v2957, 16
        %v3017 = vrot.slane %v3015, 5
        %v3018 = vshll.u32 %v2957, 16
        %v3020 = vrot.slane %v3018, 6
        %v3021 = vor.u32 %v3017, %v3020
        %3022 = vrot.lane.b32.xlu0 %v2965, 24
        %v3023 = vpop.permute.xlu0 %3022
        %3024 = vrot.lane.b32.xlu0 %v2973, 24
        %v3025 = vpop.permute.xlu0 %3024
        %3026 = vrot.lane.b32.xlu0 %v2981, 24
        %v3027 = vpop.permute.xlu0 %3026
        %3028 = vrot.lane.b32.xlu0 %v2989, 24
        %v3029 = vpop.permute.xlu0 %3028
        %3030 = vrot.lane.b32.xlu0 %v2997, 24
        %v3031 = vpop.permute.xlu0 %3030
        %3032 = vrot.lane.b32.xlu0 %v3005, 24
        %v3033 = vpop.permute.xlu0 %3032
        %3034 = vrot.lane.b32.xlu0 %v3013, 24
        %v3035 = vpop.permute.xlu0 %3034
        %3036 = vrot.lane.b32.xlu0 %v3021, 24
        %v3037 = vpop.permute.xlu0 %3036
        %v3046 = vunpack.c.l.b16 %v2649
        %v3047 = vunpack.c.l.b16 %v2653
        %v3048 = vunpack.c.l.b16 %v2657
        %v3049 = vunpack.c.l.b16 %v2661
        %v3050 = vunpack.c.l.b16 %v2665
        %v3051 = vunpack.c.l.b16 %v2669
        %v3052 = vunpack.c.l.b16 %v2673
        %v3053 = vunpack.c.l.b16 %v2677
        %v3054 = vpack.c.b16 %v3046, %v3046
        %v3055 = vpack.c.b16 %v3047, %v3047
        %v3056 = vpack.c.b16 %v3048, %v3048
        %v3057 = vpack.c.b16 %v3049, %v3049
        %v3058 = vpack.c.b16 %v3050, %v3050
        %v3059 = vpack.c.b16 %v3051, %v3051
        %v3060 = vpack.c.b16 %v3052, %v3052
        %v3061 = vpack.c.b16 %v3053, %v3053
        %v3062 = vrot.slane %v2950, 6
        %v3063 = vrot.slane %v3054, 6
        %v3064 = vsel %vm787, %v3062, %v3063
        %v3065 = vrot.slane %v2951, 6
        %v3066 = vrot.slane %v3055, 6
        %v3067 = vsel %vm787, %v3065, %v3066
        %v3068 = vrot.slane %v2952, 6
        %v3069 = vrot.slane %v3056, 6
        %v3070 = vsel %vm787, %v3068, %v3069
        %v3071 = vrot.slane %v2953, 6
        %v3072 = vrot.slane %v3057, 6
        %v3073 = vsel %vm787, %v3071, %v3072
        %v3074 = vrot.slane %v2954, 6
        %v3075 = vrot.slane %v3058, 6
        %v3076 = vsel %vm787, %v3074, %v3075
        %v3077 = vrot.slane %v2955, 6
        %v3078 = vrot.slane %v3059, 6
        %v3079 = vsel %vm787, %v3077, %v3078
        %v3080 = vrot.slane %v2956, 6
        %v3081 = vrot.slane %v3060, 6
        %v3082 = vsel %vm787, %v3080, %v3081
        %v3083 = vrot.slane %v2957, 6
        %v3084 = vrot.slane %v3061, 6
        %v3085 = vsel %vm787, %v3083, %v3084
        %3086 = vrot.lane.b32.xlu0 %v3062, 32
        %v3087 = vpop.permute.xlu0 %3086
        %3088 = vrot.lane.b32.xlu0 %v3064, 32
        %v3089 = vpop.permute.xlu0 %3088
        %3090 = vrot.lane.b32.xlu0 %v3065, 32
        %v3091 = vpop.permute.xlu0 %3090
        %3092 = vrot.lane.b32.xlu0 %v3067, 32
        %v3093 = vpop.permute.xlu0 %3092
        %3094 = vrot.lane.b32.xlu0 %v3068, 32
        %v3095 = vpop.permute.xlu0 %3094
        %3096 = vrot.lane.b32.xlu0 %v3070, 32
        %v3097 = vpop.permute.xlu0 %3096
        %3098 = vrot.lane.b32.xlu0 %v3071, 32
        %v3099 = vpop.permute.xlu0 %3098
        %3100 = vrot.lane.b32.xlu0 %v3073, 32
        %v3101 = vpop.permute.xlu0 %3100
        %3102 = vrot.lane.b32.xlu0 %v3074, 32
        %v3103 = vpop.permute.xlu0 %3102
        %3104 = vrot.lane.b32.xlu0 %v3076, 32
        %v3105 = vpop.permute.xlu0 %3104
        %3106 = vrot.lane.b32.xlu0 %v3077, 32
        %v3107 = vpop.permute.xlu0 %3106
        %3108 = vrot.lane.b32.xlu0 %v3079, 32
        %v3109 = vpop.permute.xlu0 %3108
        %3110 = vrot.lane.b32.xlu0 %v3080, 32
        %v3111 = vpop.permute.xlu0 %3110
        %3112 = vrot.lane.b32.xlu0 %v3082, 32
        %v3113 = vpop.permute.xlu0 %3112
        %3114 = vrot.lane.b32.xlu0 %v3083, 32
        %v3115 = vpop.permute.xlu0 %3114
        %3116 = vrot.lane.b32.xlu0 %v3085, 32
        %v3117 = vpop.permute.xlu0 %3116
        %v3118 = vrot.slane %v2959, 6
        %v3119 = vrot.slane %v2962, 7
        %v3120 = vor.u32 %v3118, %v3119
        %v3122 = vshrl.u32 %v3054, 16
        %v3124 = vrot.slane %v3122, 6
        %v3125 = vshll.u32 %v3054, 16
        %v3127 = vrot.slane %v3125, 7
        %v3128 = vor.u32 %v3124, %v3127
        %v3129 = vsel %vm844, %v3120, %v3128
        %v3130 = vrot.slane %v2967, 6
        %v3131 = vrot.slane %v2970, 7
        %v3132 = vor.u32 %v3130, %v3131
        %v3134 = vshrl.u32 %v3055, 16
        %v3136 = vrot.slane %v3134, 6
        %v3137 = vshll.u32 %v3055, 16
        %v3139 = vrot.slane %v3137, 7
        %v3140 = vor.u32 %v3136, %v3139
        %v3141 = vsel %vm844, %v3132, %v3140
        %v3142 = vrot.slane %v2975, 6
        %v3143 = vrot.slane %v2978, 7
        %v3144 = vor.u32 %v3142, %v3143
        %v3146 = vshrl.u32 %v3056, 16
        %v3148 = vrot.slane %v3146, 6
        %v3149 = vshll.u32 %v3056, 16
        %v3151 = vrot.slane %v3149, 7
        %v3152 = vor.u32 %v3148, %v3151
        %v3153 = vsel %vm844, %v3144, %v3152
        %v3154 = vrot.slane %v2983, 6
        %v3155 = vrot.slane %v2986, 7
        %v3156 = vor.u32 %v3154, %v3155
        %v3158 = vshrl.u32 %v3057, 16
        %v3160 = vrot.slane %v3158, 6
        %v3161 = vshll.u32 %v3057, 16
        %v3163 = vrot.slane %v3161, 7
        %v3164 = vor.u32 %v3160, %v3163
        %v3165 = vsel %vm844, %v3156, %v3164
        %v3166 = vrot.slane %v2991, 6
        %v3167 = vrot.slane %v2994, 7
        %v3168 = vor.u32 %v3166, %v3167
        %v3170 = vshrl.u32 %v3058, 16
        %v3172 = vrot.slane %v3170, 6
        %v3173 = vshll.u32 %v3058, 16
        %v3175 = vrot.slane %v3173, 7
        %v3176 = vor.u32 %v3172, %v3175
        %v3177 = vsel %vm844, %v3168, %v3176
        %v3178 = vrot.slane %v2999, 6
        %v3179 = vrot.slane %v3002, 7
        %v3180 = vor.u32 %v3178, %v3179
        %v3182 = vshrl.u32 %v3059, 16
        %v3184 = vrot.slane %v3182, 6
        %v3185 = vshll.u32 %v3059, 16
        %v3187 = vrot.slane %v3185, 7
        %v3188 = vor.u32 %v3184, %v3187
        %v3189 = vsel %vm844, %v3180, %v3188
        %v3190 = vrot.slane %v3007, 6
        %v3191 = vrot.slane %v3010, 7
        %v3192 = vor.u32 %v3190, %v3191
        %v3194 = vshrl.u32 %v3060, 16
        %v3196 = vrot.slane %v3194, 6
        %v3197 = vshll.u32 %v3060, 16
        %v3199 = vrot.slane %v3197, 7
        %v3200 = vor.u32 %v3196, %v3199
        %v3201 = vsel %vm844, %v3192, %v3200
        %v3202 = vrot.slane %v3015, 6
        %v3203 = vrot.slane %v3018, 7
        %v3204 = vor.u32 %v3202, %v3203
        %v3206 = vshrl.u32 %v3061, 16
        %v3208 = vrot.slane %v3206, 6
        %v3209 = vshll.u32 %v3061, 16
        %v3211 = vrot.slane %v3209, 7
        %v3212 = vor.u32 %v3208, %v3211
        %v3213 = vsel %vm844, %v3204, %v3212
        %3214 = vrot.lane.b32.xlu0 %v3120, 40
        %v3215 = vpop.permute.xlu0 %3214
        %3216 = vrot.lane.b32.xlu0 %v3129, 40
        %v3217 = vpop.permute.xlu0 %3216
        %3218 = vrot.lane.b32.xlu0 %v3132, 40
        %v3219 = vpop.permute.xlu0 %3218
        %3220 = vrot.lane.b32.xlu0 %v3141, 40
        %v3221 = vpop.permute.xlu0 %3220
        %3222 = vrot.lane.b32.xlu0 %v3144, 40
        %v3223 = vpop.permute.xlu0 %3222
        %3224 = vrot.lane.b32.xlu0 %v3153, 40
        %v3225 = vpop.permute.xlu0 %3224
        %3226 = vrot.lane.b32.xlu0 %v3156, 40
        %v3227 = vpop.permute.xlu0 %3226
        %3228 = vrot.lane.b32.xlu0 %v3165, 40
        %v3229 = vpop.permute.xlu0 %3228
        %3230 = vrot.lane.b32.xlu0 %v3168, 40
        %v3231 = vpop.permute.xlu0 %3230
        %3232 = vrot.lane.b32.xlu0 %v3177, 40
        %v3233 = vpop.permute.xlu0 %3232
        %3234 = vrot.lane.b32.xlu0 %v3180, 40
        %v3235 = vpop.permute.xlu0 %3234
        %3236 = vrot.lane.b32.xlu0 %v3189, 40
        %v3237 = vpop.permute.xlu0 %3236
        %3238 = vrot.lane.b32.xlu0 %v3192, 40
        %v3239 = vpop.permute.xlu0 %3238
        %3240 = vrot.lane.b32.xlu0 %v3201, 40
        %v3241 = vpop.permute.xlu0 %3240
        %3242 = vrot.lane.b32.xlu0 %v3204, 40
        %v3243 = vpop.permute.xlu0 %3242
        %3244 = vrot.lane.b32.xlu0 %v3213, 40
        %v3245 = vpop.permute.xlu0 %3244
        %v3247 = vsel %vm973, %v2726, %v2863
        %v3249 = vsel %vm973, %v2727, %v2865
        %v3251 = vsel %vm973, %v2728, %v2867
        %v3253 = vsel %vm973, %v2729, %v2869
        %v3255 = vsel %vm973, %v2730, %v2871
        %v3257 = vsel %vm973, %v2731, %v2873
        %v3259 = vsel %vm973, %v2732, %v2875
        %v3261 = vsel %vm973, %v2733, %v2877
        %v3263 = vsel %vm973, %v2734, %v2879
        %v3265 = vsel %vm973, %v2735, %v2881
        %v3267 = vsel %vm973, %v2736, %v2883
        %v3269 = vsel %vm973, %v2737, %v2885
        %v3271 = vsel %vm973, %v2738, %v2887
        %v3273 = vsel %vm973, %v2739, %v2889
        %v3275 = vsel %vm973, %v2740, %v2891
        %v3277 = vsel %vm973, %v2741, %v2893
        %v3279 = vsel %vm1006, %v3247, %v2919
        %v3281 = vsel %vm1006, %v3249, %v2921
        %v3283 = vsel %vm1006, %v3251, %v2923
        %v3285 = vsel %vm1006, %v3253, %v2925
        %v3287 = vsel %vm1006, %v3255, %v2927
        %v3289 = vsel %vm1006, %v3257, %v2929
        %v3291 = vsel %vm1006, %v3259, %v2931
        %v3293 = vsel %vm1006, %v3261, %v2933
        %v3295 = vsel %vm1006, %v3263, %v2935
        %v3297 = vsel %vm1006, %v3265, %v2937
        %v3299 = vsel %vm1006, %v3267, %v2939
        %v3301 = vsel %vm1006, %v3269, %v2941
        %v3303 = vsel %vm1006, %v3271, %v2943
        %v3305 = vsel %vm1006, %v3273, %v2945
        %v3307 = vsel %vm1006, %v3275, %v2947
        %v3309 = vsel %vm1006, %v3277, %v2949
        %v3311 = vsel %vm1039, %v3279, %v3023
        %v3312 = vsel %vm1039, %v3281, %v3023
        %v3314 = vsel %vm1039, %v3283, %v3025
        %v3315 = vsel %vm1039, %v3285, %v3025
        %v3317 = vsel %vm1039, %v3287, %v3027
        %v3318 = vsel %vm1039, %v3289, %v3027
        %v3320 = vsel %vm1039, %v3291, %v3029
        %v3321 = vsel %vm1039, %v3293, %v3029
        %v3323 = vsel %vm1039, %v3295, %v3031
        %v3324 = vsel %vm1039, %v3297, %v3031
        %v3326 = vsel %vm1039, %v3299, %v3033
        %v3327 = vsel %vm1039, %v3301, %v3033
        %v3329 = vsel %vm1039, %v3303, %v3035
        %v3330 = vsel %vm1039, %v3305, %v3035
        %v3332 = vsel %vm1039, %v3307, %v3037
        %v3333 = vsel %vm1039, %v3309, %v3037
        %v3335 = vsel %vm1064, %v3311, %v3087
        %v3337 = vsel %vm1064, %v3312, %v3089
        %v3339 = vsel %vm1064, %v3314, %v3091
        %v3341 = vsel %vm1064, %v3315, %v3093
        %v3343 = vsel %vm1064, %v3317, %v3095
        %v3345 = vsel %vm1064, %v3318, %v3097
        %v3347 = vsel %vm1064, %v3320, %v3099
        %v3349 = vsel %vm1064, %v3321, %v3101
        %v3351 = vsel %vm1064, %v3323, %v3103
        %v3353 = vsel %vm1064, %v3324, %v3105
        %v3355 = vsel %vm1064, %v3326, %v3107
        %v3357 = vsel %vm1064, %v3327, %v3109
        %v3359 = vsel %vm1064, %v3329, %v3111
        %v3361 = vsel %vm1064, %v3330, %v3113
        %v3363 = vsel %vm1064, %v3332, %v3115
        %v3365 = vsel %vm1064, %v3333, %v3117
        %v3367 = vsel %vm1097, %v3335, %v3215
        %v3369 = vsel %vm1097, %v3337, %v3217
        %v3371 = vsel %vm1097, %v3339, %v3219
        %v3373 = vsel %vm1097, %v3341, %v3221
        %v3375 = vsel %vm1097, %v3343, %v3223
        %v3377 = vsel %vm1097, %v3345, %v3225
        %v3379 = vsel %vm1097, %v3347, %v3227
        %v3381 = vsel %vm1097, %v3349, %v3229
        %v3383 = vsel %vm1097, %v3351, %v3231
        %v3385 = vsel %vm1097, %v3353, %v3233
        %v3387 = vsel %vm1097, %v3355, %v3235
        %v3389 = vsel %vm1097, %v3357, %v3237
        %v3391 = vsel %vm1097, %v3359, %v3239
        %v3393 = vsel %vm1097, %v3361, %v3241
        %v3395 = vsel %vm1097, %v3363, %v3243
        %v3397 = vsel %vm1097, %v3365, %v3245
        %s3398 = sadd.s32 %s365, 4
        %s3399 = smul.u32 %s3398, 4
        %s3400 = smul.addr %s3399, 4
        %s3401 = scalar_lea.vmem [#allocation2], %s3400
        %v3402 = vld [vmem:[%s3401] sm:$0xf]
        %v3403 = vld [vmem:[%s3401 + $0x4] sm:$0xf]
        %v3404 = vld [vmem:[%s3401 + $0x8] sm:$0xf]
        %v3405 = vld [vmem:[%s3401 + $0xc] sm:$0x1]
        %v3406 = vld [vmem:[%s3401 + $0x10] sm:$0xf]
        %v3407 = vld [vmem:[%s3401 + $0x14] sm:$0xf]
        %v3408 = vld [vmem:[%s3401 + $0x18] sm:$0xf]
        %v3409 = vld [vmem:[%s3401 + $0x1c] sm:$0x1]
        %v3410 = vld [vmem:[%s3401 + $0x20] sm:$0xf]
        %v3411 = vld [vmem:[%s3401 + $0x24] sm:$0xf]
        %v3412 = vld [vmem:[%s3401 + $0x28] sm:$0xf]
        %v3413 = vld [vmem:[%s3401 + $0x2c] sm:$0x1]
        %v3414 = vld [vmem:[%s3401 + $0x30] sm:$0xf]
        %v3415 = vld [vmem:[%s3401 + $0x34] sm:$0xf]
        %v3416 = vld [vmem:[%s3401 + $0x38] sm:$0xf]
        %v3417 = vld [vmem:[%s3401 + $0x3c] sm:$0x1]
        %v3418 = vld [vmem:[%s3401 + $0x40] sm:$0xf]
        %v3419 = vld [vmem:[%s3401 + $0x44] sm:$0xf]
        %v3420 = vld [vmem:[%s3401 + $0x48] sm:$0xf]
        %v3421 = vld [vmem:[%s3401 + $0x4c] sm:$0x1]
        %v3422 = vld [vmem:[%s3401 + $0x50] sm:$0xf]
        %v3423 = vld [vmem:[%s3401 + $0x54] sm:$0xf]
        %v3424 = vld [vmem:[%s3401 + $0x58] sm:$0xf]
        %v3425 = vld [vmem:[%s3401 + $0x5c] sm:$0x1]
        %v3426 = vld [vmem:[%s3401 + $0x60] sm:$0xf]
        %v3427 = vld [vmem:[%s3401 + $0x64] sm:$0xf]
        %v3428 = vld [vmem:[%s3401 + $0x68] sm:$0xf]
        %v3429 = vld [vmem:[%s3401 + $0x6c] sm:$0x1]
        %v3430 = vld [vmem:[%s3401 + $0x70] sm:$0xf]
        %v3431 = vld [vmem:[%s3401 + $0x74] sm:$0xf]
        %v3432 = vld [vmem:[%s3401 + $0x78] sm:$0xf]
        %v3433 = vld [vmem:[%s3401 + $0x7c] sm:$0x1]
        %v3458 = vunpack.c.l.b16 %v3402
        %v3459 = vunpack.c.l.b16 %v3403
        %v3460 = vunpack.c.l.b16 %v3404
        %v3461 = vunpack.c.l.b16 %v3406
        %v3462 = vunpack.c.l.b16 %v3407
        %v3463 = vunpack.c.l.b16 %v3408
        %v3464 = vunpack.c.l.b16 %v3410
        %v3465 = vunpack.c.l.b16 %v3411
        %v3466 = vunpack.c.l.b16 %v3412
        %v3467 = vunpack.c.l.b16 %v3414
        %v3468 = vunpack.c.l.b16 %v3415
        %v3469 = vunpack.c.l.b16 %v3416
        %v3470 = vunpack.c.l.b16 %v3418
        %v3471 = vunpack.c.l.b16 %v3419
        %v3472 = vunpack.c.l.b16 %v3420
        %v3473 = vunpack.c.l.b16 %v3422
        %v3474 = vunpack.c.l.b16 %v3423
        %v3475 = vunpack.c.l.b16 %v3424
        %v3476 = vunpack.c.l.b16 %v3426
        %v3477 = vunpack.c.l.b16 %v3427
        %v3478 = vunpack.c.l.b16 %v3428
        %v3479 = vunpack.c.l.b16 %v3430
        %v3480 = vunpack.c.l.b16 %v3431
        %v3481 = vunpack.c.l.b16 %v3432
        %v3482 = vpack.c.b16 %v3459, %v3458
        %v3483 = vpack.c.b16 %v3460, %v3460
        %v3484 = vpack.c.b16 %v3462, %v3461
        %v3485 = vpack.c.b16 %v3463, %v3463
        %v3486 = vpack.c.b16 %v3465, %v3464
        %v3487 = vpack.c.b16 %v3466, %v3466
        %v3488 = vpack.c.b16 %v3468, %v3467
        %v3489 = vpack.c.b16 %v3469, %v3469
        %v3490 = vpack.c.b16 %v3471, %v3470
        %v3491 = vpack.c.b16 %v3472, %v3472
        %v3492 = vpack.c.b16 %v3474, %v3473
        %v3493 = vpack.c.b16 %v3475, %v3475
        %v3494 = vpack.c.b16 %v3477, %v3476
        %v3495 = vpack.c.b16 %v3478, %v3478
        %v3496 = vpack.c.b16 %v3480, %v3479
        %v3497 = vpack.c.b16 %v3481, %v3481
        %v3499 = vshrl.u32 %v3482, 16
        %v3501 = vshll.u32 %v3482, 16
        %v3503 = vrot.slane %v3501, 1
        %v3504 = vor.u32 %v3499, %v3503
        %v3506 = vshll.u32 %v3483, 16
        %v3508 = vrot.slane %v3506, 1
        %v3509 = vsel %vm465, %v3504, %v3508
        %v3510 = vshrl.u32 %v3483, 16
        %v3512 = vor.u32 %v3510, %v3508
        %v3514 = vshrl.u32 %v3484, 16
        %v3516 = vshll.u32 %v3484, 16
        %v3518 = vrot.slane %v3516, 1
        %v3519 = vor.u32 %v3514, %v3518
        %v3521 = vshll.u32 %v3485, 16
        %v3523 = vrot.slane %v3521, 1
        %v3524 = vsel %vm465, %v3519, %v3523
        %v3525 = vshrl.u32 %v3485, 16
        %v3527 = vor.u32 %v3525, %v3523
        %v3529 = vshrl.u32 %v3486, 16
        %v3531 = vshll.u32 %v3486, 16
        %v3533 = vrot.slane %v3531, 1
        %v3534 = vor.u32 %v3529, %v3533
        %v3536 = vshll.u32 %v3487, 16
        %v3538 = vrot.slane %v3536, 1
        %v3539 = vsel %vm465, %v3534, %v3538
        %v3540 = vshrl.u32 %v3487, 16
        %v3542 = vor.u32 %v3540, %v3538
        %v3544 = vshrl.u32 %v3488, 16
        %v3546 = vshll.u32 %v3488, 16
        %v3548 = vrot.slane %v3546, 1
        %v3549 = vor.u32 %v3544, %v3548
        %v3551 = vshll.u32 %v3489, 16
        %v3553 = vrot.slane %v3551, 1
        %v3554 = vsel %vm465, %v3549, %v3553
        %v3555 = vshrl.u32 %v3489, 16
        %v3557 = vor.u32 %v3555, %v3553
        %v3559 = vshrl.u32 %v3490, 16
        %v3561 = vshll.u32 %v3490, 16
        %v3563 = vrot.slane %v3561, 1
        %v3564 = vor.u32 %v3559, %v3563
        %v3566 = vshll.u32 %v3491, 16
        %v3568 = vrot.slane %v3566, 1
        %v3569 = vsel %vm465, %v3564, %v3568
        %v3570 = vshrl.u32 %v3491, 16
        %v3572 = vor.u32 %v3570, %v3568
        %v3574 = vshrl.u32 %v3492, 16
        %v3576 = vshll.u32 %v3492, 16
        %v3578 = vrot.slane %v3576, 1
        %v3579 = vor.u32 %v3574, %v3578
        %v3581 = vshll.u32 %v3493, 16
        %v3583 = vrot.slane %v3581, 1
        %v3584 = vsel %vm465, %v3579, %v3583
        %v3585 = vshrl.u32 %v3493, 16
        %v3587 = vor.u32 %v3585, %v3583
        %v3589 = vshrl.u32 %v3494, 16
        %v3591 = vshll.u32 %v3494, 16
        %v3593 = vrot.slane %v3591, 1
        %v3594 = vor.u32 %v3589, %v3593
        %v3596 = vshll.u32 %v3495, 16
        %v3598 = vrot.slane %v3596, 1
        %v3599 = vsel %vm465, %v3594, %v3598
        %v3600 = vshrl.u32 %v3495, 16
        %v3602 = vor.u32 %v3600, %v3598
        %v3604 = vshrl.u32 %v3496, 16
        %v3606 = vshll.u32 %v3496, 16
        %v3608 = vrot.slane %v3606, 1
        %v3609 = vor.u32 %v3604, %v3608
        %v3611 = vshll.u32 %v3497, 16
        %v3613 = vrot.slane %v3611, 1
        %v3614 = vsel %vm465, %v3609, %v3613
        %v3615 = vshrl.u32 %v3497, 16
        %v3617 = vor.u32 %v3615, %v3613
        %3618 = vrot.lane.b32.xlu0 %v3509, 8
        %v3619 = vpop.permute.xlu0 %3618
        %3620 = vrot.lane.b32.xlu0 %v3512, 8
        %v3621 = vpop.permute.xlu0 %3620
        %3622 = vrot.lane.b32.xlu0 %v3524, 8
        %v3623 = vpop.permute.xlu0 %3622
        %3624 = vrot.lane.b32.xlu0 %v3527, 8
        %v3625 = vpop.permute.xlu0 %3624
        %3626 = vrot.lane.b32.xlu0 %v3539, 8
        %v3627 = vpop.permute.xlu0 %3626
        %3628 = vrot.lane.b32.xlu0 %v3542, 8
        %v3629 = vpop.permute.xlu0 %3628
        %3630 = vrot.lane.b32.xlu0 %v3554, 8
        %v3631 = vpop.permute.xlu0 %3630
        %3632 = vrot.lane.b32.xlu0 %v3557, 8
        %v3633 = vpop.permute.xlu0 %3632
        %3634 = vrot.lane.b32.xlu0 %v3569, 8
        %v3635 = vpop.permute.xlu0 %3634
        %3636 = vrot.lane.b32.xlu0 %v3572, 8
        %v3637 = vpop.permute.xlu0 %3636
        %3638 = vrot.lane.b32.xlu0 %v3584, 8
        %v3639 = vpop.permute.xlu0 %3638
        %3640 = vrot.lane.b32.xlu0 %v3587, 8
        %v3641 = vpop.permute.xlu0 %3640
        %3642 = vrot.lane.b32.xlu0 %v3599, 8
        %v3643 = vpop.permute.xlu0 %3642
        %3644 = vrot.lane.b32.xlu0 %v3602, 8
        %v3645 = vpop.permute.xlu0 %3644
        %3646 = vrot.lane.b32.xlu0 %v3614, 8
        %v3647 = vpop.permute.xlu0 %3646
        %3648 = vrot.lane.b32.xlu0 %v3617, 8
        %v3649 = vpop.permute.xlu0 %3648
        %v3650 = vrot.slane %v3482, 1
        %v3651 = vrot.slane %v3483, 1
        %v3652 = vsel %vm618, %v3650, %v3651
        %v3653 = vrot.slane %v3484, 1
        %v3654 = vrot.slane %v3485, 1
        %v3655 = vsel %vm618, %v3653, %v3654
        %v3656 = vrot.slane %v3486, 1
        %v3657 = vrot.slane %v3487, 1
        %v3658 = vsel %vm618, %v3656, %v3657
        %v3659 = vrot.slane %v3488, 1
        %v3660 = vrot.slane %v3489, 1
        %v3661 = vsel %vm618, %v3659, %v3660
        %v3662 = vrot.slane %v3490, 1
        %v3663 = vrot.slane %v3491, 1
        %v3664 = vsel %vm618, %v3662, %v3663
        %v3665 = vrot.slane %v3492, 1
        %v3666 = vrot.slane %v3493, 1
        %v3667 = vsel %vm618, %v3665, %v3666
        %v3668 = vrot.slane %v3494, 1
        %v3669 = vrot.slane %v3495, 1
        %v3670 = vsel %vm618, %v3668, %v3669
        %v3671 = vrot.slane %v3496, 1
        %v3672 = vrot.slane %v3497, 1
        %v3673 = vsel %vm618, %v3671, %v3672
        %3674 = vrot.lane.b32.xlu0 %v3652, 16
        %v3675 = vpop.permute.xlu0 %3674
        %3676 = vrot.lane.b32.xlu0 %v3651, 16
        %v3677 = vpop.permute.xlu0 %3676
        %3678 = vrot.lane.b32.xlu0 %v3655, 16
        %v3679 = vpop.permute.xlu0 %3678
        %3680 = vrot.lane.b32.xlu0 %v3654, 16
        %v3681 = vpop.permute.xlu0 %3680
        %3682 = vrot.lane.b32.xlu0 %v3658, 16
        %v3683 = vpop.permute.xlu0 %3682
        %3684 = vrot.lane.b32.xlu0 %v3657, 16
        %v3685 = vpop.permute.xlu0 %3684
        %3686 = vrot.lane.b32.xlu0 %v3661, 16
        %v3687 = vpop.permute.xlu0 %3686
        %3688 = vrot.lane.b32.xlu0 %v3660, 16
        %v3689 = vpop.permute.xlu0 %3688
        %3690 = vrot.lane.b32.xlu0 %v3664, 16
        %v3691 = vpop.permute.xlu0 %3690
        %3692 = vrot.lane.b32.xlu0 %v3663, 16
        %v3693 = vpop.permute.xlu0 %3692
        %3694 = vrot.lane.b32.xlu0 %v3667, 16
        %v3695 = vpop.permute.xlu0 %3694
        %3696 = vrot.lane.b32.xlu0 %v3666, 16
        %v3697 = vpop.permute.xlu0 %3696
        %3698 = vrot.lane.b32.xlu0 %v3670, 16
        %v3699 = vpop.permute.xlu0 %3698
        %3700 = vrot.lane.b32.xlu0 %v3669, 16
        %v3701 = vpop.permute.xlu0 %3700
        %3702 = vrot.lane.b32.xlu0 %v3673, 16
        %v3703 = vpop.permute.xlu0 %3702
        %3704 = vrot.lane.b32.xlu0 %v3672, 16
        %v3705 = vpop.permute.xlu0 %3704
        %v3706 = vpack.c.b16 %v3460, %v3459
        %v3707 = vpack.c.b16 %v3463, %v3462
        %v3708 = vpack.c.b16 %v3466, %v3465
        %v3709 = vpack.c.b16 %v3469, %v3468
        %v3710 = vpack.c.b16 %v3472, %v3471
        %v3711 = vpack.c.b16 %v3475, %v3474
        %v3712 = vpack.c.b16 %v3478, %v3477
        %v3713 = vpack.c.b16 %v3481, %v3480
        %v3715 = vshrl.u32 %v3706, 16
        %v3717 = vrot.slane %v3715, 5
        %v3718 = vshll.u32 %v3706, 16
        %v3720 = vrot.slane %v3718, 6
        %v3721 = vor.u32 %v3717, %v3720
        %v3723 = vshrl.u32 %v3707, 16
        %v3725 = vrot.slane %v3723, 5
        %v3726 = vshll.u32 %v3707, 16
        %v3728 = vrot.slane %v3726, 6
        %v3729 = vor.u32 %v3725, %v3728
        %v3731 = vshrl.u32 %v3708, 16
        %v3733 = vrot.slane %v3731, 5
        %v3734 = vshll.u32 %v3708, 16
        %v3736 = vrot.slane %v3734, 6
        %v3737 = vor.u32 %v3733, %v3736
        %v3739 = vshrl.u32 %v3709, 16
        %v3741 = vrot.slane %v3739, 5
        %v3742 = vshll.u32 %v3709, 16
        %v3744 = vrot.slane %v3742, 6
        %v3745 = vor.u32 %v3741, %v3744
        %v3747 = vshrl.u32 %v3710, 16
        %v3749 = vrot.slane %v3747, 5
        %v3750 = vshll.u32 %v3710, 16
        %v3752 = vrot.slane %v3750, 6
        %v3753 = vor.u32 %v3749, %v3752
        %v3755 = vshrl.u32 %v3711, 16
        %v3757 = vrot.slane %v3755, 5
        %v3758 = vshll.u32 %v3711, 16
        %v3760 = vrot.slane %v3758, 6
        %v3761 = vor.u32 %v3757, %v3760
        %v3763 = vshrl.u32 %v3712, 16
        %v3765 = vrot.slane %v3763, 5
        %v3766 = vshll.u32 %v3712, 16
        %v3768 = vrot.slane %v3766, 6
        %v3769 = vor.u32 %v3765, %v3768
        %v3771 = vshrl.u32 %v3713, 16
        %v3773 = vrot.slane %v3771, 5
        %v3774 = vshll.u32 %v3713, 16
        %v3776 = vrot.slane %v3774, 6
        %v3777 = vor.u32 %v3773, %v3776
        %3778 = vrot.lane.b32.xlu0 %v3721, 24
        %v3779 = vpop.permute.xlu0 %3778
        %3780 = vrot.lane.b32.xlu0 %v3729, 24
        %v3781 = vpop.permute.xlu0 %3780
        %3782 = vrot.lane.b32.xlu0 %v3737, 24
        %v3783 = vpop.permute.xlu0 %3782
        %3784 = vrot.lane.b32.xlu0 %v3745, 24
        %v3785 = vpop.permute.xlu0 %3784
        %3786 = vrot.lane.b32.xlu0 %v3753, 24
        %v3787 = vpop.permute.xlu0 %3786
        %3788 = vrot.lane.b32.xlu0 %v3761, 24
        %v3789 = vpop.permute.xlu0 %3788
        %3790 = vrot.lane.b32.xlu0 %v3769, 24
        %v3791 = vpop.permute.xlu0 %3790
        %3792 = vrot.lane.b32.xlu0 %v3777, 24
        %v3793 = vpop.permute.xlu0 %3792
        %v3802 = vunpack.c.l.b16 %v3405
        %v3803 = vunpack.c.l.b16 %v3409
        %v3804 = vunpack.c.l.b16 %v3413
        %v3805 = vunpack.c.l.b16 %v3417
        %v3806 = vunpack.c.l.b16 %v3421
        %v3807 = vunpack.c.l.b16 %v3425
        %v3808 = vunpack.c.l.b16 %v3429
        %v3809 = vunpack.c.l.b16 %v3433
        %v3810 = vpack.c.b16 %v3802, %v3802
        %v3811 = vpack.c.b16 %v3803, %v3803
        %v3812 = vpack.c.b16 %v3804, %v3804
        %v3813 = vpack.c.b16 %v3805, %v3805
        %v3814 = vpack.c.b16 %v3806, %v3806
        %v3815 = vpack.c.b16 %v3807, %v3807
        %v3816 = vpack.c.b16 %v3808, %v3808
        %v3817 = vpack.c.b16 %v3809, %v3809
        %v3818 = vrot.slane %v3706, 6
        %v3819 = vrot.slane %v3810, 6
        %v3820 = vsel %vm787, %v3818, %v3819
        %v3821 = vrot.slane %v3707, 6
        %v3822 = vrot.slane %v3811, 6
        %v3823 = vsel %vm787, %v3821, %v3822
        %v3824 = vrot.slane %v3708, 6
        %v3825 = vrot.slane %v3812, 6
        %v3826 = vsel %vm787, %v3824, %v3825
        %v3827 = vrot.slane %v3709, 6
        %v3828 = vrot.slane %v3813, 6
        %v3829 = vsel %vm787, %v3827, %v3828
        %v3830 = vrot.slane %v3710, 6
        %v3831 = vrot.slane %v3814, 6
        %v3832 = vsel %vm787, %v3830, %v3831
        %v3833 = vrot.slane %v3711, 6
        %v3834 = vrot.slane %v3815, 6
        %v3835 = vsel %vm787, %v3833, %v3834
        %v3836 = vrot.slane %v3712, 6
        %v3837 = vrot.slane %v3816, 6
        %v3838 = vsel %vm787, %v3836, %v3837
        %v3839 = vrot.slane %v3713, 6
        %v3840 = vrot.slane %v3817, 6
        %v3841 = vsel %vm787, %v3839, %v3840
        %3842 = vrot.lane.b32.xlu0 %v3818, 32
        %v3843 = vpop.permute.xlu0 %3842
        %3844 = vrot.lane.b32.xlu0 %v3820, 32
        %v3845 = vpop.permute.xlu0 %3844
        %3846 = vrot.lane.b32.xlu0 %v3821, 32
        %v3847 = vpop.permute.xlu0 %3846
        %3848 = vrot.lane.b32.xlu0 %v3823, 32
        %v3849 = vpop.permute.xlu0 %3848
        %3850 = vrot.lane.b32.xlu0 %v3824, 32
        %v3851 = vpop.permute.xlu0 %3850
        %3852 = vrot.lane.b32.xlu0 %v3826, 32
        %v3853 = vpop.permute.xlu0 %3852
        %3854 = vrot.lane.b32.xlu0 %v3827, 32
        %v3855 = vpop.permute.xlu0 %3854
        %3856 = vrot.lane.b32.xlu0 %v3829, 32
        %v3857 = vpop.permute.xlu0 %3856
        %3858 = vrot.lane.b32.xlu0 %v3830, 32
        %v3859 = vpop.permute.xlu0 %3858
        %3860 = vrot.lane.b32.xlu0 %v3832, 32
        %v3861 = vpop.permute.xlu0 %3860
        %3862 = vrot.lane.b32.xlu0 %v3833, 32
        %v3863 = vpop.permute.xlu0 %3862
        %3864 = vrot.lane.b32.xlu0 %v3835, 32
        %v3865 = vpop.permute.xlu0 %3864
        %3866 = vrot.lane.b32.xlu0 %v3836, 32
        %v3867 = vpop.permute.xlu0 %3866
        %3868 = vrot.lane.b32.xlu0 %v3838, 32
        %v3869 = vpop.permute.xlu0 %3868
        %3870 = vrot.lane.b32.xlu0 %v3839, 32
        %v3871 = vpop.permute.xlu0 %3870
        %3872 = vrot.lane.b32.xlu0 %v3841, 32
        %v3873 = vpop.permute.xlu0 %3872
        %v3874 = vrot.slane %v3715, 6
        %v3875 = vrot.slane %v3718, 7
        %v3876 = vor.u32 %v3874, %v3875
        %v3878 = vshrl.u32 %v3810, 16
        %v3880 = vrot.slane %v3878, 6
        %v3881 = vshll.u32 %v3810, 16
        %v3883 = vrot.slane %v3881, 7
        %v3884 = vor.u32 %v3880, %v3883
        %v3885 = vsel %vm844, %v3876, %v3884
        %v3886 = vrot.slane %v3723, 6
        %v3887 = vrot.slane %v3726, 7
        %v3888 = vor.u32 %v3886, %v3887
        %v3890 = vshrl.u32 %v3811, 16
        %v3892 = vrot.slane %v3890, 6
        %v3893 = vshll.u32 %v3811, 16
        %v3895 = vrot.slane %v3893, 7
        %v3896 = vor.u32 %v3892, %v3895
        %v3897 = vsel %vm844, %v3888, %v3896
        %v3898 = vrot.slane %v3731, 6
        %v3899 = vrot.slane %v3734, 7
        %v3900 = vor.u32 %v3898, %v3899
        %v3902 = vshrl.u32 %v3812, 16
        %v3904 = vrot.slane %v3902, 6
        %v3905 = vshll.u32 %v3812, 16
        %v3907 = vrot.slane %v3905, 7
        %v3908 = vor.u32 %v3904, %v3907
        %v3909 = vsel %vm844, %v3900, %v3908
        %v3910 = vrot.slane %v3739, 6
        %v3911 = vrot.slane %v3742, 7
        %v3912 = vor.u32 %v3910, %v3911
        %v3914 = vshrl.u32 %v3813, 16
        %v3916 = vrot.slane %v3914, 6
        %v3917 = vshll.u32 %v3813, 16
        %v3919 = vrot.slane %v3917, 7
        %v3920 = vor.u32 %v3916, %v3919
        %v3921 = vsel %vm844, %v3912, %v3920
        %v3922 = vrot.slane %v3747, 6
        %v3923 = vrot.slane %v3750, 7
        %v3924 = vor.u32 %v3922, %v3923
        %v3926 = vshrl.u32 %v3814, 16
        %v3928 = vrot.slane %v3926, 6
        %v3929 = vshll.u32 %v3814, 16
        %v3931 = vrot.slane %v3929, 7
        %v3932 = vor.u32 %v3928, %v3931
        %v3933 = vsel %vm844, %v3924, %v3932
        %v3934 = vrot.slane %v3755, 6
        %v3935 = vrot.slane %v3758, 7
        %v3936 = vor.u32 %v3934, %v3935
        %v3938 = vshrl.u32 %v3815, 16
        %v3940 = vrot.slane %v3938, 6
        %v3941 = vshll.u32 %v3815, 16
        %v3943 = vrot.slane %v3941, 7
        %v3944 = vor.u32 %v3940, %v3943
        %v3945 = vsel %vm844, %v3936, %v3944
        %v3946 = vrot.slane %v3763, 6
        %v3947 = vrot.slane %v3766, 7
        %v3948 = vor.u32 %v3946, %v3947
        %v3950 = vshrl.u32 %v3816, 16
        %v3952 = vrot.slane %v3950, 6
        %v3953 = vshll.u32 %v3816, 16
        %v3955 = vrot.slane %v3953, 7
        %v3956 = vor.u32 %v3952, %v3955
        %v3957 = vsel %vm844, %v3948, %v3956
        %v3958 = vrot.slane %v3771, 6
        %v3959 = vrot.slane %v3774, 7
        %v3960 = vor.u32 %v3958, %v3959
        %v3962 = vshrl.u32 %v3817, 16
        %v3964 = vrot.slane %v3962, 6
        %v3965 = vshll.u32 %v3817, 16
        %v3967 = vrot.slane %v3965, 7
        %v3968 = vor.u32 %v3964, %v3967
        %v3969 = vsel %vm844, %v3960, %v3968
        %3970 = vrot.lane.b32.xlu0 %v3876, 40
        %v3971 = vpop.permute.xlu0 %3970
        %3972 = vrot.lane.b32.xlu0 %v3885, 40
        %v3973 = vpop.permute.xlu0 %3972
        %3974 = vrot.lane.b32.xlu0 %v3888, 40
        %v3975 = vpop.permute.xlu0 %3974
        %3976 = vrot.lane.b32.xlu0 %v3897, 40
        %v3977 = vpop.permute.xlu0 %3976
        %3978 = vrot.lane.b32.xlu0 %v3900, 40
        %v3979 = vpop.permute.xlu0 %3978
        %3980 = vrot.lane.b32.xlu0 %v3909, 40
        %v3981 = vpop.permute.xlu0 %3980
        %3982 = vrot.lane.b32.xlu0 %v3912, 40
        %v3983 = vpop.permute.xlu0 %3982
        %3984 = vrot.lane.b32.xlu0 %v3921, 40
        %v3985 = vpop.permute.xlu0 %3984
        %3986 = vrot.lane.b32.xlu0 %v3924, 40
        %v3987 = vpop.permute.xlu0 %3986
        %3988 = vrot.lane.b32.xlu0 %v3933, 40
        %v3989 = vpop.permute.xlu0 %3988
        %3990 = vrot.lane.b32.xlu0 %v3936, 40
        %v3991 = vpop.permute.xlu0 %3990
        %3992 = vrot.lane.b32.xlu0 %v3945, 40
        %v3993 = vpop.permute.xlu0 %3992
        %3994 = vrot.lane.b32.xlu0 %v3948, 40
        %v3995 = vpop.permute.xlu0 %3994
        %3996 = vrot.lane.b32.xlu0 %v3957, 40
        %v3997 = vpop.permute.xlu0 %3996
        %3998 = vrot.lane.b32.xlu0 %v3960, 40
        %v3999 = vpop.permute.xlu0 %3998
        %4000 = vrot.lane.b32.xlu0 %v3969, 40
        %v4001 = vpop.permute.xlu0 %4000
        %v4003 = vsel %vm973, %v3482, %v3619
        %v4005 = vsel %vm973, %v3483, %v3621
        %v4007 = vsel %vm973, %v3484, %v3623
        %v4009 = vsel %vm973, %v3485, %v3625
        %v4011 = vsel %vm973, %v3486, %v3627
        %v4013 = vsel %vm973, %v3487, %v3629
        %v4015 = vsel %vm973, %v3488, %v3631
        %v4017 = vsel %vm973, %v3489, %v3633
        %v4019 = vsel %vm973, %v3490, %v3635
        %v4021 = vsel %vm973, %v3491, %v3637
        %v4023 = vsel %vm973, %v3492, %v3639
        %v4025 = vsel %vm973, %v3493, %v3641
        %v4027 = vsel %vm973, %v3494, %v3643
        %v4029 = vsel %vm973, %v3495, %v3645
        %v4031 = vsel %vm973, %v3496, %v3647
        %v4033 = vsel %vm973, %v3497, %v3649
        %v4035 = vsel %vm1006, %v4003, %v3675
        %v4037 = vsel %vm1006, %v4005, %v3677
        %v4039 = vsel %vm1006, %v4007, %v3679
        %v4041 = vsel %vm1006, %v4009, %v3681
        %v4043 = vsel %vm1006, %v4011, %v3683
        %v4045 = vsel %vm1006, %v4013, %v3685
        %v4047 = vsel %vm1006, %v4015, %v3687
        %v4049 = vsel %vm1006, %v4017, %v3689
        %v4051 = vsel %vm1006, %v4019, %v3691
        %v4053 = vsel %vm1006, %v4021, %v3693
        %v4055 = vsel %vm1006, %v4023, %v3695
        %v4057 = vsel %vm1006, %v4025, %v3697
        %v4059 = vsel %vm1006, %v4027, %v3699
        %v4061 = vsel %vm1006, %v4029, %v3701
        %v4063 = vsel %vm1006, %v4031, %v3703
        %v4065 = vsel %vm1006, %v4033, %v3705
        %v4067 = vsel %vm1039, %v4035, %v3779
        %v4068 = vsel %vm1039, %v4037, %v3779
        %v4070 = vsel %vm1039, %v4039, %v3781
        %v4071 = vsel %vm1039, %v4041, %v3781
        %v4073 = vsel %vm1039, %v4043, %v3783
        %v4074 = vsel %vm1039, %v4045, %v3783
        %v4076 = vsel %vm1039, %v4047, %v3785
        %v4077 = vsel %vm1039, %v4049, %v3785
        %v4079 = vsel %vm1039, %v4051, %v3787
        %v4080 = vsel %vm1039, %v4053, %v3787
        %v4082 = vsel %vm1039, %v4055, %v3789
        %v4083 = vsel %vm1039, %v4057, %v3789
        %v4085 = vsel %vm1039, %v4059, %v3791
        %v4086 = vsel %vm1039, %v4061, %v3791
        %v4088 = vsel %vm1039, %v4063, %v3793
        %v4089 = vsel %vm1039, %v4065, %v3793
        %v4091 = vsel %vm1064, %v4067, %v3843
        %v4093 = vsel %vm1064, %v4068, %v3845
        %v4095 = vsel %vm1064, %v4070, %v3847
        %v4097 = vsel %vm1064, %v4071, %v3849
        %v4099 = vsel %vm1064, %v4073, %v3851
        %v4101 = vsel %vm1064, %v4074, %v3853
        %v4103 = vsel %vm1064, %v4076, %v3855
        %v4105 = vsel %vm1064, %v4077, %v3857
        %v4107 = vsel %vm1064, %v4079, %v3859
        %v4109 = vsel %vm1064, %v4080, %v3861
        %v4111 = vsel %vm1064, %v4082, %v3863
        %v4113 = vsel %vm1064, %v4083, %v3865
        %v4115 = vsel %vm1064, %v4085, %v3867
        %v4117 = vsel %vm1064, %v4086, %v3869
        %v4119 = vsel %vm1064, %v4088, %v3871
        %v4121 = vsel %vm1064, %v4089, %v3873
        %v4123 = vsel %vm1097, %v4091, %v3971
        %v4125 = vsel %vm1097, %v4093, %v3973
        %v4127 = vsel %vm1097, %v4095, %v3975
        %v4129 = vsel %vm1097, %v4097, %v3977
        %v4131 = vsel %vm1097, %v4099, %v3979
        %v4133 = vsel %vm1097, %v4101, %v3981
        %v4135 = vsel %vm1097, %v4103, %v3983
        %v4137 = vsel %vm1097, %v4105, %v3985
        %v4139 = vsel %vm1097, %v4107, %v3987
        %v4141 = vsel %vm1097, %v4109, %v3989
        %v4143 = vsel %vm1097, %v4111, %v3991
        %v4145 = vsel %vm1097, %v4113, %v3993
        %v4147 = vsel %vm1097, %v4115, %v3995
        %v4149 = vsel %vm1097, %v4117, %v3997
        %v4151 = vsel %vm1097, %v4119, %v3999
        %v4153 = vsel %vm1097, %v4121, %v4001
        %s4154 = sadd.s32 %s365, 5
        %s4155 = smul.u32 %s4154, 4
        %s4156 = smul.addr %s4155, 4
        %s4157 = scalar_lea.vmem [#allocation2], %s4156
        %v4158 = vld [vmem:[%s4157] sm:$0xf]
        %v4159 = vld [vmem:[%s4157 + $0x4] sm:$0xf]
        %v4160 = vld [vmem:[%s4157 + $0x8] sm:$0xf]
        %v4161 = vld [vmem:[%s4157 + $0xc] sm:$0x1]
        %v4162 = vld [vmem:[%s4157 + $0x10] sm:$0xf]
        %v4163 = vld [vmem:[%s4157 + $0x14] sm:$0xf]
        %v4164 = vld [vmem:[%s4157 + $0x18] sm:$0xf]
        %v4165 = vld [vmem:[%s4157 + $0x1c] sm:$0x1]
        %v4166 = vld [vmem:[%s4157 + $0x20] sm:$0xf]
        %v4167 = vld [vmem:[%s4157 + $0x24] sm:$0xf]
        %v4168 = vld [vmem:[%s4157 + $0x28] sm:$0xf]
        %v4169 = vld [vmem:[%s4157 + $0x2c] sm:$0x1]
        %v4170 = vld [vmem:[%s4157 + $0x30] sm:$0xf]
        %v4171 = vld [vmem:[%s4157 + $0x34] sm:$0xf]
        %v4172 = vld [vmem:[%s4157 + $0x38] sm:$0xf]
        %v4173 = vld [vmem:[%s4157 + $0x3c] sm:$0x1]
        %v4174 = vld [vmem:[%s4157 + $0x40] sm:$0xf]
        %v4175 = vld [vmem:[%s4157 + $0x44] sm:$0xf]
        %v4176 = vld [vmem:[%s4157 + $0x48] sm:$0xf]
        %v4177 = vld [vmem:[%s4157 + $0x4c] sm:$0x1]
        %v4178 = vld [vmem:[%s4157 + $0x50] sm:$0xf]
        %v4179 = vld [vmem:[%s4157 + $0x54] sm:$0xf]
        %v4180 = vld [vmem:[%s4157 + $0x58] sm:$0xf]
        %v4181 = vld [vmem:[%s4157 + $0x5c] sm:$0x1]
        %v4182 = vld [vmem:[%s4157 + $0x60] sm:$0xf]
        %v4183 = vld [vmem:[%s4157 + $0x64] sm:$0xf]
        %v4184 = vld [vmem:[%s4157 + $0x68] sm:$0xf]
        %v4185 = vld [vmem:[%s4157 + $0x6c] sm:$0x1]
        %v4186 = vld [vmem:[%s4157 + $0x70] sm:$0xf]
        %v4187 = vld [vmem:[%s4157 + $0x74] sm:$0xf]
        %v4188 = vld [vmem:[%s4157 + $0x78] sm:$0xf]
        %v4189 = vld [vmem:[%s4157 + $0x7c] sm:$0x1]
        %v4214 = vunpack.c.l.b16 %v4158
        %v4215 = vunpack.c.l.b16 %v4159
        %v4216 = vunpack.c.l.b16 %v4160
        %v4217 = vunpack.c.l.b16 %v4162
        %v4218 = vunpack.c.l.b16 %v4163
        %v4219 = vunpack.c.l.b16 %v4164
        %v4220 = vunpack.c.l.b16 %v4166
        %v4221 = vunpack.c.l.b16 %v4167
        %v4222 = vunpack.c.l.b16 %v4168
        %v4223 = vunpack.c.l.b16 %v4170
        %v4224 = vunpack.c.l.b16 %v4171
        %v4225 = vunpack.c.l.b16 %v4172
        %v4226 = vunpack.c.l.b16 %v4174
        %v4227 = vunpack.c.l.b16 %v4175
        %v4228 = vunpack.c.l.b16 %v4176
        %v4229 = vunpack.c.l.b16 %v4178
        %v4230 = vunpack.c.l.b16 %v4179
        %v4231 = vunpack.c.l.b16 %v4180
        %v4232 = vunpack.c.l.b16 %v4182
        %v4233 = vunpack.c.l.b16 %v4183
        %v4234 = vunpack.c.l.b16 %v4184
        %v4235 = vunpack.c.l.b16 %v4186
        %v4236 = vunpack.c.l.b16 %v4187
        %v4237 = vunpack.c.l.b16 %v4188
        %v4238 = vpack.c.b16 %v4215, %v4214
        %v4239 = vpack.c.b16 %v4216, %v4216
        %v4240 = vpack.c.b16 %v4218, %v4217
        %v4241 = vpack.c.b16 %v4219, %v4219
        %v4242 = vpack.c.b16 %v4221, %v4220
        %v4243 = vpack.c.b16 %v4222, %v4222
        %v4244 = vpack.c.b16 %v4224, %v4223
        %v4245 = vpack.c.b16 %v4225, %v4225
        %v4246 = vpack.c.b16 %v4227, %v4226
        %v4247 = vpack.c.b16 %v4228, %v4228
        %v4248 = vpack.c.b16 %v4230, %v4229
        %v4249 = vpack.c.b16 %v4231, %v4231
        %v4250 = vpack.c.b16 %v4233, %v4232
        %v4251 = vpack.c.b16 %v4234, %v4234
        %v4252 = vpack.c.b16 %v4236, %v4235
        %v4253 = vpack.c.b16 %v4237, %v4237
        %v4255 = vshrl.u32 %v4238, 16
        %v4257 = vshll.u32 %v4238, 16
        %v4259 = vrot.slane %v4257, 1
        %v4260 = vor.u32 %v4255, %v4259
        %v4262 = vshll.u32 %v4239, 16
        %v4264 = vrot.slane %v4262, 1
        %v4265 = vsel %vm465, %v4260, %v4264
        %v4266 = vshrl.u32 %v4239, 16
        %v4268 = vor.u32 %v4266, %v4264
        %v4270 = vshrl.u32 %v4240, 16
        %v4272 = vshll.u32 %v4240, 16
        %v4274 = vrot.slane %v4272, 1
        %v4275 = vor.u32 %v4270, %v4274
        %v4277 = vshll.u32 %v4241, 16
        %v4279 = vrot.slane %v4277, 1
        %v4280 = vsel %vm465, %v4275, %v4279
        %v4281 = vshrl.u32 %v4241, 16
        %v4283 = vor.u32 %v4281, %v4279
        %v4285 = vshrl.u32 %v4242, 16
        %v4287 = vshll.u32 %v4242, 16
        %v4289 = vrot.slane %v4287, 1
        %v4290 = vor.u32 %v4285, %v4289
        %v4292 = vshll.u32 %v4243, 16
        %v4294 = vrot.slane %v4292, 1
        %v4295 = vsel %vm465, %v4290, %v4294
        %v4296 = vshrl.u32 %v4243, 16
        %v4298 = vor.u32 %v4296, %v4294
        %v4300 = vshrl.u32 %v4244, 16
        %v4302 = vshll.u32 %v4244, 16
        %v4304 = vrot.slane %v4302, 1
        %v4305 = vor.u32 %v4300, %v4304
        %v4307 = vshll.u32 %v4245, 16
        %v4309 = vrot.slane %v4307, 1
        %v4310 = vsel %vm465, %v4305, %v4309
        %v4311 = vshrl.u32 %v4245, 16
        %v4313 = vor.u32 %v4311, %v4309
        %v4315 = vshrl.u32 %v4246, 16
        %v4317 = vshll.u32 %v4246, 16
        %v4319 = vrot.slane %v4317, 1
        %v4320 = vor.u32 %v4315, %v4319
        %v4322 = vshll.u32 %v4247, 16
        %v4324 = vrot.slane %v4322, 1
        %v4325 = vsel %vm465, %v4320, %v4324
        %v4326 = vshrl.u32 %v4247, 16
        %v4328 = vor.u32 %v4326, %v4324
        %v4330 = vshrl.u32 %v4248, 16
        %v4332 = vshll.u32 %v4248, 16
        %v4334 = vrot.slane %v4332, 1
        %v4335 = vor.u32 %v4330, %v4334
        %v4337 = vshll.u32 %v4249, 16
        %v4339 = vrot.slane %v4337, 1
        %v4340 = vsel %vm465, %v4335, %v4339
        %v4341 = vshrl.u32 %v4249, 16
        %v4343 = vor.u32 %v4341, %v4339
        %v4345 = vshrl.u32 %v4250, 16
        %v4347 = vshll.u32 %v4250, 16
        %v4349 = vrot.slane %v4347, 1
        %v4350 = vor.u32 %v4345, %v4349
        %v4352 = vshll.u32 %v4251, 16
        %v4354 = vrot.slane %v4352, 1
        %v4355 = vsel %vm465, %v4350, %v4354
        %v4356 = vshrl.u32 %v4251, 16
        %v4358 = vor.u32 %v4356, %v4354
        %v4360 = vshrl.u32 %v4252, 16
        %v4362 = vshll.u32 %v4252, 16
        %v4364 = vrot.slane %v4362, 1
        %v4365 = vor.u32 %v4360, %v4364
        %v4367 = vshll.u32 %v4253, 16
        %v4369 = vrot.slane %v4367, 1
        %v4370 = vsel %vm465, %v4365, %v4369
        %v4371 = vshrl.u32 %v4253, 16
        %v4373 = vor.u32 %v4371, %v4369
        %4374 = vrot.lane.b32.xlu0 %v4265, 8
        %v4375 = vpop.permute.xlu0 %4374
        %4376 = vrot.lane.b32.xlu0 %v4268, 8
        %v4377 = vpop.permute.xlu0 %4376
        %4378 = vrot.lane.b32.xlu0 %v4280, 8
        %v4379 = vpop.permute.xlu0 %4378
        %4380 = vrot.lane.b32.xlu0 %v4283, 8
        %v4381 = vpop.permute.xlu0 %4380
        %4382 = vrot.lane.b32.xlu0 %v4295, 8
        %v4383 = vpop.permute.xlu0 %4382
        %4384 = vrot.lane.b32.xlu0 %v4298, 8
        %v4385 = vpop.permute.xlu0 %4384
        %4386 = vrot.lane.b32.xlu0 %v4310, 8
        %v4387 = vpop.permute.xlu0 %4386
        %4388 = vrot.lane.b32.xlu0 %v4313, 8
        %v4389 = vpop.permute.xlu0 %4388
        %4390 = vrot.lane.b32.xlu0 %v4325, 8
        %v4391 = vpop.permute.xlu0 %4390
        %4392 = vrot.lane.b32.xlu0 %v4328, 8
        %v4393 = vpop.permute.xlu0 %4392
        %4394 = vrot.lane.b32.xlu0 %v4340, 8
        %v4395 = vpop.permute.xlu0 %4394
        %4396 = vrot.lane.b32.xlu0 %v4343, 8
        %v4397 = vpop.permute.xlu0 %4396
        %4398 = vrot.lane.b32.xlu0 %v4355, 8
        %v4399 = vpop.permute.xlu0 %4398
        %4400 = vrot.lane.b32.xlu0 %v4358, 8
        %v4401 = vpop.permute.xlu0 %4400
        %4402 = vrot.lane.b32.xlu0 %v4370, 8
        %v4403 = vpop.permute.xlu0 %4402
        %4404 = vrot.lane.b32.xlu0 %v4373, 8
        %v4405 = vpop.permute.xlu0 %4404
        %v4406 = vrot.slane %v4238, 1
        %v4407 = vrot.slane %v4239, 1
        %v4408 = vsel %vm618, %v4406, %v4407
        %v4409 = vrot.slane %v4240, 1
        %v4410 = vrot.slane %v4241, 1
        %v4411 = vsel %vm618, %v4409, %v4410
        %v4412 = vrot.slane %v4242, 1
        %v4413 = vrot.slane %v4243, 1
        %v4414 = vsel %vm618, %v4412, %v4413
        %v4415 = vrot.slane %v4244, 1
        %v4416 = vrot.slane %v4245, 1
        %v4417 = vsel %vm618, %v4415, %v4416
        %v4418 = vrot.slane %v4246, 1
        %v4419 = vrot.slane %v4247, 1
        %v4420 = vsel %vm618, %v4418, %v4419
        %v4421 = vrot.slane %v4248, 1
        %v4422 = vrot.slane %v4249, 1
        %v4423 = vsel %vm618, %v4421, %v4422
        %v4424 = vrot.slane %v4250, 1
        %v4425 = vrot.slane %v4251, 1
        %v4426 = vsel %vm618, %v4424, %v4425
        %v4427 = vrot.slane %v4252, 1
        %v4428 = vrot.slane %v4253, 1
        %v4429 = vsel %vm618, %v4427, %v4428
        %4430 = vrot.lane.b32.xlu0 %v4408, 16
        %v4431 = vpop.permute.xlu0 %4430
        %4432 = vrot.lane.b32.xlu0 %v4407, 16
        %v4433 = vpop.permute.xlu0 %4432
        %4434 = vrot.lane.b32.xlu0 %v4411, 16
        %v4435 = vpop.permute.xlu0 %4434
        %4436 = vrot.lane.b32.xlu0 %v4410, 16
        %v4437 = vpop.permute.xlu0 %4436
        %4438 = vrot.lane.b32.xlu0 %v4414, 16
        %v4439 = vpop.permute.xlu0 %4438
        %4440 = vrot.lane.b32.xlu0 %v4413, 16
        %v4441 = vpop.permute.xlu0 %4440
        %4442 = vrot.lane.b32.xlu0 %v4417, 16
        %v4443 = vpop.permute.xlu0 %4442
        %4444 = vrot.lane.b32.xlu0 %v4416, 16
        %v4445 = vpop.permute.xlu0 %4444
        %4446 = vrot.lane.b32.xlu0 %v4420, 16
        %v4447 = vpop.permute.xlu0 %4446
        %4448 = vrot.lane.b32.xlu0 %v4419, 16
        %v4449 = vpop.permute.xlu0 %4448
        %4450 = vrot.lane.b32.xlu0 %v4423, 16
        %v4451 = vpop.permute.xlu0 %4450
        %4452 = vrot.lane.b32.xlu0 %v4422, 16
        %v4453 = vpop.permute.xlu0 %4452
        %4454 = vrot.lane.b32.xlu0 %v4426, 16
        %v4455 = vpop.permute.xlu0 %4454
        %4456 = vrot.lane.b32.xlu0 %v4425, 16
        %v4457 = vpop.permute.xlu0 %4456
        %4458 = vrot.lane.b32.xlu0 %v4429, 16
        %v4459 = vpop.permute.xlu0 %4458
        %4460 = vrot.lane.b32.xlu0 %v4428, 16
        %v4461 = vpop.permute.xlu0 %4460
        %v4462 = vpack.c.b16 %v4216, %v4215
        %v4463 = vpack.c.b16 %v4219, %v4218
        %v4464 = vpack.c.b16 %v4222, %v4221
        %v4465 = vpack.c.b16 %v4225, %v4224
        %v4466 = vpack.c.b16 %v4228, %v4227
        %v4467 = vpack.c.b16 %v4231, %v4230
        %v4468 = vpack.c.b16 %v4234, %v4233
        %v4469 = vpack.c.b16 %v4237, %v4236
        %v4471 = vshrl.u32 %v4462, 16
        %v4473 = vrot.slane %v4471, 5
        %v4474 = vshll.u32 %v4462, 16
        %v4476 = vrot.slane %v4474, 6
        %v4477 = vor.u32 %v4473, %v4476
        %v4479 = vshrl.u32 %v4463, 16
        %v4481 = vrot.slane %v4479, 5
        %v4482 = vshll.u32 %v4463, 16
        %v4484 = vrot.slane %v4482, 6
        %v4485 = vor.u32 %v4481, %v4484
        %v4487 = vshrl.u32 %v4464, 16
        %v4489 = vrot.slane %v4487, 5
        %v4490 = vshll.u32 %v4464, 16
        %v4492 = vrot.slane %v4490, 6
        %v4493 = vor.u32 %v4489, %v4492
        %v4495 = vshrl.u32 %v4465, 16
        %v4497 = vrot.slane %v4495, 5
        %v4498 = vshll.u32 %v4465, 16
        %v4500 = vrot.slane %v4498, 6
        %v4501 = vor.u32 %v4497, %v4500
        %v4503 = vshrl.u32 %v4466, 16
        %v4505 = vrot.slane %v4503, 5
        %v4506 = vshll.u32 %v4466, 16
        %v4508 = vrot.slane %v4506, 6
        %v4509 = vor.u32 %v4505, %v4508
        %v4511 = vshrl.u32 %v4467, 16
        %v4513 = vrot.slane %v4511, 5
        %v4514 = vshll.u32 %v4467, 16
        %v4516 = vrot.slane %v4514, 6
        %v4517 = vor.u32 %v4513, %v4516
        %v4519 = vshrl.u32 %v4468, 16
        %v4521 = vrot.slane %v4519, 5
        %v4522 = vshll.u32 %v4468, 16
        %v4524 = vrot.slane %v4522, 6
        %v4525 = vor.u32 %v4521, %v4524
        %v4527 = vshrl.u32 %v4469, 16
        %v4529 = vrot.slane %v4527, 5
        %v4530 = vshll.u32 %v4469, 16
        %v4532 = vrot.slane %v4530, 6
        %v4533 = vor.u32 %v4529, %v4532
        %4534 = vrot.lane.b32.xlu0 %v4477, 24
        %v4535 = vpop.permute.xlu0 %4534
        %4536 = vrot.lane.b32.xlu0 %v4485, 24
        %v4537 = vpop.permute.xlu0 %4536
        %4538 = vrot.lane.b32.xlu0 %v4493, 24
        %v4539 = vpop.permute.xlu0 %4538
        %4540 = vrot.lane.b32.xlu0 %v4501, 24
        %v4541 = vpop.permute.xlu0 %4540
        %4542 = vrot.lane.b32.xlu0 %v4509, 24
        %v4543 = vpop.permute.xlu0 %4542
        %4544 = vrot.lane.b32.xlu0 %v4517, 24
        %v4545 = vpop.permute.xlu0 %4544
        %4546 = vrot.lane.b32.xlu0 %v4525, 24
        %v4547 = vpop.permute.xlu0 %4546
        %4548 = vrot.lane.b32.xlu0 %v4533, 24
        %v4549 = vpop.permute.xlu0 %4548
        %v4558 = vunpack.c.l.b16 %v4161
        %v4559 = vunpack.c.l.b16 %v4165
        %v4560 = vunpack.c.l.b16 %v4169
        %v4561 = vunpack.c.l.b16 %v4173
        %v4562 = vunpack.c.l.b16 %v4177
        %v4563 = vunpack.c.l.b16 %v4181
        %v4564 = vunpack.c.l.b16 %v4185
        %v4565 = vunpack.c.l.b16 %v4189
        %v4566 = vpack.c.b16 %v4558, %v4558
        %v4567 = vpack.c.b16 %v4559, %v4559
        %v4568 = vpack.c.b16 %v4560, %v4560
        %v4569 = vpack.c.b16 %v4561, %v4561
        %v4570 = vpack.c.b16 %v4562, %v4562
        %v4571 = vpack.c.b16 %v4563, %v4563
        %v4572 = vpack.c.b16 %v4564, %v4564
        %v4573 = vpack.c.b16 %v4565, %v4565
        %v4574 = vrot.slane %v4462, 6
        %v4575 = vrot.slane %v4566, 6
        %v4576 = vsel %vm787, %v4574, %v4575
        %v4577 = vrot.slane %v4463, 6
        %v4578 = vrot.slane %v4567, 6
        %v4579 = vsel %vm787, %v4577, %v4578
        %v4580 = vrot.slane %v4464, 6
        %v4581 = vrot.slane %v4568, 6
        %v4582 = vsel %vm787, %v4580, %v4581
        %v4583 = vrot.slane %v4465, 6
        %v4584 = vrot.slane %v4569, 6
        %v4585 = vsel %vm787, %v4583, %v4584
        %v4586 = vrot.slane %v4466, 6
        %v4587 = vrot.slane %v4570, 6
        %v4588 = vsel %vm787, %v4586, %v4587
        %v4589 = vrot.slane %v4467, 6
        %v4590 = vrot.slane %v4571, 6
        %v4591 = vsel %vm787, %v4589, %v4590
        %v4592 = vrot.slane %v4468, 6
        %v4593 = vrot.slane %v4572, 6
        %v4594 = vsel %vm787, %v4592, %v4593
        %v4595 = vrot.slane %v4469, 6
        %v4596 = vrot.slane %v4573, 6
        %v4597 = vsel %vm787, %v4595, %v4596
        %4598 = vrot.lane.b32.xlu0 %v4574, 32
        %v4599 = vpop.permute.xlu0 %4598
        %4600 = vrot.lane.b32.xlu0 %v4576, 32
        %v4601 = vpop.permute.xlu0 %4600
        %4602 = vrot.lane.b32.xlu0 %v4577, 32
        %v4603 = vpop.permute.xlu0 %4602
        %4604 = vrot.lane.b32.xlu0 %v4579, 32
        %v4605 = vpop.permute.xlu0 %4604
        %4606 = vrot.lane.b32.xlu0 %v4580, 32
        %v4607 = vpop.permute.xlu0 %4606
        %4608 = vrot.lane.b32.xlu0 %v4582, 32
        %v4609 = vpop.permute.xlu0 %4608
        %4610 = vrot.lane.b32.xlu0 %v4583, 32
        %v4611 = vpop.permute.xlu0 %4610
        %4612 = vrot.lane.b32.xlu0 %v4585, 32
        %v4613 = vpop.permute.xlu0 %4612
        %4614 = vrot.lane.b32.xlu0 %v4586, 32
        %v4615 = vpop.permute.xlu0 %4614
        %4616 = vrot.lane.b32.xlu0 %v4588, 32
        %v4617 = vpop.permute.xlu0 %4616
        %4618 = vrot.lane.b32.xlu0 %v4589, 32
        %v4619 = vpop.permute.xlu0 %4618
        %4620 = vrot.lane.b32.xlu0 %v4591, 32
        %v4621 = vpop.permute.xlu0 %4620
        %4622 = vrot.lane.b32.xlu0 %v4592, 32
        %v4623 = vpop.permute.xlu0 %4622
        %4624 = vrot.lane.b32.xlu0 %v4594, 32
        %v4625 = vpop.permute.xlu0 %4624
        %4626 = vrot.lane.b32.xlu0 %v4595, 32
        %v4627 = vpop.permute.xlu0 %4626
        %4628 = vrot.lane.b32.xlu0 %v4597, 32
        %v4629 = vpop.permute.xlu0 %4628
        %v4630 = vrot.slane %v4471, 6
        %v4631 = vrot.slane %v4474, 7
        %v4632 = vor.u32 %v4630, %v4631
        %v4634 = vshrl.u32 %v4566, 16
        %v4636 = vrot.slane %v4634, 6
        %v4637 = vshll.u32 %v4566, 16
        %v4639 = vrot.slane %v4637, 7
        %v4640 = vor.u32 %v4636, %v4639
        %v4641 = vsel %vm844, %v4632, %v4640
        %v4642 = vrot.slane %v4479, 6
        %v4643 = vrot.slane %v4482, 7
        %v4644 = vor.u32 %v4642, %v4643
        %v4646 = vshrl.u32 %v4567, 16
        %v4648 = vrot.slane %v4646, 6
        %v4649 = vshll.u32 %v4567, 16
        %v4651 = vrot.slane %v4649, 7
        %v4652 = vor.u32 %v4648, %v4651
        %v4653 = vsel %vm844, %v4644, %v4652
        %v4654 = vrot.slane %v4487, 6
        %v4655 = vrot.slane %v4490, 7
        %v4656 = vor.u32 %v4654, %v4655
        %v4658 = vshrl.u32 %v4568, 16
        %v4660 = vrot.slane %v4658, 6
        %v4661 = vshll.u32 %v4568, 16
        %v4663 = vrot.slane %v4661, 7
        %v4664 = vor.u32 %v4660, %v4663
        %v4665 = vsel %vm844, %v4656, %v4664
        %v4666 = vrot.slane %v4495, 6
        %v4667 = vrot.slane %v4498, 7
        %v4668 = vor.u32 %v4666, %v4667
        %v4670 = vshrl.u32 %v4569, 16
        %v4672 = vrot.slane %v4670, 6
        %v4673 = vshll.u32 %v4569, 16
        %v4675 = vrot.slane %v4673, 7
        %v4676 = vor.u32 %v4672, %v4675
        %v4677 = vsel %vm844, %v4668, %v4676
        %v4678 = vrot.slane %v4503, 6
        %v4679 = vrot.slane %v4506, 7
        %v4680 = vor.u32 %v4678, %v4679
        %v4682 = vshrl.u32 %v4570, 16
        %v4684 = vrot.slane %v4682, 6
        %v4685 = vshll.u32 %v4570, 16
        %v4687 = vrot.slane %v4685, 7
        %v4688 = vor.u32 %v4684, %v4687
        %v4689 = vsel %vm844, %v4680, %v4688
        %v4690 = vrot.slane %v4511, 6
        %v4691 = vrot.slane %v4514, 7
        %v4692 = vor.u32 %v4690, %v4691
        %v4694 = vshrl.u32 %v4571, 16
        %v4696 = vrot.slane %v4694, 6
        %v4697 = vshll.u32 %v4571, 16
        %v4699 = vrot.slane %v4697, 7
        %v4700 = vor.u32 %v4696, %v4699
        %v4701 = vsel %vm844, %v4692, %v4700
        %v4702 = vrot.slane %v4519, 6
        %v4703 = vrot.slane %v4522, 7
        %v4704 = vor.u32 %v4702, %v4703
        %v4706 = vshrl.u32 %v4572, 16
        %v4708 = vrot.slane %v4706, 6
        %v4709 = vshll.u32 %v4572, 16
        %v4711 = vrot.slane %v4709, 7
        %v4712 = vor.u32 %v4708, %v4711
        %v4713 = vsel %vm844, %v4704, %v4712
        %v4714 = vrot.slane %v4527, 6
        %v4715 = vrot.slane %v4530, 7
        %v4716 = vor.u32 %v4714, %v4715
        %v4718 = vshrl.u32 %v4573, 16
        %v4720 = vrot.slane %v4718, 6
        %v4721 = vshll.u32 %v4573, 16
        %v4723 = vrot.slane %v4721, 7
        %v4724 = vor.u32 %v4720, %v4723
        %v4725 = vsel %vm844, %v4716, %v4724
        %4726 = vrot.lane.b32.xlu0 %v4632, 40
        %v4727 = vpop.permute.xlu0 %4726
        %4728 = vrot.lane.b32.xlu0 %v4641, 40
        %v4729 = vpop.permute.xlu0 %4728
        %4730 = vrot.lane.b32.xlu0 %v4644, 40
        %v4731 = vpop.permute.xlu0 %4730
        %4732 = vrot.lane.b32.xlu0 %v4653, 40
        %v4733 = vpop.permute.xlu0 %4732
        %4734 = vrot.lane.b32.xlu0 %v4656, 40
        %v4735 = vpop.permute.xlu0 %4734
        %4736 = vrot.lane.b32.xlu0 %v4665, 40
        %v4737 = vpop.permute.xlu0 %4736
        %4738 = vrot.lane.b32.xlu0 %v4668, 40
        %v4739 = vpop.permute.xlu0 %4738
        %4740 = vrot.lane.b32.xlu0 %v4677, 40
        %v4741 = vpop.permute.xlu0 %4740
        %4742 = vrot.lane.b32.xlu0 %v4680, 40
        %v4743 = vpop.permute.xlu0 %4742
        %4744 = vrot.lane.b32.xlu0 %v4689, 40
        %v4745 = vpop.permute.xlu0 %4744
        %4746 = vrot.lane.b32.xlu0 %v4692, 40
        %v4747 = vpop.permute.xlu0 %4746
        %4748 = vrot.lane.b32.xlu0 %v4701, 40
        %v4749 = vpop.permute.xlu0 %4748
        %4750 = vrot.lane.b32.xlu0 %v4704, 40
        %v4751 = vpop.permute.xlu0 %4750
        %4752 = vrot.lane.b32.xlu0 %v4713, 40
        %v4753 = vpop.permute.xlu0 %4752
        %4754 = vrot.lane.b32.xlu0 %v4716, 40
        %v4755 = vpop.permute.xlu0 %4754
        %4756 = vrot.lane.b32.xlu0 %v4725, 40
        %v4757 = vpop.permute.xlu0 %4756
        %v4759 = vsel %vm973, %v4238, %v4375
        %v4761 = vsel %vm973, %v4239, %v4377
        %v4763 = vsel %vm973, %v4240, %v4379
        %v4765 = vsel %vm973, %v4241, %v4381
        %v4767 = vsel %vm973, %v4242, %v4383
        %v4769 = vsel %vm973, %v4243, %v4385
        %v4771 = vsel %vm973, %v4244, %v4387
        %v4773 = vsel %vm973, %v4245, %v4389
        %v4775 = vsel %vm973, %v4246, %v4391
        %v4777 = vsel %vm973, %v4247, %v4393
        %v4779 = vsel %vm973, %v4248, %v4395
        %v4781 = vsel %vm973, %v4249, %v4397
        %v4783 = vsel %vm973, %v4250, %v4399
        %v4785 = vsel %vm973, %v4251, %v4401
        %v4787 = vsel %vm973, %v4252, %v4403
        %v4789 = vsel %vm973, %v4253, %v4405
        %v4791 = vsel %vm1006, %v4759, %v4431
        %v4793 = vsel %vm1006, %v4761, %v4433
        %v4795 = vsel %vm1006, %v4763, %v4435
        %v4797 = vsel %vm1006, %v4765, %v4437
        %v4799 = vsel %vm1006, %v4767, %v4439
        %v4801 = vsel %vm1006, %v4769, %v4441
        %v4803 = vsel %vm1006, %v4771, %v4443
        %v4805 = vsel %vm1006, %v4773, %v4445
        %v4807 = vsel %vm1006, %v4775, %v4447
        %v4809 = vsel %vm1006, %v4777, %v4449
        %v4811 = vsel %vm1006, %v4779, %v4451
        %v4813 = vsel %vm1006, %v4781, %v4453
        %v4815 = vsel %vm1006, %v4783, %v4455
        %v4817 = vsel %vm1006, %v4785, %v4457
        %v4819 = vsel %vm1006, %v4787, %v4459
        %v4821 = vsel %vm1006, %v4789, %v4461
        %v4823 = vsel %vm1039, %v4791, %v4535
        %v4824 = vsel %vm1039, %v4793, %v4535
        %v4826 = vsel %vm1039, %v4795, %v4537
        %v4827 = vsel %vm1039, %v4797, %v4537
        %v4829 = vsel %vm1039, %v4799, %v4539
        %v4830 = vsel %vm1039, %v4801, %v4539
        %v4832 = vsel %vm1039, %v4803, %v4541
        %v4833 = vsel %vm1039, %v4805, %v4541
        %v4835 = vsel %vm1039, %v4807, %v4543
        %v4836 = vsel %vm1039, %v4809, %v4543
        %v4838 = vsel %vm1039, %v4811, %v4545
        %v4839 = vsel %vm1039, %v4813, %v4545
        %v4841 = vsel %vm1039, %v4815, %v4547
        %v4842 = vsel %vm1039, %v4817, %v4547
        %v4844 = vsel %vm1039, %v4819, %v4549
        %v4845 = vsel %vm1039, %v4821, %v4549
        %v4847 = vsel %vm1064, %v4823, %v4599
        %v4849 = vsel %vm1064, %v4824, %v4601
        %v4851 = vsel %vm1064, %v4826, %v4603
        %v4853 = vsel %vm1064, %v4827, %v4605
        %v4855 = vsel %vm1064, %v4829, %v4607
        %v4857 = vsel %vm1064, %v4830, %v4609
        %v4859 = vsel %vm1064, %v4832, %v4611
        %v4861 = vsel %vm1064, %v4833, %v4613
        %v4863 = vsel %vm1064, %v4835, %v4615
        %v4865 = vsel %vm1064, %v4836, %v4617
        %v4867 = vsel %vm1064, %v4838, %v4619
        %v4869 = vsel %vm1064, %v4839, %v4621
        %v4871 = vsel %vm1064, %v4841, %v4623
        %v4873 = vsel %vm1064, %v4842, %v4625
        %v4875 = vsel %vm1064, %v4844, %v4627
        %v4877 = vsel %vm1064, %v4845, %v4629
        %v4879 = vsel %vm1097, %v4847, %v4727
        %v4881 = vsel %vm1097, %v4849, %v4729
        %v4883 = vsel %vm1097, %v4851, %v4731
        %v4885 = vsel %vm1097, %v4853, %v4733
        %v4887 = vsel %vm1097, %v4855, %v4735
        %v4889 = vsel %vm1097, %v4857, %v4737
        %v4891 = vsel %vm1097, %v4859, %v4739
        %v4893 = vsel %vm1097, %v4861, %v4741
        %v4895 = vsel %vm1097, %v4863, %v4743
        %v4897 = vsel %vm1097, %v4865, %v4745
        %v4899 = vsel %vm1097, %v4867, %v4747
        %v4901 = vsel %vm1097, %v4869, %v4749
        %v4903 = vsel %vm1097, %v4871, %v4751
        %v4905 = vsel %vm1097, %v4873, %v4753
        %v4907 = vsel %vm1097, %v4875, %v4755
        %v4909 = vsel %vm1097, %v4877, %v4757
        %4926 = vrot.lane.b32.xlu0 %v1855, 48
        %v4927 = vpop.permute.xlu0 %4926
        %4928 = vrot.lane.b32.xlu0 %v1857, 48
        %v4929 = vpop.permute.xlu0 %4928
        %4930 = vrot.lane.b32.xlu0 %v1859, 48
        %v4931 = vpop.permute.xlu0 %4930
        %4932 = vrot.lane.b32.xlu0 %v1861, 48
        %v4933 = vpop.permute.xlu0 %4932
        %4934 = vrot.lane.b32.xlu0 %v1863, 48
        %v4935 = vpop.permute.xlu0 %4934
        %4936 = vrot.lane.b32.xlu0 %v1865, 48
        %v4937 = vpop.permute.xlu0 %4936
        %4938 = vrot.lane.b32.xlu0 %v1867, 48
        %v4939 = vpop.permute.xlu0 %4938
        %4940 = vrot.lane.b32.xlu0 %v1869, 48
        %v4941 = vpop.permute.xlu0 %4940
        %4942 = vrot.lane.b32.xlu0 %v1871, 48
        %v4943 = vpop.permute.xlu0 %4942
        %4944 = vrot.lane.b32.xlu0 %v1873, 48
        %v4945 = vpop.permute.xlu0 %4944
        %4946 = vrot.lane.b32.xlu0 %v1875, 48
        %v4947 = vpop.permute.xlu0 %4946
        %4948 = vrot.lane.b32.xlu0 %v1877, 48
        %v4949 = vpop.permute.xlu0 %4948
        %4950 = vrot.lane.b32.xlu0 %v1879, 48
        %v4951 = vpop.permute.xlu0 %4950
        %4952 = vrot.lane.b32.xlu0 %v1881, 48
        %v4953 = vpop.permute.xlu0 %4952
        %4954 = vrot.lane.b32.xlu0 %v1883, 48
        %v4955 = vpop.permute.xlu0 %4954
        %4956 = vrot.lane.b32.xlu0 %v1885, 48
        %v4957 = vpop.permute.xlu0 %4956
        %4974 = vrot.lane.b32.xlu0 %v2611, 96
        %v4975 = vpop.permute.xlu0 %4974
        %4976 = vrot.lane.b32.xlu0 %v2613, 96
        %v4977 = vpop.permute.xlu0 %4976
        %4978 = vrot.lane.b32.xlu0 %v2615, 96
        %v4979 = vpop.permute.xlu0 %4978
        %4980 = vrot.lane.b32.xlu0 %v2617, 96
        %v4981 = vpop.permute.xlu0 %4980
        %4982 = vrot.lane.b32.xlu0 %v2619, 96
        %v4983 = vpop.permute.xlu0 %4982
        %4984 = vrot.lane.b32.xlu0 %v2621, 96
        %v4985 = vpop.permute.xlu0 %4984
        %4986 = vrot.lane.b32.xlu0 %v2623, 96
        %v4987 = vpop.permute.xlu0 %4986
        %4988 = vrot.lane.b32.xlu0 %v2625, 96
        %v4989 = vpop.permute.xlu0 %4988
        %4990 = vrot.lane.b32.xlu0 %v2627, 96
        %v4991 = vpop.permute.xlu0 %4990
        %4992 = vrot.lane.b32.xlu0 %v2629, 96
        %v4993 = vpop.permute.xlu0 %4992
        %4994 = vrot.lane.b32.xlu0 %v2631, 96
        %v4995 = vpop.permute.xlu0 %4994
        %4996 = vrot.lane.b32.xlu0 %v2633, 96
        %v4997 = vpop.permute.xlu0 %4996
        %4998 = vrot.lane.b32.xlu0 %v2635, 96
        %v4999 = vpop.permute.xlu0 %4998
        %5000 = vrot.lane.b32.xlu0 %v2637, 96
        %v5001 = vpop.permute.xlu0 %5000
        %5002 = vrot.lane.b32.xlu0 %v2639, 96
        %v5003 = vpop.permute.xlu0 %5002
        %5004 = vrot.lane.b32.xlu0 %v2641, 96
        %v5005 = vpop.permute.xlu0 %5004
        %5022 = vrot.lane.b32.xlu0 %v3367, 16
        %v5023 = vpop.permute.xlu0 %5022
        %5024 = vrot.lane.b32.xlu0 %v3369, 16
        %v5025 = vpop.permute.xlu0 %5024
        %5026 = vrot.lane.b32.xlu0 %v3371, 16
        %v5027 = vpop.permute.xlu0 %5026
        %5028 = vrot.lane.b32.xlu0 %v3373, 16
        %v5029 = vpop.permute.xlu0 %5028
        %5030 = vrot.lane.b32.xlu0 %v3375, 16
        %v5031 = vpop.permute.xlu0 %5030
        %5032 = vrot.lane.b32.xlu0 %v3377, 16
        %v5033 = vpop.permute.xlu0 %5032
        %5034 = vrot.lane.b32.xlu0 %v3379, 16
        %v5035 = vpop.permute.xlu0 %5034
        %5036 = vrot.lane.b32.xlu0 %v3381, 16
        %v5037 = vpop.permute.xlu0 %5036
        %5038 = vrot.lane.b32.xlu0 %v3383, 16
        %v5039 = vpop.permute.xlu0 %5038
        %5040 = vrot.lane.b32.xlu0 %v3385, 16
        %v5041 = vpop.permute.xlu0 %5040
        %5042 = vrot.lane.b32.xlu0 %v3387, 16
        %v5043 = vpop.permute.xlu0 %5042
        %5044 = vrot.lane.b32.xlu0 %v3389, 16
        %v5045 = vpop.permute.xlu0 %5044
        %5046 = vrot.lane.b32.xlu0 %v3391, 16
        %v5047 = vpop.permute.xlu0 %5046
        %5048 = vrot.lane.b32.xlu0 %v3393, 16
        %v5049 = vpop.permute.xlu0 %5048
        %5050 = vrot.lane.b32.xlu0 %v3395, 16
        %v5051 = vpop.permute.xlu0 %5050
        %5052 = vrot.lane.b32.xlu0 %v3397, 16
        %v5053 = vpop.permute.xlu0 %5052
        %5070 = vrot.lane.b32.xlu0 %v4123, 64
        %v5071 = vpop.permute.xlu0 %5070
        %5072 = vrot.lane.b32.xlu0 %v4125, 64
        %v5073 = vpop.permute.xlu0 %5072
        %5074 = vrot.lane.b32.xlu0 %v4127, 64
        %v5075 = vpop.permute.xlu0 %5074
        %5076 = vrot.lane.b32.xlu0 %v4129, 64
        %v5077 = vpop.permute.xlu0 %5076
        %5078 = vrot.lane.b32.xlu0 %v4131, 64
        %v5079 = vpop.permute.xlu0 %5078
        %5080 = vrot.lane.b32.xlu0 %v4133, 64
        %v5081 = vpop.permute.xlu0 %5080
        %5082 = vrot.lane.b32.xlu0 %v4135, 64
        %v5083 = vpop.permute.xlu0 %5082
        %5084 = vrot.lane.b32.xlu0 %v4137, 64
        %v5085 = vpop.permute.xlu0 %5084
        %5086 = vrot.lane.b32.xlu0 %v4139, 64
        %v5087 = vpop.permute.xlu0 %5086
        %5088 = vrot.lane.b32.xlu0 %v4141, 64
        %v5089 = vpop.permute.xlu0 %5088
        %5090 = vrot.lane.b32.xlu0 %v4143, 64
        %v5091 = vpop.permute.xlu0 %5090
        %5092 = vrot.lane.b32.xlu0 %v4145, 64
        %v5093 = vpop.permute.xlu0 %5092
        %5094 = vrot.lane.b32.xlu0 %v4147, 64
        %v5095 = vpop.permute.xlu0 %5094
        %5096 = vrot.lane.b32.xlu0 %v4149, 64
        %v5097 = vpop.permute.xlu0 %5096
        %5098 = vrot.lane.b32.xlu0 %v4151, 64
        %v5099 = vpop.permute.xlu0 %5098
        %5100 = vrot.lane.b32.xlu0 %v4153, 64
        %v5101 = vpop.permute.xlu0 %5100
        %5118 = vrot.lane.b32.xlu0 %v4879, 112
        %v5119 = vpop.permute.xlu0 %5118
        %5120 = vrot.lane.b32.xlu0 %v4881, 112
        %v5121 = vpop.permute.xlu0 %5120
        %5122 = vrot.lane.b32.xlu0 %v4883, 112
        %v5123 = vpop.permute.xlu0 %5122
        %5124 = vrot.lane.b32.xlu0 %v4885, 112
        %v5125 = vpop.permute.xlu0 %5124
        %5126 = vrot.lane.b32.xlu0 %v4887, 112
        %v5127 = vpop.permute.xlu0 %5126
        %5128 = vrot.lane.b32.xlu0 %v4889, 112
        %v5129 = vpop.permute.xlu0 %5128
        %5130 = vrot.lane.b32.xlu0 %v4891, 112
        %v5131 = vpop.permute.xlu0 %5130
        %5132 = vrot.lane.b32.xlu0 %v4893, 112
        %v5133 = vpop.permute.xlu0 %5132
        %5134 = vrot.lane.b32.xlu0 %v4895, 112
        %v5135 = vpop.permute.xlu0 %5134
        %5136 = vrot.lane.b32.xlu0 %v4897, 112
        %v5137 = vpop.permute.xlu0 %5136
        %5138 = vrot.lane.b32.xlu0 %v4899, 112
        %v5139 = vpop.permute.xlu0 %5138
        %5140 = vrot.lane.b32.xlu0 %v4901, 112
        %v5141 = vpop.permute.xlu0 %5140
        %5142 = vrot.lane.b32.xlu0 %v4903, 112
        %v5143 = vpop.permute.xlu0 %5142
        %5144 = vrot.lane.b32.xlu0 %v4905, 112
        %v5145 = vpop.permute.xlu0 %5144
        %5146 = vrot.lane.b32.xlu0 %v4907, 112
        %v5147 = vpop.permute.xlu0 %5146
        %5148 = vrot.lane.b32.xlu0 %v4909, 112
        %v5149 = vpop.permute.xlu0 %5148
        %vm5150 = vcmask 392192
        %v5152 = vsel %vm5150, %v1099, %v4927
        %v5154 = vsel %vm5150, %v1101, %v4929
        %v5156 = vsel %vm5150, %v1103, %v4931
        %v5158 = vsel %vm5150, %v1105, %v4933
        %v5160 = vsel %vm5150, %v1107, %v4935
        %v5162 = vsel %vm5150, %v1109, %v4937
        %v5164 = vsel %vm5150, %v1111, %v4939
        %v5166 = vsel %vm5150, %v1113, %v4941
        %v5168 = vsel %vm5150, %v1115, %v4943
        %v5170 = vsel %vm5150, %v1117, %v4945
        %v5172 = vsel %vm5150, %v1119, %v4947
        %v5174 = vsel %vm5150, %v1121, %v4949
        %v5176 = vsel %vm5150, %v1123, %v4951
        %v5178 = vsel %vm5150, %v1125, %v4953
        %v5180 = vsel %vm5150, %v1127, %v4955
        %v5182 = vsel %vm5150, %v1129, %v4957
        %vm5183 = vcmask 785408
        %v5185 = vsel %vm5183, %v5152, %v4975
        %v5187 = vsel %vm5183, %v5154, %v4977
        %v5189 = vsel %vm5183, %v5156, %v4979
        %v5191 = vsel %vm5183, %v5158, %v4981
        %v5193 = vsel %vm5183, %v5160, %v4983
        %v5195 = vsel %vm5183, %v5162, %v4985
        %v5197 = vsel %vm5183, %v5164, %v4987
        %v5199 = vsel %vm5183, %v5166, %v4989
        %v5201 = vsel %vm5183, %v5168, %v4991
        %v5203 = vsel %vm5183, %v5170, %v4993
        %v5205 = vsel %vm5183, %v5172, %v4995
        %v5207 = vsel %vm5183, %v5174, %v4997
        %v5209 = vsel %vm5183, %v5176, %v4999
        %v5211 = vsel %vm5183, %v5178, %v5001
        %v5213 = vsel %vm5183, %v5180, %v5003
        %v5215 = vsel %vm5183, %v5182, %v5005
        %v5217 = vsel %vm1006, %v4975, %v5023
        %v5219 = vsel %vm1006, %v4977, %v5025
        %v5221 = vsel %vm1006, %v4979, %v5027
        %v5223 = vsel %vm1006, %v4981, %v5029
        %v5225 = vsel %vm1006, %v4983, %v5031
        %v5227 = vsel %vm1006, %v4985, %v5033
        %v5229 = vsel %vm1006, %v4987, %v5035
        %v5231 = vsel %vm1006, %v4989, %v5037
        %v5233 = vsel %vm1006, %v4991, %v5039
        %v5235 = vsel %vm1006, %v4993, %v5041
        %v5237 = vsel %vm1006, %v4995, %v5043
        %v5239 = vsel %vm1006, %v4997, %v5045
        %v5241 = vsel %vm1006, %v4999, %v5047
        %v5243 = vsel %vm1006, %v5001, %v5049
        %v5245 = vsel %vm1006, %v5003, %v5051
        %v5247 = vsel %vm1006, %v5005, %v5053
        %vm5248 = vcmask 523264
        %v5250 = vsel %vm5248, %v5217, %v5071
        %v5252 = vsel %vm5248, %v5219, %v5073
        %v5254 = vsel %vm5248, %v5221, %v5075
        %v5256 = vsel %vm5248, %v5223, %v5077
        %v5258 = vsel %vm5248, %v5225, %v5079
        %v5260 = vsel %vm5248, %v5227, %v5081
        %v5262 = vsel %vm5248, %v5229, %v5083
        %v5264 = vsel %vm5248, %v5231, %v5085
        %v5266 = vsel %vm5248, %v5233, %v5087
        %v5268 = vsel %vm5248, %v5235, %v5089
        %v5270 = vsel %vm5248, %v5237, %v5091
        %v5272 = vsel %vm5248, %v5239, %v5093
        %v5274 = vsel %vm5248, %v5241, %v5095
        %v5276 = vsel %vm5248, %v5243, %v5097
        %v5278 = vsel %vm5248, %v5245, %v5099
        %v5280 = vsel %vm5248, %v5247, %v5101
        %vm5281 = vcmask 916480
        %v5283 = vsel %vm5281, %v5250, %v5119
        %v5285 = vsel %vm5281, %v5252, %v5121
        %v5287 = vsel %vm5281, %v5254, %v5123
        %v5289 = vsel %vm5281, %v5256, %v5125
        %v5291 = vsel %vm5281, %v5258, %v5127
        %v5293 = vsel %vm5281, %v5260, %v5129
        %v5295 = vsel %vm5281, %v5262, %v5131
        %v5297 = vsel %vm5281, %v5264, %v5133
        %v5299 = vsel %vm5281, %v5266, %v5135
        %v5301 = vsel %vm5281, %v5268, %v5137
        %v5303 = vsel %vm5281, %v5270, %v5139
        %v5305 = vsel %vm5281, %v5272, %v5141
        %v5307 = vsel %vm5281, %v5274, %v5143
        %v5309 = vsel %vm5281, %v5276, %v5145
        %v5311 = vsel %vm5281, %v5278, %v5147
        %v5313 = vsel %vm5281, %v5280, %v5149
        %vm5314 = vsmask.f32 5376
        %v5315 = vshrl.u32 %v5185, 16
        %v5317 = vrot.slane %v5315, 2
        %v5318 = vshll.u32 %v5185, 16
        %v5320 = vrot.slane %v5318, 3
        %v5321 = vor.u32 %v5317, %v5320
        %v5322 = vshrl.u32 %v5187, 16
        %v5324 = vrot.slane %v5322, 2
        %v5325 = vshll.u32 %v5187, 16
        %v5327 = vrot.slane %v5325, 3
        %v5328 = vor.u32 %v5324, %v5327
        %v5329 = vsel %vm5314, %v5321, %v5328
        %v5330 = vshrl.u32 %v5283, 16
        %v5332 = vrot.slane %v5330, 2
        %v5333 = vshll.u32 %v5283, 16
        %v5335 = vrot.slane %v5333, 3
        %v5336 = vor.u32 %v5332, %v5335
        %v5337 = vshrl.u32 %v5285, 16
        %v5339 = vrot.slane %v5337, 2
        %v5340 = vshll.u32 %v5285, 16
        %v5342 = vrot.slane %v5340, 3
        %v5343 = vor.u32 %v5339, %v5342
        %v5344 = vsel %vm5314, %v5336, %v5343
        %v5345 = vshrl.u32 %v5119, 16
        %v5347 = vrot.slane %v5345, 2
        %v5348 = vshll.u32 %v5119, 16
        %v5350 = vrot.slane %v5348, 3
        %v5351 = vor.u32 %v5347, %v5350
        %v5352 = vshrl.u32 %v5121, 16
        %v5354 = vrot.slane %v5352, 2
        %v5355 = vshll.u32 %v5121, 16
        %v5357 = vrot.slane %v5355, 3
        %v5358 = vor.u32 %v5354, %v5357
        %v5359 = vsel %vm5314, %v5351, %v5358
        %v5360 = vshrl.u32 %v5189, 16
        %v5362 = vrot.slane %v5360, 2
        %v5363 = vshll.u32 %v5189, 16
        %v5365 = vrot.slane %v5363, 3
        %v5366 = vor.u32 %v5362, %v5365
        %v5367 = vshrl.u32 %v5191, 16
        %v5369 = vrot.slane %v5367, 2
        %v5370 = vshll.u32 %v5191, 16
        %v5372 = vrot.slane %v5370, 3
        %v5373 = vor.u32 %v5369, %v5372
        %v5374 = vsel %vm5314, %v5366, %v5373
        %v5375 = vshrl.u32 %v5287, 16
        %v5377 = vrot.slane %v5375, 2
        %v5378 = vshll.u32 %v5287, 16
        %v5380 = vrot.slane %v5378, 3
        %v5381 = vor.u32 %v5377, %v5380
        %v5382 = vshrl.u32 %v5289, 16
        %v5384 = vrot.slane %v5382, 2
        %v5385 = vshll.u32 %v5289, 16
        %v5387 = vrot.slane %v5385, 3
        %v5388 = vor.u32 %v5384, %v5387
        %v5389 = vsel %vm5314, %v5381, %v5388
        %v5390 = vshrl.u32 %v5123, 16
        %v5392 = vrot.slane %v5390, 2
        %v5393 = vshll.u32 %v5123, 16
        %v5395 = vrot.slane %v5393, 3
        %v5396 = vor.u32 %v5392, %v5395
        %v5397 = vshrl.u32 %v5125, 16
        %v5399 = vrot.slane %v5397, 2
        %v5400 = vshll.u32 %v5125, 16
        %v5402 = vrot.slane %v5400, 3
        %v5403 = vor.u32 %v5399, %v5402
        %v5404 = vsel %vm5314, %v5396, %v5403
        %v5405 = vshrl.u32 %v5193, 16
        %v5407 = vrot.slane %v5405, 2
        %v5408 = vshll.u32 %v5193, 16
        %v5410 = vrot.slane %v5408, 3
        %v5411 = vor.u32 %v5407, %v5410
        %v5412 = vshrl.u32 %v5195, 16
        %v5414 = vrot.slane %v5412, 2
        %v5415 = vshll.u32 %v5195, 16
        %v5417 = vrot.slane %v5415, 3
        %v5418 = vor.u32 %v5414, %v5417
        %v5419 = vsel %vm5314, %v5411, %v5418
        %v5420 = vshrl.u32 %v5291, 16
        %v5422 = vrot.slane %v5420, 2
        %v5423 = vshll.u32 %v5291, 16
        %v5425 = vrot.slane %v5423, 3
        %v5426 = vor.u32 %v5422, %v5425
        %v5427 = vshrl.u32 %v5293, 16
        %v5429 = vrot.slane %v5427, 2
        %v5430 = vshll.u32 %v5293, 16
        %v5432 = vrot.slane %v5430, 3
        %v5433 = vor.u32 %v5429, %v5432
        %v5434 = vsel %vm5314, %v5426, %v5433
        %v5435 = vshrl.u32 %v5127, 16
        %v5437 = vrot.slane %v5435, 2
        %v5438 = vshll.u32 %v5127, 16
        %v5440 = vrot.slane %v5438, 3
        %v5441 = vor.u32 %v5437, %v5440
        %v5442 = vshrl.u32 %v5129, 16
        %v5444 = vrot.slane %v5442, 2
        %v5445 = vshll.u32 %v5129, 16
        %v5447 = vrot.slane %v5445, 3
        %v5448 = vor.u32 %v5444, %v5447
        %v5449 = vsel %vm5314, %v5441, %v5448
        %v5450 = vshrl.u32 %v5197, 16
        %v5452 = vrot.slane %v5450, 2
        %v5453 = vshll.u32 %v5197, 16
        %v5455 = vrot.slane %v5453, 3
        %v5456 = vor.u32 %v5452, %v5455
        %v5457 = vshrl.u32 %v5199, 16
        %v5459 = vrot.slane %v5457, 2
        %v5460 = vshll.u32 %v5199, 16
        %v5462 = vrot.slane %v5460, 3
        %v5463 = vor.u32 %v5459, %v5462
        %v5464 = vsel %vm5314, %v5456, %v5463
        %v5465 = vshrl.u32 %v5295, 16
        %v5467 = vrot.slane %v5465, 2
        %v5468 = vshll.u32 %v5295, 16
        %v5470 = vrot.slane %v5468, 3
        %v5471 = vor.u32 %v5467, %v5470
        %v5472 = vshrl.u32 %v5297, 16
        %v5474 = vrot.slane %v5472, 2
        %v5475 = vshll.u32 %v5297, 16
        %v5477 = vrot.slane %v5475, 3
        %v5478 = vor.u32 %v5474, %v5477
        %v5479 = vsel %vm5314, %v5471, %v5478
        %v5480 = vshrl.u32 %v5131, 16
        %v5482 = vrot.slane %v5480, 2
        %v5483 = vshll.u32 %v5131, 16
        %v5485 = vrot.slane %v5483, 3
        %v5486 = vor.u32 %v5482, %v5485
        %v5487 = vshrl.u32 %v5133, 16
        %v5489 = vrot.slane %v5487, 2
        %v5490 = vshll.u32 %v5133, 16
        %v5492 = vrot.slane %v5490, 3
        %v5493 = vor.u32 %v5489, %v5492
        %v5494 = vsel %vm5314, %v5486, %v5493
        %v5495 = vshrl.u32 %v5201, 16
        %v5497 = vrot.slane %v5495, 2
        %v5498 = vshll.u32 %v5201, 16
        %v5500 = vrot.slane %v5498, 3
        %v5501 = vor.u32 %v5497, %v5500
        %v5502 = vshrl.u32 %v5203, 16
        %v5504 = vrot.slane %v5502, 2
        %v5505 = vshll.u32 %v5203, 16
        %v5507 = vrot.slane %v5505, 3
        %v5508 = vor.u32 %v5504, %v5507
        %v5509 = vsel %vm5314, %v5501, %v5508
        %v5510 = vshrl.u32 %v5299, 16
        %v5512 = vrot.slane %v5510, 2
        %v5513 = vshll.u32 %v5299, 16
        %v5515 = vrot.slane %v5513, 3
        %v5516 = vor.u32 %v5512, %v5515
        %v5517 = vshrl.u32 %v5301, 16
        %v5519 = vrot.slane %v5517, 2
        %v5520 = vshll.u32 %v5301, 16
        %v5522 = vrot.slane %v5520, 3
        %v5523 = vor.u32 %v5519, %v5522
        %v5524 = vsel %vm5314, %v5516, %v5523
        %v5525 = vshrl.u32 %v5135, 16
        %v5527 = vrot.slane %v5525, 2
        %v5528 = vshll.u32 %v5135, 16
        %v5530 = vrot.slane %v5528, 3
        %v5531 = vor.u32 %v5527, %v5530
        %v5532 = vshrl.u32 %v5137, 16
        %v5534 = vrot.slane %v5532, 2
        %v5535 = vshll.u32 %v5137, 16
        %v5537 = vrot.slane %v5535, 3
        %v5538 = vor.u32 %v5534, %v5537
        %v5539 = vsel %vm5314, %v5531, %v5538
        %v5540 = vshrl.u32 %v5205, 16
        %v5542 = vrot.slane %v5540, 2
        %v5543 = vshll.u32 %v5205, 16
        %v5545 = vrot.slane %v5543, 3
        %v5546 = vor.u32 %v5542, %v5545
        %v5547 = vshrl.u32 %v5207, 16
        %v5549 = vrot.slane %v5547, 2
        %v5550 = vshll.u32 %v5207, 16
        %v5552 = vrot.slane %v5550, 3
        %v5553 = vor.u32 %v5549, %v5552
        %v5554 = vsel %vm5314, %v5546, %v5553
        %v5555 = vshrl.u32 %v5303, 16
        %v5557 = vrot.slane %v5555, 2
        %v5558 = vshll.u32 %v5303, 16
        %v5560 = vrot.slane %v5558, 3
        %v5561 = vor.u32 %v5557, %v5560
        %v5562 = vshrl.u32 %v5305, 16
        %v5564 = vrot.slane %v5562, 2
        %v5565 = vshll.u32 %v5305, 16
        %v5567 = vrot.slane %v5565, 3
        %v5568 = vor.u32 %v5564, %v5567
        %v5569 = vsel %vm5314, %v5561, %v5568
        %v5570 = vshrl.u32 %v5139, 16
        %v5572 = vrot.slane %v5570, 2
        %v5573 = vshll.u32 %v5139, 16
        %v5575 = vrot.slane %v5573, 3
        %v5576 = vor.u32 %v5572, %v5575
        %v5577 = vshrl.u32 %v5141, 16
        %v5579 = vrot.slane %v5577, 2
        %v5580 = vshll.u32 %v5141, 16
        %v5582 = vrot.slane %v5580, 3
        %v5583 = vor.u32 %v5579, %v5582
        %v5584 = vsel %vm5314, %v5576, %v5583
        %v5585 = vshrl.u32 %v5209, 16
        %v5587 = vrot.slane %v5585, 2
        %v5588 = vshll.u32 %v5209, 16
        %v5590 = vrot.slane %v5588, 3
        %v5591 = vor.u32 %v5587, %v5590
        %v5592 = vshrl.u32 %v5211, 16
        %v5594 = vrot.slane %v5592, 2
        %v5595 = vshll.u32 %v5211, 16
        %v5597 = vrot.slane %v5595, 3
        %v5598 = vor.u32 %v5594, %v5597
        %v5599 = vsel %vm5314, %v5591, %v5598
        %v5600 = vshrl.u32 %v5307, 16
        %v5602 = vrot.slane %v5600, 2
        %v5603 = vshll.u32 %v5307, 16
        %v5605 = vrot.slane %v5603, 3
        %v5606 = vor.u32 %v5602, %v5605
        %v5607 = vshrl.u32 %v5309, 16
        %v5609 = vrot.slane %v5607, 2
        %v5610 = vshll.u32 %v5309, 16
        %v5612 = vrot.slane %v5610, 3
        %v5613 = vor.u32 %v5609, %v5612
        %v5614 = vsel %vm5314, %v5606, %v5613
        %v5615 = vshrl.u32 %v5143, 16
        %v5617 = vrot.slane %v5615, 2
        %v5618 = vshll.u32 %v5143, 16
        %v5620 = vrot.slane %v5618, 3
        %v5621 = vor.u32 %v5617, %v5620
        %v5622 = vshrl.u32 %v5145, 16
        %v5624 = vrot.slane %v5622, 2
        %v5625 = vshll.u32 %v5145, 16
        %v5627 = vrot.slane %v5625, 3
        %v5628 = vor.u32 %v5624, %v5627
        %v5629 = vsel %vm5314, %v5621, %v5628
        %v5630 = vshrl.u32 %v5213, 16
        %v5632 = vrot.slane %v5630, 2
        %v5633 = vshll.u32 %v5213, 16
        %v5635 = vrot.slane %v5633, 3
        %v5636 = vor.u32 %v5632, %v5635
        %v5637 = vshrl.u32 %v5215, 16
        %v5639 = vrot.slane %v5637, 2
        %v5640 = vshll.u32 %v5215, 16
        %v5642 = vrot.slane %v5640, 3
        %v5643 = vor.u32 %v5639, %v5642
        %v5644 = vsel %vm5314, %v5636, %v5643
        %v5645 = vshrl.u32 %v5311, 16
        %v5647 = vrot.slane %v5645, 2
        %v5648 = vshll.u32 %v5311, 16
        %v5650 = vrot.slane %v5648, 3
        %v5651 = vor.u32 %v5647, %v5650
        %v5652 = vshrl.u32 %v5313, 16
        %v5654 = vrot.slane %v5652, 2
        %v5655 = vshll.u32 %v5313, 16
        %v5657 = vrot.slane %v5655, 3
        %v5658 = vor.u32 %v5654, %v5657
        %v5659 = vsel %vm5314, %v5651, %v5658
        %v5660 = vshrl.u32 %v5147, 16
        %v5662 = vrot.slane %v5660, 2
        %v5663 = vshll.u32 %v5147, 16
        %v5665 = vrot.slane %v5663, 3
        %v5666 = vor.u32 %v5662, %v5665
        %v5667 = vshrl.u32 %v5149, 16
        %v5669 = vrot.slane %v5667, 2
        %v5670 = vshll.u32 %v5149, 16
        %v5672 = vrot.slane %v5670, 3
        %v5673 = vor.u32 %v5669, %v5672
        %v5674 = vsel %vm5314, %v5666, %v5673
        %v5691 = vld [vmem:[%s1] sm:$0xf]
        %v5692 = vld [vmem:[%s1 + $0x4] sm:$0xf]
        %v5693 = vld [vmem:[%s1 + $0x8] sm:$0xf]
        %v5694 = vld [vmem:[%s1 + $0xc] sm:$0xf]
        %v5695 = vld [vmem:[%s1 + $0x10] sm:$0xf]
        %v5696 = vld [vmem:[%s1 + $0x14] sm:$0xf]
        %v5697 = vld [vmem:[%s1 + $0x18] sm:$0xf]
        %v5698 = vld [vmem:[%s1 + $0x1c] sm:$0xf]
        %v5699 = vld [vmem:[%s1 + $0x20] sm:$0xf]
        %v5700 = vld [vmem:[%s1 + $0x24] sm:$0xf]
        %v5701 = vld [vmem:[%s1 + $0x28] sm:$0xf]
        %v5702 = vld [vmem:[%s1 + $0x2c] sm:$0xf]
        %v5703 = vld [vmem:[%s1 + $0x30] sm:$0xf]
        %v5704 = vld [vmem:[%s1 + $0x34] sm:$0xf]
        %v5705 = vld [vmem:[%s1 + $0x38] sm:$0xf]
        %v5706 = vld [vmem:[%s1 + $0x3c] sm:$0xf]
        %v5707 = vld [vmem:[%s1 + $0x40] sm:$0xf]
        %v5708 = vld [vmem:[%s1 + $0x44] sm:$0xf]
        %v5709 = vld [vmem:[%s1 + $0x48] sm:$0xf]
        %v5710 = vld [vmem:[%s1 + $0x4c] sm:$0xf]
        %v5711 = vld [vmem:[%s1 + $0x50] sm:$0xf]
        %v5712 = vld [vmem:[%s1 + $0x54] sm:$0xf]
        %v5713 = vld [vmem:[%s1 + $0x58] sm:$0xf]
        %v5714 = vld [vmem:[%s1 + $0x5c] sm:$0xf]
        %v5715 = vld [vmem:[%s1 + $0x60] sm:$0xf]
        %v5716 = vld [vmem:[%s1 + $0x64] sm:$0xf]
        %v5717 = vld [vmem:[%s1 + $0x68] sm:$0xf]
        %v5718 = vld [vmem:[%s1 + $0x6c] sm:$0xf]
        %v5719 = vld [vmem:[%s1 + $0x70] sm:$0xf]
        %v5720 = vld [vmem:[%s1 + $0x74] sm:$0xf]
        %v5721 = vld [vmem:[%s1 + $0x78] sm:$0xf]
        %v5722 = vld [vmem:[%s1 + $0x7c] sm:$0xf]
        %v5723 = vld [vmem:[%s1 + $0x80] sm:$0xf]
        %v5724 = vld [vmem:[%s1 + $0x84] sm:$0xf]
        %v5725 = vld [vmem:[%s1 + $0x88] sm:$0xf]
        %v5726 = vld [vmem:[%s1 + $0x8c] sm:$0xf]
        %v5727 = vld [vmem:[%s2] sm:$0x1]
        %v5729 = vperm.slane %v5727, 0
        %v5767 = vunpack.c.l.b16 %v5691
        %v5768 = vunpack.c.l.b16 %v5692
        %v5769 = vunpack.c.l.b16 %v5693
        %v5770 = vunpack.c.l.b16 %v5694
        %v5771 = vunpack.c.l.b16 %v5695
        %v5772 = vunpack.c.l.b16 %v5696
        %v5773 = vunpack.c.l.b16 %v5697
        %v5774 = vunpack.c.l.b16 %v5698
        %v5775 = vunpack.c.l.b16 %v5699
        %v5776 = vunpack.c.l.b16 %v5700
        %v5777 = vunpack.c.l.b16 %v5701
        %v5778 = vunpack.c.l.b16 %v5702
        %v5779 = vunpack.c.l.b16 %v5703
        %v5780 = vunpack.c.l.b16 %v5704
        %v5781 = vunpack.c.l.b16 %v5705
        %v5782 = vunpack.c.l.b16 %v5706
        %v5783 = vunpack.c.l.b16 %v5707
        %v5784 = vunpack.c.l.b16 %v5708
        %v5785 = vunpack.c.l.b16 %v5709
        %v5786 = vunpack.c.l.b16 %v5710
        %v5787 = vunpack.c.l.b16 %v5711
        %v5788 = vunpack.c.l.b16 %v5712
        %v5789 = vunpack.c.l.b16 %v5713
        %v5790 = vunpack.c.l.b16 %v5714
        %v5791 = vunpack.c.l.b16 %v5715
        %v5792 = vunpack.c.l.b16 %v5716
        %v5793 = vunpack.c.l.b16 %v5717
        %v5794 = vunpack.c.l.b16 %v5718
        %v5795 = vunpack.c.l.b16 %v5719
        %v5796 = vunpack.c.l.b16 %v5720
        %v5797 = vunpack.c.l.b16 %v5721
        %v5798 = vunpack.c.l.b16 %v5722
        %v5799 = vunpack.c.l.b16 %v5723
        %v5800 = vunpack.c.l.b16 %v5724
        %v5801 = vunpack.c.l.b16 %v5725
        %v5802 = vunpack.c.l.b16 %v5726
        %v5803 = vpack.c.b16 %v5768, %v5767
        %v5804 = vpack.c.b16 %v5770, %v5769
        %v5805 = vpack.c.b16 %v5772, %v5771
        %v5806 = vpack.c.b16 %v5774, %v5773
        %v5807 = vpack.c.b16 %v5776, %v5775
        %v5808 = vpack.c.b16 %v5778, %v5777
        %v5809 = vpack.c.b16 %v5780, %v5779
        %v5810 = vpack.c.b16 %v5782, %v5781
        %v5811 = vpack.c.b16 %v5784, %v5783
        %v5812 = vpack.c.b16 %v5786, %v5785
        %v5813 = vpack.c.b16 %v5788, %v5787
        %v5814 = vpack.c.b16 %v5790, %v5789
        %v5815 = vpack.c.b16 %v5792, %v5791
        %v5816 = vpack.c.b16 %v5794, %v5793
        %v5817 = vpack.c.b16 %v5796, %v5795
        %v5818 = vpack.c.b16 %v5798, %v5797
        %v5819 = vpack.c.b16 %v5800, %v5799
        %v5820 = vpack.c.b16 %v5802, %v5801
        %v5840 = vsel %vm1064, %v5359, 0
        %v5843 = vsel %vm1064, %v5404, 0
        %v5846 = vsel %vm1064, %v5449, 0
        %v5849 = vsel %vm1064, %v5494, 0
        %v5852 = vsel %vm1064, %v5539, 0
        %v5855 = vsel %vm1064, %v5584, 0
        %v5858 = vsel %vm1064, %v5629, 0
        %v5861 = vsel %vm1064, %v5674, 0
        %5863 = vmatpush.bf16.msra.mxu0 %v5810
        %5864 = vmatpush.bf16.msra.mxu0 %v5809
        %5865 = vmatpush.bf16.msra.mxu0 %v5808
        %5866 = vmatpush.bf16.msra.mxu0 %v5807
        %5867 = vmatpush.bf16.msra.mxu0 %v5806
        %5868 = vmatpush.bf16.msra.mxu0 %v5805
        %5869 = vmatpush.bf16.msra.mxu0 %v5804
        %5870 = vmatpush.bf16.msra.mxu0 %v5803
        %5871 = vmatmul.bf16.gmra.mxu0 %v5329
        %v5872 = vpop.f32.mrf.mxu0
        %v5873 = vadd.f32 %v5729, %v5872
        %v5874 = vpop.f32.mrf.mxu0
        %v5875 = vadd.f32 %v5729, %v5874
        %5876 = vmatmul.bf16.gmra.mxu0 %v5374
        %v5877 = vpop.f32.mrf.mxu0
        %v5878 = vadd.f32 %v5729, %v5877
        %v5879 = vpop.f32.mrf.mxu0
        %v5880 = vadd.f32 %v5729, %v5879
        %5881 = vmatmul.bf16.gmra.mxu0 %v5419
        %v5882 = vpop.f32.mrf.mxu0
        %v5883 = vadd.f32 %v5729, %v5882
        %v5884 = vpop.f32.mrf.mxu0
        %v5885 = vadd.f32 %v5729, %v5884
        %5886 = vmatmul.bf16.gmra.mxu0 %v5464
        %v5887 = vpop.f32.mrf.mxu0
        %v5888 = vadd.f32 %v5729, %v5887
        %v5889 = vpop.f32.mrf.mxu0
        %v5890 = vadd.f32 %v5729, %v5889
        %5891 = vmatmul.bf16.gmra.mxu0 %v5509
        %v5892 = vpop.f32.mrf.mxu0
        %v5893 = vadd.f32 %v5729, %v5892
        %v5894 = vpop.f32.mrf.mxu0
        %v5895 = vadd.f32 %v5729, %v5894
        %5896 = vmatmul.bf16.gmra.mxu0 %v5554
        %v5897 = vpop.f32.mrf.mxu0
        %v5898 = vadd.f32 %v5729, %v5897
        %v5899 = vpop.f32.mrf.mxu0
        %v5900 = vadd.f32 %v5729, %v5899
        %5901 = vmatmul.bf16.gmra.mxu0 %v5599
        %v5902 = vpop.f32.mrf.mxu0
        %v5903 = vadd.f32 %v5729, %v5902
        %v5904 = vpop.f32.mrf.mxu0
        %v5905 = vadd.f32 %v5729, %v5904
        %5906 = vmatmul.bf16.gmra.mxu0 %v5644
        %v5907 = vpop.f32.mrf.mxu0
        %v5908 = vadd.f32 %v5729, %v5907
        %v5909 = vpop.f32.mrf.mxu0
        %v5910 = vadd.f32 %v5729, %v5909
        %5911 = vdwg.mxu0
        %5912 = vmatpush.bf16.msra.mxu0 %v5818
        %5913 = vmatpush.bf16.msra.mxu0 %v5817
        %5914 = vmatpush.bf16.msra.mxu0 %v5816
        %5915 = vmatpush.bf16.msra.mxu0 %v5815
        %5916 = vmatpush.bf16.msra.mxu0 %v5814
        %5917 = vmatpush.bf16.msra.mxu0 %v5813
        %5918 = vmatpush.bf16.msra.mxu0 %v5812
        %5919 = vmatpush.bf16.msra.mxu0 %v5811
        %5920 = vmatmul.bf16.gmra.mxu0 %v5344
        %v5921 = vpop.f32.mrf.mxu0
        %v5922 = vadd.f32 %v5873, %v5921
        %v5923 = vpop.f32.mrf.mxu0
        %v5924 = vadd.f32 %v5875, %v5923
        %5925 = vmatmul.bf16.gmra.mxu0 %v5389
        %v5926 = vpop.f32.mrf.mxu0
        %v5927 = vadd.f32 %v5878, %v5926
        %v5928 = vpop.f32.mrf.mxu0
        %v5929 = vadd.f32 %v5880, %v5928
        %5930 = vmatmul.bf16.gmra.mxu0 %v5434
        %v5931 = vpop.f32.mrf.mxu0
        %v5932 = vadd.f32 %v5883, %v5931
        %v5933 = vpop.f32.mrf.mxu0
        %v5934 = vadd.f32 %v5885, %v5933
        %5935 = vmatmul.bf16.gmra.mxu0 %v5479
        %v5936 = vpop.f32.mrf.mxu0
        %v5937 = vadd.f32 %v5888, %v5936
        %v5938 = vpop.f32.mrf.mxu0
        %v5939 = vadd.f32 %v5890, %v5938
        %5940 = vmatmul.bf16.gmra.mxu0 %v5524
        %v5941 = vpop.f32.mrf.mxu0
        %v5942 = vadd.f32 %v5893, %v5941
        %v5943 = vpop.f32.mrf.mxu0
        %v5944 = vadd.f32 %v5895, %v5943
        %5945 = vmatmul.bf16.gmra.mxu0 %v5569
        %v5946 = vpop.f32.mrf.mxu0
        %v5947 = vadd.f32 %v5898, %v5946
        %v5948 = vpop.f32.mrf.mxu0
        %v5949 = vadd.f32 %v5900, %v5948
        %5950 = vmatmul.bf16.gmra.mxu0 %v5614
        %v5951 = vpop.f32.mrf.mxu0
        %v5952 = vadd.f32 %v5903, %v5951
        %v5953 = vpop.f32.mrf.mxu0
        %v5954 = vadd.f32 %v5905, %v5953
        %5955 = vmatmul.bf16.gmra.mxu0 %v5659
        %v5956 = vpop.f32.mrf.mxu0
        %v5957 = vadd.f32 %v5908, %v5956
        %v5958 = vpop.f32.mrf.mxu0
        %v5959 = vadd.f32 %v5910, %v5958
        %5960 = vdwg.mxu0
        %5961 = vmatpush.bf16.msra.mxu0 0
        %5962 = vmatpush.bf16.msra.mxu0 0
        %5963 = vmatpush.bf16.msra.mxu0 0
        %5964 = vmatpush.bf16.msra.mxu0 0
        %5965 = vmatpush.bf16.msra.mxu0 0
        %5966 = vmatpush.bf16.msra.mxu0 0
        %5967 = vmatpush.bf16.msra.mxu0 %v5820
        %5968 = vmatpush.bf16.msra.mxu0 %v5819
        %5969 = vmatmul.bf16.gmra.mxu0 %v5840
        %v5970 = vpop.f32.mrf.mxu0
        %v5971 = vadd.f32 %v5922, %v5970
        %v5972 = vpop.f32.mrf.mxu0
        %v5973 = vadd.f32 %v5924, %v5972
        %5974 = vmatmul.bf16.gmra.mxu0 %v5843
        %v5975 = vpop.f32.mrf.mxu0
        %v5976 = vadd.f32 %v5927, %v5975
        %v5977 = vpop.f32.mrf.mxu0
        %v5978 = vadd.f32 %v5929, %v5977
        %5979 = vmatmul.bf16.gmra.mxu0 %v5846
        %v5980 = vpop.f32.mrf.mxu0
        %v5981 = vadd.f32 %v5932, %v5980
        %v5982 = vpop.f32.mrf.mxu0
        %v5983 = vadd.f32 %v5934, %v5982
        %5984 = vmatmul.bf16.gmra.mxu0 %v5849
        %v5985 = vpop.f32.mrf.mxu0
        %v5986 = vadd.f32 %v5937, %v5985
        %v5987 = vpop.f32.mrf.mxu0
        %v5988 = vadd.f32 %v5939, %v5987
        %5989 = vmatmul.bf16.gmra.mxu0 %v5852
        %v5990 = vpop.f32.mrf.mxu0
        %v5991 = vadd.f32 %v5942, %v5990
        %v5992 = vpop.f32.mrf.mxu0
        %v5993 = vadd.f32 %v5944, %v5992
        %5994 = vmatmul.bf16.gmra.mxu0 %v5855
        %v5995 = vpop.f32.mrf.mxu0
        %v5996 = vadd.f32 %v5947, %v5995
        %v5997 = vpop.f32.mrf.mxu0
        %v5998 = vadd.f32 %v5949, %v5997
        %5999 = vmatmul.bf16.gmra.mxu0 %v5858
        %v6000 = vpop.f32.mrf.mxu0
        %v6001 = vadd.f32 %v5952, %v6000
        %v6002 = vpop.f32.mrf.mxu0
        %v6003 = vadd.f32 %v5954, %v6002
        %6004 = vmatmul.bf16.gmra.mxu0 %v5861
        %v6005 = vpop.f32.mrf.mxu0
        %v6006 = vadd.f32 %v5957, %v6005
        %v6007 = vpop.f32.mrf.mxu0
        %v6008 = vadd.f32 %v5959, %v6007
        %6009 = vdwg.mxu0
        %vm6010 = vcmp.gt.f32.partialorder %v5971, 0.0
        %vm6011 = vcmp.gt.f32.partialorder %v5973, 0.0
        %vm6012 = vcmp.gt.f32.partialorder %v5976, 0.0
        %vm6013 = vcmp.gt.f32.partialorder %v5978, 0.0
        %vm6014 = vcmp.gt.f32.partialorder %v5981, 0.0
        %vm6015 = vcmp.gt.f32.partialorder %v5983, 0.0
        %vm6016 = vcmp.gt.f32.partialorder %v5986, 0.0
        %vm6017 = vcmp.gt.f32.partialorder %v5988, 0.0
        %vm6018 = vcmp.gt.f32.partialorder %v5991, 0.0
        %vm6019 = vcmp.gt.f32.partialorder %v5993, 0.0
        %vm6020 = vcmp.gt.f32.partialorder %v5996, 0.0
        %vm6021 = vcmp.gt.f32.partialorder %v5998, 0.0
        %vm6022 = vcmp.gt.f32.partialorder %v6001, 0.0
        %vm6023 = vcmp.gt.f32.partialorder %v6003, 0.0
        %vm6024 = vcmp.gt.f32.partialorder %v6006, 0.0
        %vm6025 = vcmp.gt.f32.partialorder %v6008, 0.0
        %v6026 = vmul.f32 %v5971, -0.608
        %v6027 = vmul.f32 %v5973, -0.608
        %v6028 = vmul.f32 %v5976, -0.608
        %v6029 = vmul.f32 %v5978, -0.608
        %v6030 = vmul.f32 %v5981, -0.608
        %v6031 = vmul.f32 %v5983, -0.608
        %v6032 = vmul.f32 %v5986, -0.608
        %v6033 = vmul.f32 %v5988, -0.608
        %v6034 = vmul.f32 %v5991, -0.608
        %v6035 = vmul.f32 %v5993, -0.608
        %v6036 = vmul.f32 %v5996, -0.608
        %v6037 = vmul.f32 %v5998, -0.608
        %v6038 = vmul.f32 %v6001, -0.608
        %v6039 = vmul.f32 %v6003, -0.608
        %v6040 = vmul.f32 %v6006, -0.608
        %v6041 = vmul.f32 %v6008, -0.608
        %v6042 = vsel %vm6010, %v5971, %v6026
        %v6043 = vsel %vm6011, %v5973, %v6027
        %v6044 = vsel %vm6012, %v5976, %v6028
        %v6045 = vsel %vm6013, %v5978, %v6029
        %v6046 = vsel %vm6014, %v5981, %v6030
        %v6047 = vsel %vm6015, %v5983, %v6031
        %v6048 = vsel %vm6016, %v5986, %v6032
        %v6049 = vsel %vm6017, %v5988, %v6033
        %v6050 = vsel %vm6018, %v5991, %v6034
        %v6051 = vsel %vm6019, %v5993, %v6035
        %v6052 = vsel %vm6020, %v5996, %v6036
        %v6053 = vsel %vm6021, %v5998, %v6037
        %v6054 = vsel %vm6022, %v6001, %v6038
        %v6055 = vsel %vm6023, %v6003, %v6039
        %v6056 = vsel %vm6024, %v6006, %v6040
        %v6057 = vsel %vm6025, %v6008, %v6041
        %v6058 = vadd.f32 %v6042, %v6043
        %v6059 = vadd.f32 %v6058, %v6044
        %v6060 = vadd.f32 %v6059, %v6045
        %v6061 = vadd.f32 %v6060, %v6046
        %v6062 = vadd.f32 %v6061, %v6047
        %v6063 = vadd.f32 %v6062, %v6048
        %v6064 = vadd.f32 %v6063, %v6049
        %v6065 = vadd.f32 %v6064, %v6050
        %v6066 = vadd.f32 %v6065, %v6051
        %v6067 = vadd.f32 %v6066, %v6052
        %v6068 = vadd.f32 %v6067, %v6053
        %v6069 = vadd.f32 %v6068, %v6054
        %v6070 = vadd.f32 %v6069, %v6055
        %v6071 = vadd.f32 %v6070, %v6056
        %v6072 = vadd.f32 %v6071, %v6057
        %v6073 = vrot.slane %v6072, 4
        %v6074 = vadd.f32 %v6072, %v6073
        %v6075 = vrot.slane %v6074, 2
        %v6076 = vadd.f32 %v6074, %v6075
        %v6077 = vrot.slane %v6076, 1
        %v6078 = vadd.f32 %v6076, %v6077
        // Predicated region
        $region37: #{tpu_custom_call.1} parent=31 // pred_check
          %p6079 = pneg %p181
        $region38: #{tpu_custom_call.1} parent=31 // pred_check_branch
          %6081 = sbr.rel (%p6079) target = $region40
        $region39: #{tpu_custom_call.1} parent=31 // pred_region
          %6082 = vst [vmem:[#allocation3] sm:$0x1] 0.0
        $region40: #{tpu_custom_call.1} parent=31 // pred_fallthru
          _
        %v6083 = vld [vmem:[#allocation3] sm:$0x1]
        %v6084 = vadd.f32 %v6083, %v6078
        %6085 = vst [vmem:[#allocation3] sm:$0x1] %v6084
        %p6086 = scmp.eq.s32.totalorder %s22, 1
        // Predicated region
        $region41: #{tpu_custom_call.1} parent=31 // pred_check
          %p6087 = pneg %p6086
        $region42: #{tpu_custom_call.1} parent=31 // pred_check_branch
          %6089 = sbr.rel (%p6087) target = $region44
        $region43: #{tpu_custom_call.1} parent=31 // pred_region
          %v6090 = vld [vmem:[#allocation3] sm:$0x1]
          %v6091 = vmul.f32 %v6090, 0.00390625
          %6092 = vst [vmem:[%s174] sm:$0x1] %v6091
        $region44: #{tpu_custom_call.1} parent=31 // pred_fallthru
          _
        %s6093 = sand.u32 %s105, 1
        %s6094 = scalar_lea.sflag [#allocation5], %s6093
        %s6095 = sand.u32 %s105, 1
        %s6096 = scalar_lea.vmem [#allocation4], %s6095
        // Predicated region
        $region45: #{tpu_custom_call.1} parent=31 // pred_check
          %p6097 = pneg %p115
        $region46: #{tpu_custom_call.1} parent=31 // pred_check_branch
          %6099 = sbr.rel (%p6097) target = $region48
        $region47: #{tpu_custom_call.1} parent=31 // pred_region
          %6101 = vsyncadd %s6094, 0
          %s6102 = scalar_lea.hbm %s3, %s21
          %s6104 = sshll.u32 %s6096, 4
          %s6105 = int_to_ptr.vmem [resolvable:$true] %s6104
          %s6106 = sshll.u32 %s6102, 4
          %s6107 = int_to_ptr.hbm [resolvable:$true] %s6106
          %6109 = dma.vmem_to_hbm [thread:$0]  %s6105, 16, %s6107, %s6094
        $region48: #{tpu_custom_call.1} parent=31 // pred_fallthru
          _
      $region32: #{tpu_custom_call.1} parent=5 // pred_fallthru
        _
      %p6110 = scmp.le.s32.totalorder 2, %s12
      // Predicated region
      $region49: #{tpu_custom_call.1} parent=5 // pred_check
        %p6111 = pneg %p6110
      $region50: #{tpu_custom_call.1} parent=5 // pred_check_branch
        %6113 = sbr.rel (%p6111) target = $region52
      $region51: #{tpu_custom_call.1} parent=5 // pred_region
        %s6114 = ssub.s32 %s12, 2
        // Predicated region
        $region53: #{tpu_custom_call.1} parent=51 // pred_check
          %p6115 = pneg %p121
        $region54: #{tpu_custom_call.1} parent=51 // pred_check_branch
          %6117 = sbr.rel (%p6115) target = $region56
        $region55: #{tpu_custom_call.1} parent=51 // pred_region
          %s6118 = sand.u32 %s106, 1
          %s6119 = scalar_lea.sflag [#allocation5], %s6118
          %s6120 = sand.u32 %s106, 1
          %s6121 = scalar_lea.vmem [#allocation4], %s6120
          %6123 = dma.done %s6119, 16
        $region56: #{tpu_custom_call.1} parent=51 // pred_fallthru
          _
      $region52: #{tpu_custom_call.1} parent=5 // pred_fallthru
        _
    $region6: #{tpu_custom_call.1} parent=1 // loop_footer
      %s16 = sadd.s32 1, %s12
    $region7: #{tpu_custom_call.1} parent=1 // loop_footer_branch
      %11 = sbr.rel target = $region3
    $region8: #{tpu_custom_call.1} parent=1 // loop_exit
      _
    %6124 = vsyncpa [#allocation5], 1
    %s6125 = scalar_lea.sflag [#allocation5], 1
    %6126 = vsyncpa %s6125, 1

</llo_original>
